<compile_context>
chip_gen: v5e
topology: v5e:2x2
jax: 0.10.0
libtpu: 0.0.40
codegen_flags: <defaults>
</compile_context>

<pallas_src>
import math
from functools import partial

import jax
import jax.numpy as jnp
from jax.experimental import pallas as pl
from jax.experimental.pallas import tpu as pltpu  # noqa: F401  (TPU backend)


def _ceil_div(a, b):
    return -(-a // b)


# ---------------------------------------------------------------------------
# Fused kernel: conv blocks + global max pool + projection, whole batch.
# ---------------------------------------------------------------------------
def _fused_cnn_kernel(*refs, B, L0, layer_ks, pool):
    """refs = (x, [w2, bias] per (layer, width), proj_w, proj_b, out).

    x      : (C0, B*L0) f32; sample b occupies columns [b*L0, (b+1)*L0)
    w2     : (C_out, K*C_in) im2col conv weight (k-major, c_in-minor)
    bias   : (C_out, 1)
    proj_w : (NC, C_final);  proj_b : (NC, 1);  out : (NC, B)
    """
    x_ref = refs[0]
    wp_ref, bp_ref, out_ref = refs[-3], refs[-2], refs[-1]
    conv_refs = refs[1:-3]

    x = x_ref[...]                                 # (C_in, B*L)
    L = L0
    ri = 0
    for ks in layer_ks:                            # one conv block per entry
        # TODO(synk): nn.Dropout before the convs is inference-mode identity.
        L_pools = [_ceil_div(L - K + 1, pool) for K in ks]
        min_len = min(L_pools)                     # torch.narrow target length
        sample_blocks = [[] for _ in range(B)]
        for K, L_pool in zip(ks, L_pools):
            w2 = conv_refs[ri][...]
            bias = conv_refs[ri + 1][...]
            ri += 2
            L_out = L - K + 1
            # ---- im2col: (K*C_in, B*L_out); batch folded into the N dim ----
            cols = []
            for b in range(B):
                base = b * L
                cols.append(jnp.concatenate(
                    [x[:, base + k: base + k + L_out] for k in range(K)],
                    axis=0))
            col = jnp.concatenate(cols, axis=1)
            # ---- Conv1d + bias + ReLU: one MXU matmul for the whole batch ---
            y = jnp.maximum(
                jnp.dot(w2, col, preferred_element_type=jnp.float32) + bias,
                0.0)                               # (C_out, B*L_out)
            C_out = y.shape[0]
            # ---- MaxPool1d(pool, stride=pool, ceil_mode=True), vectorized ---
            pad = L_pool * pool - L_out
            for b in range(B):
                y_b = y[:, b * L_out:(b + 1) * L_out]
                if pad:
                    y_b = jnp.concatenate(
                        [y_b, jnp.full((C_out, pad), -jnp.inf, jnp.float32)],
                        axis=1)
                p_b = jnp.max(y_b.reshape(C_out, L_pool, pool), axis=-1)
                sample_blocks[b].append(p_b[:, :min_len])   # narrow to min len
        # channel concat per sample, then samples side by side along length
        x = jnp.concatenate(
            [jnp.concatenate(blks, axis=0) for blks in sample_blocks], axis=1)
        L = min_len

    # Global max pool (AdaptiveMaxPool1d(1) + squeeze) per sample -> (C, B)
    pooled = jnp.concatenate(
        [jnp.max(x[:, b * L:(b + 1) * L], axis=1, keepdims=True)
         for b in range(B)], axis=1)
    # TODO(synk): final nn.Dropout is inference-mode identity.
    # Linear projection: (NC, C) @ (C, B) + bias -> logits^T (NC, B)
    out_ref[...] = (jnp.dot(wp_ref[...], pooled,
                            preferred_element_type=jnp.float32) + bp_ref[...])


# ---------------------------------------------------------------------------
# Wrapper
# ---------------------------------------------------------------------------
def forward(params, data, mask, pool_size=3):
    """Fused forward. data: (B, T) int32 token ids. Returns (B, num_classes)."""
    del mask  # the PyTorch forward ignores `mask` as well
    # Embedding lookup stays in XLA (data-dependent gather).
    emb = jnp.take(params["embedding"], data, axis=0)         # (B, T, E)
    B, T, E = emb.shape
    # Present activations as (E, B*T): channels on sublanes, batch*length on
    # lanes (lane-dense; batch folded into the conv matmul N dimension).
    x0 = jnp.transpose(emb, (2, 0, 1)).reshape(E, B * T).astype(jnp.float32)

    conv_inputs = []
    layer_ks = []
    for block in params["convblocks"]:
        ks = []
        for (w, b) in block:
            C_out, C_in, K = w.shape
            ks.append(K)
            # im2col layout: rows ordered (k-major, c_in-minor) to match the
            # in-kernel stacking of the K shifted activation slices.
            w2 = jnp.transpose(w, (0, 2, 1)).reshape(C_out, K * C_in)
            conv_inputs.extend([w2.astype(jnp.float32),
                                b.reshape(C_out, 1).astype(jnp.float32)])
        layer_ks.append(tuple(ks))

    NC = params["proj_w"].shape[0]
    kernel = partial(_fused_cnn_kernel, B=B, L0=T,
                     layer_ks=tuple(layer_ks), pool=pool_size)
    # Single grid-less pallas_call: every live tensor is a few KB, so the whole
    # batch fits trivially in VMEM (well under v7x's 64 MiB).  For production
    # sizes one would add a "parallel" batch grid axis (>=2 blocks keeps both
    # v7x TensorCores busy) instead of folding the whole batch.
    logits_t = pl.pallas_call(
        kernel,
        out_shape=jax.ShapeDtypeStruct((NC, B), jnp.float32),
    )(x0, *conv_inputs,
      params["proj_w"].astype(jnp.float32),
      params["proj_b"].reshape(NC, 1).astype(jnp.float32))
    return logits_t.T                                         # (B, NC)


# ---------------------------------------------------------------------------
# Parameter setup (deterministic, matching the nn.Module shapes)
# ---------------------------------------------------------------------------
def init_params(key, emb_input_dim, emb_output_dim, num_classes, filter_widths,
                num_filters, num_conv_layers):
    n_fw = len(filter_widths)
    keys = jax.random.split(key, 2 + 2 * num_conv_layers * n_fw + 2)
    ki = iter(keys)
    params = {"embedding": jax.random.normal(next(ki), (emb_input_dim, emb_output_dim),
                                             dtype=jnp.float32) * 0.1}
    convblocks = []
    in_ch = emb_output_dim
    for _ in range(num_conv_layers):
        block = []
        for fw in filter_widths:
            fan_in = in_ch * fw
            w = jax.random.normal(next(ki), (num_filters, in_ch, fw),
                                  dtype=jnp.float32) / math.sqrt(fan_in)
            b = jax.random.normal(next(ki), (num_filters,), dtype=jnp.float32) * 0.01
            block.append((w, b))
        convblocks.append(block)
        in_ch = num_filters * n_fw
    params["convblocks"] = convblocks
    params["proj_w"] = jax.random.normal(next(ki), (num_classes, in_ch),
                                         dtype=jnp.float32) / math.sqrt(in_ch)
    params["proj_b"] = jax.random.normal(next(ki), (num_classes,), dtype=jnp.float32) * 0.01
    return params


# ---------------------------------------------------------------------------
# Plain-JAX reference (mirrors the PyTorch forward, dropout = identity)
# ---------------------------------------------------------------------------
def _reference_forward(params, data, pool):
    hp = jax.lax.Precision.HIGHEST
    emb = jnp.take(params["embedding"], data, axis=0)         # (B, T, E)
    x = jnp.transpose(emb, (0, 2, 1))                         # (B, E, T)
    for block in params["convblocks"]:
        xs = []
        for (w, b) in block:
            C_out, C_in, K = w.shape
            L = x.shape[2]
            L_out = L - K + 1
            acc = jnp.zeros((x.shape[0], C_out, L_out), jnp.float32)
            for k in range(K):
                acc = acc + jnp.einsum("oc,bcl->bol", w[:, :, k],
                                       x[:, :, k:k + L_out], precision=hp)
            y = jnp.maximum(acc + b[None, :, None], 0.0)
            L_pool = _ceil_div(L_out, pool)
            cols = [jnp.max(y[:, :, p * pool:min(p * pool + pool, L_out)],
                            axis=2, keepdims=True) for p in range(L_pool)]
            xs.append(jnp.concatenate(cols, axis=2))
        m = min(z.shape[2] for z in xs)
        x = jnp.concatenate([z[:, :, :m] for z in xs], axis=1)
    pooled = jnp.max(x, axis=2)                               # (B, C)
    return jnp.dot(pooled, params["proj_w"].T, precision=hp) + params["proj_b"]


if __name__ == "__main__":
    # Small synthetic configuration.
    B, T = 2, 48
    VOCAB, EMB = 50, 32
    NUM_FILTERS, FILTER_WIDTHS = 16, [3, 4]
    NUM_CLASSES, NUM_CONV_LAYERS, POOL = 2, 3, 3

    key = jax.random.PRNGKey(0)
    kp, kd = jax.random.split(key)
    params = init_params(kp, VOCAB, EMB, NUM_CLASSES, FILTER_WIDTHS,
                         NUM_FILTERS, NUM_CONV_LAYERS)
    data = jax.random.randint(kd, (B, T), 0, VOCAB, dtype=jnp.int32)
    mask = jnp.ones((B, T), dtype=jnp.float32)

    out = forward(params, data, mask, pool_size=POOL)
    out = jax.block_until_ready(out)
    assert out.shape == (B, NUM_CLASSES) and out.dtype == jnp.float32

    ref = _reference_forward(params, data, POOL)
    max_err = float(jnp.max(jnp.abs(out - ref)))
    assert max_err < 1e-2, f"mismatch vs reference: max_err={max_err}"
    print("KERNEL_OK")
</pallas_src>

<mosaic_0001>
module attributes {stable_mosaic.version = 11 : i64} {
  func.func @_fused_cnn_kernel(%arg0: memref<32x96xf32, #tpu.memory_space<vmem>>, %arg1: memref<16x96xf32, #tpu.memory_space<vmem>>, %arg2: memref<16x1xf32, #tpu.memory_space<vmem>>, %arg3: memref<16x128xf32, #tpu.memory_space<vmem>>, %arg4: memref<16x1xf32, #tpu.memory_space<vmem>>, %arg5: memref<16x96xf32, #tpu.memory_space<vmem>>, %arg6: memref<16x1xf32, #tpu.memory_space<vmem>>, %arg7: memref<16x128xf32, #tpu.memory_space<vmem>>, %arg8: memref<16x1xf32, #tpu.memory_space<vmem>>, %arg9: memref<16x96xf32, #tpu.memory_space<vmem>>, %arg10: memref<16x1xf32, #tpu.memory_space<vmem>>, %arg11: memref<16x128xf32, #tpu.memory_space<vmem>>, %arg12: memref<16x1xf32, #tpu.memory_space<vmem>>, %arg13: memref<2x32xf32, #tpu.memory_space<vmem>>, %arg14: memref<2x1xf32, #tpu.memory_space<vmem>>, %arg15: memref<2x2xf32, #tpu.memory_space<vmem>>) attributes {dimension_semantics = [], scalar_prefetch = 0 : i64, scratch_operands = 0 : i64, tpu.core_type = #tpu.core_type<tc>} {
    %c0 = arith.constant 0 : index
    %c0_0 = arith.constant 0 : index
    %0 = vector.load %arg0[%c0, %c0_0] : memref<32x96xf32, #tpu.memory_space<vmem>>, vector<32x96xf32>
    %c0_1 = arith.constant 0 : index
    %c0_2 = arith.constant 0 : index
    %1 = vector.load %arg1[%c0_1, %c0_2] : memref<16x96xf32, #tpu.memory_space<vmem>>, vector<16x96xf32>
    %c0_3 = arith.constant 0 : index
    %c0_4 = arith.constant 0 : index
    %2 = vector.load %arg2[%c0_3, %c0_4] : memref<16x1xf32, #tpu.memory_space<vmem>>, vector<16x1xf32>
    %3 = vector.extract_strided_slice %0 {offsets = [0, 0], sizes = [32, 46], strides = [1, 1]} : vector<32x96xf32> to vector<32x46xf32>
    %4 = vector.extract_strided_slice %0 {offsets = [0, 1], sizes = [32, 46], strides = [1, 1]} : vector<32x96xf32> to vector<32x46xf32>
    %5 = vector.extract_strided_slice %0 {offsets = [0, 2], sizes = [32, 46], strides = [1, 1]} : vector<32x96xf32> to vector<32x46xf32>
    %6 = tpu.concatenate %3, %4, %5 in 0 : vector<32x46xf32>, vector<32x46xf32>, vector<32x46xf32> -> vector<96x46xf32>
    %7 = vector.extract_strided_slice %0 {offsets = [0, 48], sizes = [32, 46], strides = [1, 1]} : vector<32x96xf32> to vector<32x46xf32>
    %8 = vector.extract_strided_slice %0 {offsets = [0, 49], sizes = [32, 46], strides = [1, 1]} : vector<32x96xf32> to vector<32x46xf32>
    %9 = vector.extract_strided_slice %0 {offsets = [0, 50], sizes = [32, 46], strides = [1, 1]} : vector<32x96xf32> to vector<32x46xf32>
    %10 = tpu.concatenate %7, %8, %9 in 0 : vector<32x46xf32>, vector<32x46xf32>, vector<32x46xf32> -> vector<96x46xf32>
    %11 = tpu.concatenate %6, %10 in 1 : vector<96x46xf32>, vector<96x46xf32> -> vector<96x92xf32>
    %cst = arith.constant dense<0.000000e+00> : vector<16x92xf32>
    %12 = tpu.matmul %1, %11, %cst {dimension_numbers = #tpu.dot_dimension_numbers<[1], [0], [0], [1], [0, 0, 1, 1], [], []>} : vector<16x96xf32>, vector<96x92xf32>, vector<16x92xf32> -> vector<16x92xf32>
    %13 = vector.broadcast %2 : vector<16x1xf32> to vector<16x92xf32>
    %14 = arith.addf %12, %13 : vector<16x92xf32>
    %cst_5 = arith.constant 0.000000e+00 : f32
    %15 = vector.broadcast %cst_5 : f32 to vector<16x92xf32>
    %16 = arith.maximumf %14, %15 : vector<16x92xf32>
    %17 = vector.extract_strided_slice %16 {offsets = [0, 0], sizes = [16, 46], strides = [1, 1]} : vector<16x92xf32> to vector<16x46xf32>
    %cst_6 = arith.constant 0xFF800000 : f32
    %18 = vector.broadcast %cst_6 : f32 to vector<16x2xf32>
    %19 = tpu.concatenate %17, %18 in 1 : vector<16x46xf32>, vector<16x2xf32> -> vector<16x48xf32>
    %20 = vector.shape_cast %19 : vector<16x48xf32> to vector<16x16x3xf32>
    %cst_7 = arith.constant dense<0xFF800000> : vector<16x16xf32>
    %21 = vector.multi_reduction <maximumf>, %20, %cst_7 [2] : vector<16x16x3xf32> to vector<16x16xf32>
    %22 = vector.extract_strided_slice %21 {offsets = [0, 0], sizes = [16, 15], strides = [1, 1]} : vector<16x16xf32> to vector<16x15xf32>
    %23 = vector.extract_strided_slice %16 {offsets = [0, 46], sizes = [16, 46], strides = [1, 1]} : vector<16x92xf32> to vector<16x46xf32>
    %cst_8 = arith.constant 0xFF800000 : f32
    %24 = vector.broadcast %cst_8 : f32 to vector<16x2xf32>
    %25 = tpu.concatenate %23, %24 in 1 : vector<16x46xf32>, vector<16x2xf32> -> vector<16x48xf32>
    %26 = vector.shape_cast %25 : vector<16x48xf32> to vector<16x16x3xf32>
    %cst_9 = arith.constant dense<0xFF800000> : vector<16x16xf32>
    %27 = vector.multi_reduction <maximumf>, %26, %cst_9 [2] : vector<16x16x3xf32> to vector<16x16xf32>
    %28 = vector.extract_strided_slice %27 {offsets = [0, 0], sizes = [16, 15], strides = [1, 1]} : vector<16x16xf32> to vector<16x15xf32>
    %c0_10 = arith.constant 0 : index
    %c0_11 = arith.constant 0 : index
    %29 = vector.load %arg3[%c0_10, %c0_11] : memref<16x128xf32, #tpu.memory_space<vmem>>, vector<16x128xf32>
    %c0_12 = arith.constant 0 : index
    %c0_13 = arith.constant 0 : index
    %30 = vector.load %arg4[%c0_12, %c0_13] : memref<16x1xf32, #tpu.memory_space<vmem>>, vector<16x1xf32>
    %31 = vector.extract_strided_slice %0 {offsets = [0, 0], sizes = [32, 45], strides = [1, 1]} : vector<32x96xf32> to vector<32x45xf32>
    %32 = vector.extract_strided_slice %0 {offsets = [0, 1], sizes = [32, 45], strides = [1, 1]} : vector<32x96xf32> to vector<32x45xf32>
    %33 = vector.extract_strided_slice %0 {offsets = [0, 2], sizes = [32, 45], strides = [1, 1]} : vector<32x96xf32> to vector<32x45xf32>
    %34 = vector.extract_strided_slice %0 {offsets = [0, 3], sizes = [32, 45], strides = [1, 1]} : vector<32x96xf32> to vector<32x45xf32>
    %35 = tpu.concatenate %31, %32, %33, %34 in 0 : vector<32x45xf32>, vector<32x45xf32>, vector<32x45xf32>, vector<32x45xf32> -> vector<128x45xf32>
    %36 = vector.extract_strided_slice %0 {offsets = [0, 48], sizes = [32, 45], strides = [1, 1]} : vector<32x96xf32> to vector<32x45xf32>
    %37 = vector.extract_strided_slice %0 {offsets = [0, 49], sizes = [32, 45], strides = [1, 1]} : vector<32x96xf32> to vector<32x45xf32>
    %38 = vector.extract_strided_slice %0 {offsets = [0, 50], sizes = [32, 45], strides = [1, 1]} : vector<32x96xf32> to vector<32x45xf32>
    %39 = vector.extract_strided_slice %0 {offsets = [0, 51], sizes = [32, 45], strides = [1, 1]} : vector<32x96xf32> to vector<32x45xf32>
    %40 = tpu.concatenate %36, %37, %38, %39 in 0 : vector<32x45xf32>, vector<32x45xf32>, vector<32x45xf32>, vector<32x45xf32> -> vector<128x45xf32>
    %41 = tpu.concatenate %35, %40 in 1 : vector<128x45xf32>, vector<128x45xf32> -> vector<128x90xf32>
    %cst_14 = arith.constant dense<0.000000e+00> : vector<16x90xf32>
    %42 = tpu.matmul %29, %41, %cst_14 {dimension_numbers = #tpu.dot_dimension_numbers<[1], [0], [0], [1], [0, 0, 1, 1], [], []>} : vector<16x128xf32>, vector<128x90xf32>, vector<16x90xf32> -> vector<16x90xf32>
    %43 = vector.broadcast %30 : vector<16x1xf32> to vector<16x90xf32>
    %44 = arith.addf %42, %43 : vector<16x90xf32>
    %cst_15 = arith.constant 0.000000e+00 : f32
    %45 = vector.broadcast %cst_15 : f32 to vector<16x90xf32>
    %46 = arith.maximumf %44, %45 : vector<16x90xf32>
    %47 = vector.extract_strided_slice %46 {offsets = [0, 0], sizes = [16, 45], strides = [1, 1]} : vector<16x90xf32> to vector<16x45xf32>
    %48 = vector.shape_cast %47 : vector<16x45xf32> to vector<16x15x3xf32>
    %cst_16 = arith.constant dense<0xFF800000> : vector<16x15xf32>
    %49 = vector.multi_reduction <maximumf>, %48, %cst_16 [2] : vector<16x15x3xf32> to vector<16x15xf32>
    %50 = vector.extract_strided_slice %46 {offsets = [0, 45], sizes = [16, 45], strides = [1, 1]} : vector<16x90xf32> to vector<16x45xf32>
    %51 = vector.shape_cast %50 : vector<16x45xf32> to vector<16x15x3xf32>
    %cst_17 = arith.constant dense<0xFF800000> : vector<16x15xf32>
    %52 = vector.multi_reduction <maximumf>, %51, %cst_17 [2] : vector<16x15x3xf32> to vector<16x15xf32>
    %53 = tpu.concatenate %22, %49 in 0 : vector<16x15xf32>, vector<16x15xf32> -> vector<32x15xf32>
    %54 = tpu.concatenate %28, %52 in 0 : vector<16x15xf32>, vector<16x15xf32> -> vector<32x15xf32>
    %55 = tpu.concatenate %53, %54 in 1 : vector<32x15xf32>, vector<32x15xf32> -> vector<32x30xf32>
    %c0_18 = arith.constant 0 : index
    %c0_19 = arith.constant 0 : index
    %56 = vector.load %arg5[%c0_18, %c0_19] : memref<16x96xf32, #tpu.memory_space<vmem>>, vector<16x96xf32>
    %c0_20 = arith.constant 0 : index
    %c0_21 = arith.constant 0 : index
    %57 = vector.load %arg6[%c0_20, %c0_21] : memref<16x1xf32, #tpu.memory_space<vmem>>, vector<16x1xf32>
    %58 = vector.extract_strided_slice %55 {offsets = [0, 0], sizes = [32, 13], strides = [1, 1]} : vector<32x30xf32> to vector<32x13xf32>
    %59 = vector.extract_strided_slice %55 {offsets = [0, 1], sizes = [32, 13], strides = [1, 1]} : vector<32x30xf32> to vector<32x13xf32>
    %60 = vector.extract_strided_slice %55 {offsets = [0, 2], sizes = [32, 13], strides = [1, 1]} : vector<32x30xf32> to vector<32x13xf32>
    %61 = tpu.concatenate %58, %59, %60 in 0 : vector<32x13xf32>, vector<32x13xf32>, vector<32x13xf32> -> vector<96x13xf32>
    %62 = vector.extract_strided_slice %55 {offsets = [0, 15], sizes = [32, 13], strides = [1, 1]} : vector<32x30xf32> to vector<32x13xf32>
    %63 = vector.extract_strided_slice %55 {offsets = [0, 16], sizes = [32, 13], strides = [1, 1]} : vector<32x30xf32> to vector<32x13xf32>
    %64 = vector.extract_strided_slice %55 {offsets = [0, 17], sizes = [32, 13], strides = [1, 1]} : vector<32x30xf32> to vector<32x13xf32>
    %65 = tpu.concatenate %62, %63, %64 in 0 : vector<32x13xf32>, vector<32x13xf32>, vector<32x13xf32> -> vector<96x13xf32>
    %66 = tpu.concatenate %61, %65 in 1 : vector<96x13xf32>, vector<96x13xf32> -> vector<96x26xf32>
    %cst_22 = arith.constant dense<0.000000e+00> : vector<16x26xf32>
    %67 = tpu.matmul %56, %66, %cst_22 {dimension_numbers = #tpu.dot_dimension_numbers<[1], [0], [0], [1], [0, 0, 1, 1], [], []>} : vector<16x96xf32>, vector<96x26xf32>, vector<16x26xf32> -> vector<16x26xf32>
    %68 = vector.broadcast %57 : vector<16x1xf32> to vector<16x26xf32>
    %69 = arith.addf %67, %68 : vector<16x26xf32>
    %cst_23 = arith.constant 0.000000e+00 : f32
    %70 = vector.broadcast %cst_23 : f32 to vector<16x26xf32>
    %71 = arith.maximumf %69, %70 : vector<16x26xf32>
    %72 = vector.extract_strided_slice %71 {offsets = [0, 0], sizes = [16, 13], strides = [1, 1]} : vector<16x26xf32> to vector<16x13xf32>
    %cst_24 = arith.constant 0xFF800000 : f32
    %73 = vector.broadcast %cst_24 : f32 to vector<16x2xf32>
    %74 = tpu.concatenate %72, %73 in 1 : vector<16x13xf32>, vector<16x2xf32> -> vector<16x15xf32>
    %75 = vector.shape_cast %74 : vector<16x15xf32> to vector<16x5x3xf32>
    %cst_25 = arith.constant dense<0xFF800000> : vector<16x5xf32>
    %76 = vector.multi_reduction <maximumf>, %75, %cst_25 [2] : vector<16x5x3xf32> to vector<16x5xf32>
    %77 = vector.extract_strided_slice %76 {offsets = [0, 0], sizes = [16, 4], strides = [1, 1]} : vector<16x5xf32> to vector<16x4xf32>
    %78 = vector.extract_strided_slice %71 {offsets = [0, 13], sizes = [16, 13], strides = [1, 1]} : vector<16x26xf32> to vector<16x13xf32>
    %cst_26 = arith.constant 0xFF800000 : f32
    %79 = vector.broadcast %cst_26 : f32 to vector<16x2xf32>
    %80 = tpu.concatenate %78, %79 in 1 : vector<16x13xf32>, vector<16x2xf32> -> vector<16x15xf32>
    %81 = vector.shape_cast %80 : vector<16x15xf32> to vector<16x5x3xf32>
    %cst_27 = arith.constant dense<0xFF800000> : vector<16x5xf32>
    %82 = vector.multi_reduction <maximumf>, %81, %cst_27 [2] : vector<16x5x3xf32> to vector<16x5xf32>
    %83 = vector.extract_strided_slice %82 {offsets = [0, 0], sizes = [16, 4], strides = [1, 1]} : vector<16x5xf32> to vector<16x4xf32>
    %c0_28 = arith.constant 0 : index
    %c0_29 = arith.constant 0 : index
    %84 = vector.load %arg7[%c0_28, %c0_29] : memref<16x128xf32, #tpu.memory_space<vmem>>, vector<16x128xf32>
    %c0_30 = arith.constant 0 : index
    %c0_31 = arith.constant 0 : index
    %85 = vector.load %arg8[%c0_30, %c0_31] : memref<16x1xf32, #tpu.memory_space<vmem>>, vector<16x1xf32>
    %86 = vector.extract_strided_slice %55 {offsets = [0, 0], sizes = [32, 12], strides = [1, 1]} : vector<32x30xf32> to vector<32x12xf32>
    %87 = vector.extract_strided_slice %55 {offsets = [0, 1], sizes = [32, 12], strides = [1, 1]} : vector<32x30xf32> to vector<32x12xf32>
    %88 = vector.extract_strided_slice %55 {offsets = [0, 2], sizes = [32, 12], strides = [1, 1]} : vector<32x30xf32> to vector<32x12xf32>
    %89 = vector.extract_strided_slice %55 {offsets = [0, 3], sizes = [32, 12], strides = [1, 1]} : vector<32x30xf32> to vector<32x12xf32>
    %90 = tpu.concatenate %86, %87, %88, %89 in 0 : vector<32x12xf32>, vector<32x12xf32>, vector<32x12xf32>, vector<32x12xf32> -> vector<128x12xf32>
    %91 = vector.extract_strided_slice %55 {offsets = [0, 15], sizes = [32, 12], strides = [1, 1]} : vector<32x30xf32> to vector<32x12xf32>
    %92 = vector.extract_strided_slice %55 {offsets = [0, 16], sizes = [32, 12], strides = [1, 1]} : vector<32x30xf32> to vector<32x12xf32>
    %93 = vector.extract_strided_slice %55 {offsets = [0, 17], sizes = [32, 12], strides = [1, 1]} : vector<32x30xf32> to vector<32x12xf32>
    %94 = vector.extract_strided_slice %55 {offsets = [0, 18], sizes = [32, 12], strides = [1, 1]} : vector<32x30xf32> to vector<32x12xf32>
    %95 = tpu.concatenate %91, %92, %93, %94 in 0 : vector<32x12xf32>, vector<32x12xf32>, vector<32x12xf32>, vector<32x12xf32> -> vector<128x12xf32>
    %96 = tpu.concatenate %90, %95 in 1 : vector<128x12xf32>, vector<128x12xf32> -> vector<128x24xf32>
    %cst_32 = arith.constant dense<0.000000e+00> : vector<16x24xf32>
    %97 = tpu.matmul %84, %96, %cst_32 {dimension_numbers = #tpu.dot_dimension_numbers<[1], [0], [0], [1], [0, 0, 1, 1], [], []>} : vector<16x128xf32>, vector<128x24xf32>, vector<16x24xf32> -> vector<16x24xf32>
    %98 = vector.broadcast %85 : vector<16x1xf32> to vector<16x24xf32>
    %99 = arith.addf %97, %98 : vector<16x24xf32>
    %cst_33 = arith.constant 0.000000e+00 : f32
    %100 = vector.broadcast %cst_33 : f32 to vector<16x24xf32>
    %101 = arith.maximumf %99, %100 : vector<16x24xf32>
    %102 = vector.extract_strided_slice %101 {offsets = [0, 0], sizes = [16, 12], strides = [1, 1]} : vector<16x24xf32> to vector<16x12xf32>
    %103 = vector.shape_cast %102 : vector<16x12xf32> to vector<16x4x3xf32>
    %cst_34 = arith.constant dense<0xFF800000> : vector<16x4xf32>
    %104 = vector.multi_reduction <maximumf>, %103, %cst_34 [2] : vector<16x4x3xf32> to vector<16x4xf32>
    %105 = vector.extract_strided_slice %101 {offsets = [0, 12], sizes = [16, 12], strides = [1, 1]} : vector<16x24xf32> to vector<16x12xf32>
    %106 = vector.shape_cast %105 : vector<16x12xf32> to vector<16x4x3xf32>
    %cst_35 = arith.constant dense<0xFF800000> : vector<16x4xf32>
    %107 = vector.multi_reduction <maximumf>, %106, %cst_35 [2] : vector<16x4x3xf32> to vector<16x4xf32>
    %108 = tpu.concatenate %77, %104 in 0 : vector<16x4xf32>, vector<16x4xf32> -> vector<32x4xf32>
    %109 = tpu.concatenate %83, %107 in 0 : vector<16x4xf32>, vector<16x4xf32> -> vector<32x4xf32>
    %110 = tpu.concatenate %108, %109 in 1 : vector<32x4xf32>, vector<32x4xf32> -> vector<32x8xf32>
    %c0_36 = arith.constant 0 : index
    %c0_37 = arith.constant 0 : index
    %111 = vector.load %arg9[%c0_36, %c0_37] : memref<16x96xf32, #tpu.memory_space<vmem>>, vector<16x96xf32>
    %c0_38 = arith.constant 0 : index
    %c0_39 = arith.constant 0 : index
    %112 = vector.load %arg10[%c0_38, %c0_39] : memref<16x1xf32, #tpu.memory_space<vmem>>, vector<16x1xf32>
    %113 = vector.extract_strided_slice %110 {offsets = [0, 0], sizes = [32, 2], strides = [1, 1]} : vector<32x8xf32> to vector<32x2xf32>
    %114 = vector.extract_strided_slice %110 {offsets = [0, 1], sizes = [32, 2], strides = [1, 1]} : vector<32x8xf32> to vector<32x2xf32>
    %115 = vector.extract_strided_slice %110 {offsets = [0, 2], sizes = [32, 2], strides = [1, 1]} : vector<32x8xf32> to vector<32x2xf32>
    %116 = tpu.concatenate %113, %114, %115 in 0 : vector<32x2xf32>, vector<32x2xf32>, vector<32x2xf32> -> vector<96x2xf32>
    %117 = vector.extract_strided_slice %110 {offsets = [0, 4], sizes = [32, 2], strides = [1, 1]} : vector<32x8xf32> to vector<32x2xf32>
    %118 = vector.extract_strided_slice %110 {offsets = [0, 5], sizes = [32, 2], strides = [1, 1]} : vector<32x8xf32> to vector<32x2xf32>
    %119 = vector.extract_strided_slice %110 {offsets = [0, 6], sizes = [32, 2], strides = [1, 1]} : vector<32x8xf32> to vector<32x2xf32>
    %120 = tpu.concatenate %117, %118, %119 in 0 : vector<32x2xf32>, vector<32x2xf32>, vector<32x2xf32> -> vector<96x2xf32>
    %121 = tpu.concatenate %116, %120 in 1 : vector<96x2xf32>, vector<96x2xf32> -> vector<96x4xf32>
    %cst_40 = arith.constant dense<0.000000e+00> : vector<16x4xf32>
    %122 = tpu.matmul %111, %121, %cst_40 {dimension_numbers = #tpu.dot_dimension_numbers<[1], [0], [0], [1], [0, 0, 1, 1], [], []>} : vector<16x96xf32>, vector<96x4xf32>, vector<16x4xf32> -> vector<16x4xf32>
    %123 = vector.broadcast %112 : vector<16x1xf32> to vector<16x4xf32>
    %124 = arith.addf %122, %123 : vector<16x4xf32>
    %cst_41 = arith.constant 0.000000e+00 : f32
    %125 = vector.broadcast %cst_41 : f32 to vector<16x4xf32>
    %126 = arith.maximumf %124, %125 : vector<16x4xf32>
    %127 = vector.extract_strided_slice %126 {offsets = [0, 0], sizes = [16, 2], strides = [1, 1]} : vector<16x4xf32> to vector<16x2xf32>
    %cst_42 = arith.constant 0xFF800000 : f32
    %128 = vector.broadcast %cst_42 : f32 to vector<16x1xf32>
    %129 = tpu.concatenate %127, %128 in 1 : vector<16x2xf32>, vector<16x1xf32> -> vector<16x3xf32>
    %130 = vector.shape_cast %129 : vector<16x3xf32> to vector<16x1x3xf32>
    %cst_43 = arith.constant dense<0xFF800000> : vector<16x1xf32>
    %131 = vector.multi_reduction <maximumf>, %130, %cst_43 [2] : vector<16x1x3xf32> to vector<16x1xf32>
    %132 = vector.extract_strided_slice %126 {offsets = [0, 2], sizes = [16, 2], strides = [1, 1]} : vector<16x4xf32> to vector<16x2xf32>
    %cst_44 = arith.constant 0xFF800000 : f32
    %133 = vector.broadcast %cst_44 : f32 to vector<16x1xf32>
    %134 = tpu.concatenate %132, %133 in 1 : vector<16x2xf32>, vector<16x1xf32> -> vector<16x3xf32>
    %135 = vector.shape_cast %134 : vector<16x3xf32> to vector<16x1x3xf32>
    %cst_45 = arith.constant dense<0xFF800000> : vector<16x1xf32>
    %136 = vector.multi_reduction <maximumf>, %135, %cst_45 [2] : vector<16x1x3xf32> to vector<16x1xf32>
    %c0_46 = arith.constant 0 : index
    %c0_47 = arith.constant 0 : index
    %137 = vector.load %arg11[%c0_46, %c0_47] : memref<16x128xf32, #tpu.memory_space<vmem>>, vector<16x128xf32>
    %c0_48 = arith.constant 0 : index
    %c0_49 = arith.constant 0 : index
    %138 = vector.load %arg12[%c0_48, %c0_49] : memref<16x1xf32, #tpu.memory_space<vmem>>, vector<16x1xf32>
    %139 = vector.extract_strided_slice %110 {offsets = [0, 0], sizes = [32, 1], strides = [1, 1]} : vector<32x8xf32> to vector<32x1xf32>
    %140 = vector.extract_strided_slice %110 {offsets = [0, 1], sizes = [32, 1], strides = [1, 1]} : vector<32x8xf32> to vector<32x1xf32>
    %141 = vector.extract_strided_slice %110 {offsets = [0, 2], sizes = [32, 1], strides = [1, 1]} : vector<32x8xf32> to vector<32x1xf32>
    %142 = vector.extract_strided_slice %110 {offsets = [0, 3], sizes = [32, 1], strides = [1, 1]} : vector<32x8xf32> to vector<32x1xf32>
    %143 = tpu.concatenate %139, %140, %141, %142 in 0 : vector<32x1xf32>, vector<32x1xf32>, vector<32x1xf32>, vector<32x1xf32> -> vector<128x1xf32>
    %144 = vector.extract_strided_slice %110 {offsets = [0, 4], sizes = [32, 1], strides = [1, 1]} : vector<32x8xf32> to vector<32x1xf32>
    %145 = vector.extract_strided_slice %110 {offsets = [0, 5], sizes = [32, 1], strides = [1, 1]} : vector<32x8xf32> to vector<32x1xf32>
    %146 = vector.extract_strided_slice %110 {offsets = [0, 6], sizes = [32, 1], strides = [1, 1]} : vector<32x8xf32> to vector<32x1xf32>
    %147 = vector.extract_strided_slice %110 {offsets = [0, 7], sizes = [32, 1], strides = [1, 1]} : vector<32x8xf32> to vector<32x1xf32>
    %148 = tpu.concatenate %144, %145, %146, %147 in 0 : vector<32x1xf32>, vector<32x1xf32>, vector<32x1xf32>, vector<32x1xf32> -> vector<128x1xf32>
    %149 = tpu.concatenate %143, %148 in 1 : vector<128x1xf32>, vector<128x1xf32> -> vector<128x2xf32>
    %cst_50 = arith.constant dense<0.000000e+00> : vector<16x2xf32>
    %150 = tpu.matmul %137, %149, %cst_50 {dimension_numbers = #tpu.dot_dimension_numbers<[1], [0], [0], [1], [0, 0, 1, 1], [], []>} : vector<16x128xf32>, vector<128x2xf32>, vector<16x2xf32> -> vector<16x2xf32>
    %151 = vector.broadcast %138 : vector<16x1xf32> to vector<16x2xf32>
    %152 = arith.addf %150, %151 : vector<16x2xf32>
    %cst_51 = arith.constant 0.000000e+00 : f32
    %153 = vector.broadcast %cst_51 : f32 to vector<16x2xf32>
    %154 = arith.maximumf %152, %153 : vector<16x2xf32>
    %155 = vector.extract_strided_slice %154 {offsets = [0, 0], sizes = [16, 1], strides = [1, 1]} : vector<16x2xf32> to vector<16x1xf32>
    %cst_52 = arith.constant 0xFF800000 : f32
    %156 = vector.broadcast %cst_52 : f32 to vector<16x2xf32>
    %157 = tpu.concatenate %155, %156 in 1 : vector<16x1xf32>, vector<16x2xf32> -> vector<16x3xf32>
    %158 = vector.shape_cast %157 : vector<16x3xf32> to vector<16x1x3xf32>
    %cst_53 = arith.constant dense<0xFF800000> : vector<16x1xf32>
    %159 = vector.multi_reduction <maximumf>, %158, %cst_53 [2] : vector<16x1x3xf32> to vector<16x1xf32>
    %160 = vector.extract_strided_slice %154 {offsets = [0, 1], sizes = [16, 1], strides = [1, 1]} : vector<16x2xf32> to vector<16x1xf32>
    %cst_54 = arith.constant 0xFF800000 : f32
    %161 = vector.broadcast %cst_54 : f32 to vector<16x2xf32>
    %162 = tpu.concatenate %160, %161 in 1 : vector<16x1xf32>, vector<16x2xf32> -> vector<16x3xf32>
    %163 = vector.shape_cast %162 : vector<16x3xf32> to vector<16x1x3xf32>
    %cst_55 = arith.constant dense<0xFF800000> : vector<16x1xf32>
    %164 = vector.multi_reduction <maximumf>, %163, %cst_55 [2] : vector<16x1x3xf32> to vector<16x1xf32>
    %165 = tpu.concatenate %131, %159 in 0 : vector<16x1xf32>, vector<16x1xf32> -> vector<32x1xf32>
    %166 = tpu.concatenate %136, %164 in 0 : vector<16x1xf32>, vector<16x1xf32> -> vector<32x1xf32>
    %167 = tpu.concatenate %165, %166 in 1 : vector<32x1xf32>, vector<32x1xf32> -> vector<32x2xf32>
    %168 = vector.extract_strided_slice %167 {offsets = [0, 0], sizes = [32, 1], strides = [1, 1]} : vector<32x2xf32> to vector<32x1xf32>
    %cst_56 = arith.constant dense<0xFF800000> : vector<32xf32>
    %169 = vector.multi_reduction <maximumf>, %168, %cst_56 [1] : vector<32x1xf32> to vector<32xf32>
    %170 = vector.shape_cast %169 : vector<32xf32> to vector<32x1xf32>
    %171 = vector.extract_strided_slice %167 {offsets = [0, 1], sizes = [32, 1], strides = [1, 1]} : vector<32x2xf32> to vector<32x1xf32>
    %cst_57 = arith.constant dense<0xFF800000> : vector<32xf32>
    %172 = vector.multi_reduction <maximumf>, %171, %cst_57 [1] : vector<32x1xf32> to vector<32xf32>
    %173 = vector.shape_cast %172 : vector<32xf32> to vector<32x1xf32>
    %174 = tpu.concatenate %170, %173 in 1 : vector<32x1xf32>, vector<32x1xf32> -> vector<32x2xf32>
    %c0_58 = arith.constant 0 : index
    %c0_59 = arith.constant 0 : index
    %175 = vector.load %arg13[%c0_58, %c0_59] : memref<2x32xf32, #tpu.memory_space<vmem>>, vector<2x32xf32>
    %cst_60 = arith.constant dense<0.000000e+00> : vector<2x2xf32>
    %176 = tpu.matmul %175, %174, %cst_60 {dimension_numbers = #tpu.dot_dimension_numbers<[1], [0], [0], [1], [0, 0, 1, 1], [], []>} : vector<2x32xf32>, vector<32x2xf32>, vector<2x2xf32> -> vector<2x2xf32>
    %c0_61 = arith.constant 0 : index
    %c0_62 = arith.constant 0 : index
    %177 = vector.load %arg14[%c0_61, %c0_62] : memref<2x1xf32, #tpu.memory_space<vmem>>, vector<2x1xf32>
    %178 = vector.broadcast %177 : vector<2x1xf32> to vector<2x2xf32>
    %179 = arith.addf %176, %178 : vector<2x2xf32>
    %c0_63 = arith.constant 0 : index
    %c0_64 = arith.constant 0 : index
    %180 = vector.load %arg15[%c0_63, %c0_64] : memref<2x2xf32, #tpu.memory_space<vmem>>, vector<2x2xf32>
    tpu.vector_store %arg15[%c0_63, %c0_64], %179 {strides = array<i32>} : memref<2x2xf32, #tpu.memory_space<vmem>>, vector<2x2xf32>,
    return
  }
}

</mosaic_0001>

<llo_original>
// kernel: tpu_custom_call.1
$region0: #{tpu_custom_call.1}
  #allocation0 [shape = 'u32[]', space=smem, size = 0x4, offset = 0x4, fixed_abs, tag = 'smem constant byte address 0x4 - core index']
  #allocation1 [shape = 'u32[72,128]{1,0:T(1,128)}', space=vmem, size = 0x9000, scoped, tag = 'internal scratch']
  %s0 = inlined_call_operand.vmem [shape: f32[32,96], index: 0, kind: input, shape index: {}]
  %s1 = inlined_call_operand.vmem [shape: f32[16,96], index: 1, kind: input, shape index: {}]
  %s2 = inlined_call_operand.vmem [shape: f32[16,1], index: 2, kind: input, shape index: {}]
  %s3 = inlined_call_operand.vmem [shape: f32[16,128], index: 3, kind: input, shape index: {}]
  %s4 = inlined_call_operand.vmem [shape: f32[16,1], index: 4, kind: input, shape index: {}]
  %s5 = inlined_call_operand.vmem [shape: f32[16,96], index: 5, kind: input, shape index: {}]
  %s6 = inlined_call_operand.vmem [shape: f32[16,1], index: 6, kind: input, shape index: {}]
  %s7 = inlined_call_operand.vmem [shape: f32[16,128], index: 7, kind: input, shape index: {}]
  %s8 = inlined_call_operand.vmem [shape: f32[16,1], index: 8, kind: input, shape index: {}]
  %s9 = inlined_call_operand.hbm [shape: f32[16,96], index: 9, kind: input, shape index: {}]
  %s10 = inlined_call_operand.vmem [shape: f32[16,1], index: 10, kind: input, shape index: {}]
  %s11 = inlined_call_operand.hbm [shape: f32[16,128], index: 11, kind: input, shape index: {}]
  %s12 = inlined_call_operand.vmem [shape: f32[16,1], index: 12, kind: input, shape index: {}]
  %s13 = inlined_call_operand.vmem [shape: f32[2,32], index: 13, kind: input, shape index: {}]
  %s14 = inlined_call_operand.vmem [shape: f32[2,1], index: 14, kind: input, shape index: {}]
  %s15 = inlined_call_operand.hbm [shape: f32[2,2], index: 15, kind: output, shape index: {}]
  %s16 = sld [smem:[#allocation0]]
  $region78: #{tpu_custom_call.1} parent=0
    _
  %s18 = ssub.s32 1, %s16
  %s19 = scalar_select 0, %s18, %s16
  $region1: #{tpu_custom_call.1} parent=0
    #allocation2 [shape = 'u8[8192]{0}', space=vmem, size = 0x2000, scoped, tag = 'input window, operand 9, single buffered']
    #allocation3 [shape = 's32[1]{0}', space=sflag, size = 0x4, scoped, tag = 'scoped memory for tpu_custom_call.1']
    #allocation4 [shape = 's32[1]{0}', space=sflag, size = 0x4, scoped, tag = 'scoped memory for tpu_custom_call.1']
    #allocation5 [shape = 'u8[8192]{0}', space=vmem, size = 0x2000, scoped, tag = 'input window, operand 11, single buffered']
    #allocation6 [shape = 's32[1]{0}', space=sflag, size = 0x4, scoped, tag = 'scoped memory for tpu_custom_call.1']
    #allocation7 [shape = 'u8[1024]{0}', space=vmem, size = 0x400, scoped, tag = 'output window, operand 0, single buffered']
    %20 = vsyncpa [#allocation3], 0
    %21 = vsyncpa [#allocation6], 0
    %22 = vsyncpa [#allocation4], 0
    // Predicated region
    $region2: #{tpu_custom_call.1} parent=1 // pred_check
      _
    $region3: #{tpu_custom_call.1} parent=1 // pred_check_branch
      %24 = sbr.rel (0) target = $region5
    $region4: #{tpu_custom_call.1} parent=1 // pred_region
      _
    $region5: #{tpu_custom_call.1} parent=1 // pred_fallthru
      _
    // Predicated region
    $region6: #{tpu_custom_call.1} parent=1 // pred_check
      _
    $region7: #{tpu_custom_call.1} parent=1 // pred_check_branch
      %26 = sbr.rel (0) target = $region9
    $region8: #{tpu_custom_call.1} parent=1 // pred_region
      _
    $region9: #{tpu_custom_call.1} parent=1 // pred_fallthru
      _
    // Predicated region
    $region10: #{tpu_custom_call.1} parent=1 // pred_check
      _
    $region11: #{tpu_custom_call.1} parent=1 // pred_check_branch
      %28 = sbr.rel (0) target = $region13
    $region12: #{tpu_custom_call.1} parent=1 // pred_region
      _
    $region13: #{tpu_custom_call.1} parent=1 // pred_fallthru
      _
    // Predicated region
    $region14: #{tpu_custom_call.1} parent=1 // pred_check
      _
    $region15: #{tpu_custom_call.1} parent=1 // pred_check_branch
      %30 = sbr.rel (0) target = $region17
    $region16: #{tpu_custom_call.1} parent=1 // pred_region
      _
    $region17: #{tpu_custom_call.1} parent=1 // pred_fallthru
      _
    // Predicated region
    $region18: #{tpu_custom_call.1} parent=1 // pred_check
      _
    $region19: #{tpu_custom_call.1} parent=1 // pred_check_branch
      %32 = sbr.rel (0) target = $region21
    $region20: #{tpu_custom_call.1} parent=1 // pred_region
      _
    $region21: #{tpu_custom_call.1} parent=1 // pred_fallthru
      _
    // Predicated region
    $region22: #{tpu_custom_call.1} parent=1 // pred_check
      _
    $region23: #{tpu_custom_call.1} parent=1 // pred_check_branch
      %34 = sbr.rel (0) target = $region25
    $region24: #{tpu_custom_call.1} parent=1 // pred_region
      _
    $region25: #{tpu_custom_call.1} parent=1 // pred_fallthru
      _
    // Predicated region
    $region26: #{tpu_custom_call.1} parent=1 // pred_check
      _
    $region27: #{tpu_custom_call.1} parent=1 // pred_check_branch
      %36 = sbr.rel (0) target = $region29
    $region28: #{tpu_custom_call.1} parent=1 // pred_region
      _
    $region29: #{tpu_custom_call.1} parent=1 // pred_fallthru
      _
    // Predicated region
    $region30: #{tpu_custom_call.1} parent=1 // pred_check
      _
    $region31: #{tpu_custom_call.1} parent=1 // pred_check_branch
      %38 = sbr.rel (0) target = $region33
    $region32: #{tpu_custom_call.1} parent=1 // pred_region
      _
    $region33: #{tpu_custom_call.1} parent=1 // pred_fallthru
      _
    // Predicated region
    $region34: #{tpu_custom_call.1} parent=1 // pred_check
      _
    $region35: #{tpu_custom_call.1} parent=1 // pred_check_branch
      %40 = sbr.rel (0) target = $region37
    $region36: #{tpu_custom_call.1} parent=1 // pred_region
      _
    $region37: #{tpu_custom_call.1} parent=1 // pred_fallthru
      _
    // Predicated region
    $region38: #{tpu_custom_call.1} parent=1 // pred_check
      _
    $region39: #{tpu_custom_call.1} parent=1 // pred_check_branch
      %42 = sbr.rel (0) target = $region41
    $region40: #{tpu_custom_call.1} parent=1 // pred_region
      %44 = vsyncadd [#allocation3], 0
      %s45 = sshll.u32 %s9, 4
      %s46 = int_to_ptr.hbm [resolvable:$true] %s45
      %s47 = sshll.u32 [#allocation2], 4
      %s48 = int_to_ptr.vmem [resolvable:$true] %s47
      %53 = dma.hbm_to_vmem [thread:$0]  %s46, 256, %s48, [#allocation3], 128, 128, 8
    $region41: #{tpu_custom_call.1} parent=1 // pred_fallthru
      _
    // Predicated region
    $region42: #{tpu_custom_call.1} parent=1 // pred_check
      _
    $region43: #{tpu_custom_call.1} parent=1 // pred_check_branch
      %55 = sbr.rel (0) target = $region45
    $region44: #{tpu_custom_call.1} parent=1 // pred_region
      _
    $region45: #{tpu_custom_call.1} parent=1 // pred_fallthru
      _
    // Predicated region
    $region46: #{tpu_custom_call.1} parent=1 // pred_check
      _
    $region47: #{tpu_custom_call.1} parent=1 // pred_check_branch
      %57 = sbr.rel (0) target = $region49
    $region48: #{tpu_custom_call.1} parent=1 // pred_region
      %59 = vsyncadd [#allocation6], 0
      %s60 = sshll.u32 %s11, 4
      %s61 = int_to_ptr.hbm [resolvable:$true] %s60
      %s62 = sshll.u32 [#allocation5], 4
      %s63 = int_to_ptr.vmem [resolvable:$true] %s62
      %68 = dma.hbm_to_vmem [thread:$0]  %s61, 256, %s63, [#allocation6], 128, 128, 8
    $region49: #{tpu_custom_call.1} parent=1 // pred_fallthru
      _
    // Predicated region
    $region50: #{tpu_custom_call.1} parent=1 // pred_check
      _
    $region51: #{tpu_custom_call.1} parent=1 // pred_check_branch
      %70 = sbr.rel (0) target = $region53
    $region52: #{tpu_custom_call.1} parent=1 // pred_region
      _
    $region53: #{tpu_custom_call.1} parent=1 // pred_fallthru
      _
    // Predicated region
    $region54: #{tpu_custom_call.1} parent=1 // pred_check
      _
    $region55: #{tpu_custom_call.1} parent=1 // pred_check_branch
      %72 = sbr.rel (0) target = $region57
    $region56: #{tpu_custom_call.1} parent=1 // pred_region
      _
    $region57: #{tpu_custom_call.1} parent=1 // pred_fallthru
      _
    // Predicated region
    $region58: #{tpu_custom_call.1} parent=1 // pred_check
      _
    $region59: #{tpu_custom_call.1} parent=1 // pred_check_branch
      %74 = sbr.rel (0) target = $region61
    $region60: #{tpu_custom_call.1} parent=1 // pred_region
      _
    $region61: #{tpu_custom_call.1} parent=1 // pred_fallthru
      _
    // Predicated region
    $region62: #{tpu_custom_call.1} parent=1 // pred_check
      _
    $region63: #{tpu_custom_call.1} parent=1 // pred_check_branch
      %76 = sbr.rel (0) target = $region65
    $region64: #{tpu_custom_call.1} parent=1 // pred_region
      %78 = dma.done [#allocation3], 256
    $region65: #{tpu_custom_call.1} parent=1 // pred_fallthru
      _
    // Predicated region
    $region66: #{tpu_custom_call.1} parent=1 // pred_check
      _
    $region67: #{tpu_custom_call.1} parent=1 // pred_check_branch
      %80 = sbr.rel (0) target = $region69
    $region68: #{tpu_custom_call.1} parent=1 // pred_region
      %82 = dma.done [#allocation6], 256
    $region69: #{tpu_custom_call.1} parent=1 // pred_fallthru
      _
    %v83 = vld [vmem:[%s0] sm:$0xff]
    %v84 = vld [vmem:[%s0 + $0x8] sm:$0xff]
    %v85 = vld [vmem:[%s0 + $0x10] sm:$0xff]
    %v86 = vld [vmem:[%s0 + $0x18] sm:$0xff]
    %v87 = vld [vmem:[%s1] sm:$0xff]
    %v88 = vld [vmem:[%s1 + $0x8] sm:$0xff]
    %v89 = vld [vmem:[%s2] sm:$0xff]
    %v90 = vld [vmem:[%s2 + $0x8] sm:$0xff]
    %95 = vrot.lane.b32.xlu0 %v83, 127
    %v96 = vpop.permute.xlu0 %95
    %97 = vrot.lane.b32.xlu0 %v84, 127
    %v98 = vpop.permute.xlu0 %97
    %99 = vrot.lane.b32.xlu0 %v85, 127
    %v100 = vpop.permute.xlu0 %99
    %101 = vrot.lane.b32.xlu0 %v86, 127
    %v102 = vpop.permute.xlu0 %101
    %107 = vrot.lane.b32.xlu0 %v83, 126
    %v108 = vpop.permute.xlu0 %107
    %109 = vrot.lane.b32.xlu0 %v84, 126
    %v110 = vpop.permute.xlu0 %109
    %111 = vrot.lane.b32.xlu0 %v85, 126
    %v112 = vpop.permute.xlu0 %111
    %113 = vrot.lane.b32.xlu0 %v86, 126
    %v114 = vpop.permute.xlu0 %113
    %119 = vrot.lane.b32.xlu0 %v96, 126
    %v120 = vpop.permute.xlu0 %119
    %121 = vrot.lane.b32.xlu0 %v98, 126
    %v122 = vpop.permute.xlu0 %121
    %123 = vrot.lane.b32.xlu0 %v100, 126
    %v124 = vpop.permute.xlu0 %123
    %125 = vrot.lane.b32.xlu0 %v102, 126
    %v126 = vpop.permute.xlu0 %125
    %127 = vrot.lane.b32.xlu0 %v108, 126
    %v128 = vpop.permute.xlu0 %127
    %129 = vrot.lane.b32.xlu0 %v110, 126
    %v130 = vpop.permute.xlu0 %129
    %131 = vrot.lane.b32.xlu0 %v112, 126
    %v132 = vpop.permute.xlu0 %131
    %133 = vrot.lane.b32.xlu0 %v114, 126
    %v134 = vpop.permute.xlu0 %133
    %vm143 = vcmask 375808
    %v144 = vsel %vm143, %v83, %v108
    %v145 = vsel %vm143, %v84, %v110
    %v146 = vsel %vm143, %v85, %v112
    %v147 = vsel %vm143, %v86, %v114
    %v148 = vsel %vm143, %v96, %v120
    %v149 = vsel %vm143, %v98, %v122
    %v150 = vsel %vm143, %v100, %v124
    %v151 = vsel %vm143, %v102, %v126
    %v152 = vsel %vm143, %v108, %v128
    %v153 = vsel %vm143, %v110, %v130
    %v154 = vsel %vm143, %v112, %v132
    %v155 = vsel %vm143, %v114, %v134
    %157 = vset.pattern.permute.xlu0 0
    %158 = vperm.xlu0 %157, %v89
    %v159 = vpop.permute.xlu0 %158
    %162 = vset.pattern.permute.xlu0 0
    %163 = vperm.xlu0 %162, %v90
    %v164 = vpop.permute.xlu0 %163
    %vm166 = vcmask 785408
    %v168 = vsel %vm166, %v87, 0
    %v171 = vsel %vm166, %v88, 0
    %173 = vmatpush.msra.mxu0 0.0
    %174 = vmatpush.msra.mxu0 0.0
    %175 = vmatpush.msra.mxu0 0.0
    %176 = vmatpush.msra.mxu0 0.0
    %177 = vmatpush.msra.mxu0 %v155
    %178 = vmatpush.msra.mxu0 %v154
    %179 = vmatpush.msra.mxu0 %v153
    %180 = vmatpush.msra.mxu0 %v152
    %181 = vmatpush.msra.mxu0 %v151
    %182 = vmatpush.msra.mxu0 %v150
    %183 = vmatpush.msra.mxu0 %v149
    %184 = vmatpush.msra.mxu0 %v148
    %185 = vmatpush.msra.mxu0 %v147
    %186 = vmatpush.msra.mxu0 %v146
    %187 = vmatpush.msra.mxu0 %v145
    %188 = vmatpush.msra.mxu0 %v144
    %189 = vmatmul.f32.gmra.mxu0 %v168
    %v190 = vpop.f32.mrf.mxu0
    %v191 = vadd.f32 %v159, %v190
    %192 = vmatmul.f32.gmra.mxu0 %v171
    %v193 = vpop.f32.mrf.mxu0
    %v194 = vadd.f32 %v164, %v193
    %195 = vdwg.mxu0
    %v196 = vmax.f32 %v191, 0.0
    %v197 = vmax.f32 %v194, 0.0
    %v198 = vsel %vm143, %v196, -inf
    %v199 = vsel %vm143, %v197, -inf
    %202 = vrot.lane.b32.xlu0 %v198, 125
    %v203 = vpop.permute.xlu0 %202
    %204 = vrot.lane.b32.xlu0 %v199, 125
    %v205 = vpop.permute.xlu0 %204
    %208 = vrot.lane.b32.xlu0 %v198, 122
    %v209 = vpop.permute.xlu0 %208
    %210 = vrot.lane.b32.xlu0 %v199, 122
    %v211 = vpop.permute.xlu0 %210
    %214 = vrot.lane.b32.xlu0 %v198, 119
    %v215 = vpop.permute.xlu0 %214
    %216 = vrot.lane.b32.xlu0 %v199, 119
    %v217 = vpop.permute.xlu0 %216
    %220 = vrot.lane.b32.xlu0 %v198, 116
    %v221 = vpop.permute.xlu0 %220
    %222 = vrot.lane.b32.xlu0 %v199, 116
    %v223 = vpop.permute.xlu0 %222
    %226 = vrot.lane.b32.xlu0 %v198, 113
    %v227 = vpop.permute.xlu0 %226
    %228 = vrot.lane.b32.xlu0 %v199, 113
    %v229 = vpop.permute.xlu0 %228
    %232 = vrot.lane.b32.xlu0 %v198, 110
    %v233 = vpop.permute.xlu0 %232
    %234 = vrot.lane.b32.xlu0 %v199, 110
    %v235 = vpop.permute.xlu0 %234
    %238 = vrot.lane.b32.xlu0 %v198, 107
    %v239 = vpop.permute.xlu0 %238
    %240 = vrot.lane.b32.xlu0 %v199, 107
    %v241 = vpop.permute.xlu0 %240
    %244 = vrot.lane.b32.xlu0 %v198, 104
    %v245 = vpop.permute.xlu0 %244
    %246 = vrot.lane.b32.xlu0 %v199, 104
    %v247 = vpop.permute.xlu0 %246
    %250 = vrot.lane.b32.xlu0 %v198, 101
    %v251 = vpop.permute.xlu0 %250
    %252 = vrot.lane.b32.xlu0 %v199, 101
    %v253 = vpop.permute.xlu0 %252
    %256 = vrot.lane.b32.xlu0 %v198, 98
    %v257 = vpop.permute.xlu0 %256
    %258 = vrot.lane.b32.xlu0 %v199, 98
    %v259 = vpop.permute.xlu0 %258
    %262 = vrot.lane.b32.xlu0 %v198, 95
    %v263 = vpop.permute.xlu0 %262
    %264 = vrot.lane.b32.xlu0 %v199, 95
    %v265 = vpop.permute.xlu0 %264
    %268 = vrot.lane.b32.xlu0 %v198, 92
    %v269 = vpop.permute.xlu0 %268
    %270 = vrot.lane.b32.xlu0 %v199, 92
    %v271 = vpop.permute.xlu0 %270
    %274 = vrot.lane.b32.xlu0 %v198, 89
    %v275 = vpop.permute.xlu0 %274
    %276 = vrot.lane.b32.xlu0 %v199, 89
    %v277 = vpop.permute.xlu0 %276
    %280 = vrot.lane.b32.xlu0 %v198, 86
    %v281 = vpop.permute.xlu0 %280
    %282 = vrot.lane.b32.xlu0 %v199, 86
    %v283 = vpop.permute.xlu0 %282
    %286 = vrot.lane.b32.xlu0 %v198, 83
    %v287 = vpop.permute.xlu0 %286
    %288 = vrot.lane.b32.xlu0 %v199, 83
    %v289 = vpop.permute.xlu0 %288
    %v292 = vrot.slane %v209, 4
    %vm293 = vcmask 1047556
    %v294 = vsel %vm293, %v292, %v198
    %v295 = vrot.slane %v198, 4
    %v296 = vsel %vm293, %v209, %v295
    %v298 = vunpack.c.l.s4 1983009808
    %v299 = vunpack.c.0.s8 %v298
    %v300 = vperm.slane %v294, %v299
    %v302 = vunpack.c.l.s4 1983009808
    %v303 = vunpack.c.0.s8 %v302
    %v304 = vperm.slane %v296, %v303
    %v305 = vrot.slane %v215, 4
    %v306 = vsel %vm293, %v305, %v203
    %v307 = vrot.slane %v203, 4
    %v308 = vsel %vm293, %v215, %v307
    %v310 = vunpack.c.l.s4 1983009808
    %v311 = vunpack.c.0.s8 %v310
    %v312 = vperm.slane %v306, %v311
    %v314 = vunpack.c.l.s4 1983009808
    %v315 = vunpack.c.0.s8 %v314
    %v316 = vperm.slane %v308, %v315
    %v317 = vrot.slane %v233, 4
    %v318 = vsel %vm293, %v317, %v221
    %v319 = vrot.slane %v221, 4
    %v320 = vsel %vm293, %v233, %v319
    %v322 = vunpack.c.l.s4 1983009808
    %v323 = vunpack.c.0.s8 %v322
    %v324 = vperm.slane %v318, %v323
    %v326 = vunpack.c.l.s4 1983009808
    %v327 = vunpack.c.0.s8 %v326
    %v328 = vperm.slane %v320, %v327
    %v329 = vrot.slane %v239, 4
    %v330 = vsel %vm293, %v329, %v227
    %v331 = vrot.slane %v227, 4
    %v332 = vsel %vm293, %v239, %v331
    %v334 = vunpack.c.l.s4 1983009808
    %v335 = vunpack.c.0.s8 %v334
    %v336 = vperm.slane %v330, %v335
    %v338 = vunpack.c.l.s4 1983009808
    %v339 = vunpack.c.0.s8 %v338
    %v340 = vperm.slane %v332, %v339
    %v341 = vrot.slane %v312, 4
    %v342 = vsel %vm293, %v341, %v300
    %v343 = vrot.slane %v300, 4
    %v344 = vsel %vm293, %v312, %v343
    %v346 = vunpack.c.l.s4 1934713408
    %v347 = vunpack.c.0.s8 %v346
    %v348 = vperm.slane %v342, %v347
    %v350 = vunpack.c.l.s4 1934713408
    %v351 = vunpack.c.0.s8 %v350
    %v352 = vperm.slane %v344, %v351
    %v353 = vrot.slane %v316, 4
    %v354 = vsel %vm293, %v353, %v304
    %v355 = vrot.slane %v304, 4
    %v356 = vsel %vm293, %v316, %v355
    %v358 = vunpack.c.l.s4 1934713408
    %v359 = vunpack.c.0.s8 %v358
    %v360 = vperm.slane %v354, %v359
    %v362 = vunpack.c.l.s4 1934713408
    %v363 = vunpack.c.0.s8 %v362
    %v364 = vperm.slane %v356, %v363
    %v365 = vrot.slane %v336, 4
    %v366 = vsel %vm293, %v365, %v324
    %v367 = vrot.slane %v324, 4
    %v368 = vsel %vm293, %v336, %v367
    %v370 = vunpack.c.l.s4 1934713408
    %v371 = vunpack.c.0.s8 %v370
    %v372 = vperm.slane %v366, %v371
    %v374 = vunpack.c.l.s4 1934713408
    %v375 = vunpack.c.0.s8 %v374
    %v376 = vperm.slane %v368, %v375
    %v377 = vrot.slane %v340, 4
    %v378 = vsel %vm293, %v377, %v328
    %v379 = vrot.slane %v328, 4
    %v380 = vsel %vm293, %v340, %v379
    %v382 = vunpack.c.l.s4 1934713408
    %v383 = vunpack.c.0.s8 %v382
    %v384 = vperm.slane %v378, %v383
    %v386 = vunpack.c.l.s4 1934713408
    %v387 = vunpack.c.0.s8 %v386
    %v388 = vperm.slane %v380, %v387
    %v389 = vrot.slane %v372, 4
    %v390 = vsel %vm293, %v389, %v348
    %v391 = vrot.slane %v348, 4
    %v392 = vsel %vm293, %v372, %v391
    %v393 = vrot.slane %v376, 4
    %v394 = vsel %vm293, %v393, %v352
    %v395 = vrot.slane %v352, 4
    %v396 = vsel %vm293, %v376, %v395
    %v397 = vrot.slane %v384, 4
    %v398 = vsel %vm293, %v397, %v360
    %v399 = vrot.slane %v360, 4
    %v400 = vsel %vm293, %v384, %v399
    %v401 = vrot.slane %v388, 4
    %v402 = vsel %vm293, %v401, %v364
    %v403 = vrot.slane %v364, 4
    %v404 = vsel %vm293, %v388, %v403
    %v405 = vrot.slane %v257, 4
    %v406 = vsel %vm293, %v405, %v245
    %v407 = vrot.slane %v245, 4
    %v408 = vsel %vm293, %v257, %v407
    %v410 = vunpack.c.l.s4 1983009808
    %v411 = vunpack.c.0.s8 %v410
    %v412 = vperm.slane %v406, %v411
    %v414 = vunpack.c.l.s4 1983009808
    %v415 = vunpack.c.0.s8 %v414
    %v416 = vperm.slane %v408, %v415
    %v417 = vrot.slane %v263, 4
    %v418 = vsel %vm293, %v417, %v251
    %v419 = vrot.slane %v251, 4
    %v420 = vsel %vm293, %v263, %v419
    %v422 = vunpack.c.l.s4 1983009808
    %v423 = vunpack.c.0.s8 %v422
    %v424 = vperm.slane %v418, %v423
    %v426 = vunpack.c.l.s4 1983009808
    %v427 = vunpack.c.0.s8 %v426
    %v428 = vperm.slane %v420, %v427
    %v429 = vrot.slane %v281, 4
    %v430 = vsel %vm293, %v429, %v269
    %v431 = vrot.slane %v269, 4
    %v432 = vsel %vm293, %v281, %v431
    %v434 = vunpack.c.l.s4 1983009808
    %v435 = vunpack.c.0.s8 %v434
    %v436 = vperm.slane %v430, %v435
    %v438 = vunpack.c.l.s4 1983009808
    %v439 = vunpack.c.0.s8 %v438
    %v440 = vperm.slane %v432, %v439
    %v441 = vrot.slane %v287, 4
    %v442 = vsel %vm293, %v441, %v275
    %v443 = vrot.slane %v275, 4
    %v444 = vsel %vm293, %v287, %v443
    %v446 = vunpack.c.l.s4 1983009808
    %v447 = vunpack.c.0.s8 %v446
    %v448 = vperm.slane %v442, %v447
    %v450 = vunpack.c.l.s4 1983009808
    %v451 = vunpack.c.0.s8 %v450
    %v452 = vperm.slane %v444, %v451
    %v453 = vrot.slane %v424, 4
    %v454 = vsel %vm293, %v453, %v412
    %v455 = vrot.slane %v412, 4
    %v456 = vsel %vm293, %v424, %v455
    %v458 = vunpack.c.l.s4 1934713408
    %v459 = vunpack.c.0.s8 %v458
    %v460 = vperm.slane %v454, %v459
    %v462 = vunpack.c.l.s4 1934713408
    %v463 = vunpack.c.0.s8 %v462
    %v464 = vperm.slane %v456, %v463
    %v465 = vrot.slane %v428, 4
    %v466 = vsel %vm293, %v465, %v416
    %v467 = vrot.slane %v416, 4
    %v468 = vsel %vm293, %v428, %v467
    %v470 = vunpack.c.l.s4 1934713408
    %v471 = vunpack.c.0.s8 %v470
    %v472 = vperm.slane %v466, %v471
    %v474 = vunpack.c.l.s4 1934713408
    %v475 = vunpack.c.0.s8 %v474
    %v476 = vperm.slane %v468, %v475
    %v477 = vrot.slane %v448, 4
    %v478 = vsel %vm293, %v477, %v436
    %v479 = vrot.slane %v436, 4
    %v480 = vsel %vm293, %v448, %v479
    %v482 = vunpack.c.l.s4 1934713408
    %v483 = vunpack.c.0.s8 %v482
    %v484 = vperm.slane %v478, %v483
    %v486 = vunpack.c.l.s4 1934713408
    %v487 = vunpack.c.0.s8 %v486
    %v488 = vperm.slane %v480, %v487
    %v489 = vrot.slane %v452, 4
    %v490 = vsel %vm293, %v489, %v440
    %v491 = vrot.slane %v440, 4
    %v492 = vsel %vm293, %v452, %v491
    %v494 = vunpack.c.l.s4 1934713408
    %v495 = vunpack.c.0.s8 %v494
    %v496 = vperm.slane %v490, %v495
    %v498 = vunpack.c.l.s4 1934713408
    %v499 = vunpack.c.0.s8 %v498
    %v500 = vperm.slane %v492, %v499
    %v501 = vrot.slane %v484, 4
    %v502 = vsel %vm293, %v501, %v460
    %v503 = vrot.slane %v460, 4
    %v504 = vsel %vm293, %v484, %v503
    %v505 = vrot.slane %v488, 4
    %v506 = vsel %vm293, %v505, %v464
    %v507 = vrot.slane %v464, 4
    %v508 = vsel %vm293, %v488, %v507
    %v509 = vrot.slane %v496, 4
    %v510 = vsel %vm293, %v509, %v472
    %v511 = vrot.slane %v472, 4
    %v512 = vsel %vm293, %v496, %v511
    %v513 = vrot.slane %v500, 4
    %v514 = vsel %vm293, %v513, %v476
    %v515 = vrot.slane %v476, 4
    %v516 = vsel %vm293, %v500, %v515
    %v517 = vrot.slane %v211, 4
    %v518 = vsel %vm293, %v517, %v199
    %v519 = vrot.slane %v199, 4
    %v520 = vsel %vm293, %v211, %v519
    %v522 = vunpack.c.l.s4 1983009808
    %v523 = vunpack.c.0.s8 %v522
    %v524 = vperm.slane %v518, %v523
    %v526 = vunpack.c.l.s4 1983009808
    %v527 = vunpack.c.0.s8 %v526
    %v528 = vperm.slane %v520, %v527
    %v529 = vrot.slane %v217, 4
    %v530 = vsel %vm293, %v529, %v205
    %v531 = vrot.slane %v205, 4
    %v532 = vsel %vm293, %v217, %v531
    %v534 = vunpack.c.l.s4 1983009808
    %v535 = vunpack.c.0.s8 %v534
    %v536 = vperm.slane %v530, %v535
    %v538 = vunpack.c.l.s4 1983009808
    %v539 = vunpack.c.0.s8 %v538
    %v540 = vperm.slane %v532, %v539
    %v541 = vrot.slane %v235, 4
    %v542 = vsel %vm293, %v541, %v223
    %v543 = vrot.slane %v223, 4
    %v544 = vsel %vm293, %v235, %v543
    %v546 = vunpack.c.l.s4 1983009808
    %v547 = vunpack.c.0.s8 %v546
    %v548 = vperm.slane %v542, %v547
    %v550 = vunpack.c.l.s4 1983009808
    %v551 = vunpack.c.0.s8 %v550
    %v552 = vperm.slane %v544, %v551
    %v553 = vrot.slane %v241, 4
    %v554 = vsel %vm293, %v553, %v229
    %v555 = vrot.slane %v229, 4
    %v556 = vsel %vm293, %v241, %v555
    %v558 = vunpack.c.l.s4 1983009808
    %v559 = vunpack.c.0.s8 %v558
    %v560 = vperm.slane %v554, %v559
    %v562 = vunpack.c.l.s4 1983009808
    %v563 = vunpack.c.0.s8 %v562
    %v564 = vperm.slane %v556, %v563
    %v565 = vrot.slane %v536, 4
    %v566 = vsel %vm293, %v565, %v524
    %v567 = vrot.slane %v524, 4
    %v568 = vsel %vm293, %v536, %v567
    %v570 = vunpack.c.l.s4 1934713408
    %v571 = vunpack.c.0.s8 %v570
    %v572 = vperm.slane %v566, %v571
    %v574 = vunpack.c.l.s4 1934713408
    %v575 = vunpack.c.0.s8 %v574
    %v576 = vperm.slane %v568, %v575
    %v577 = vrot.slane %v540, 4
    %v578 = vsel %vm293, %v577, %v528
    %v579 = vrot.slane %v528, 4
    %v580 = vsel %vm293, %v540, %v579
    %v582 = vunpack.c.l.s4 1934713408
    %v583 = vunpack.c.0.s8 %v582
    %v584 = vperm.slane %v578, %v583
    %v586 = vunpack.c.l.s4 1934713408
    %v587 = vunpack.c.0.s8 %v586
    %v588 = vperm.slane %v580, %v587
    %v589 = vrot.slane %v560, 4
    %v590 = vsel %vm293, %v589, %v548
    %v591 = vrot.slane %v548, 4
    %v592 = vsel %vm293, %v560, %v591
    %v594 = vunpack.c.l.s4 1934713408
    %v595 = vunpack.c.0.s8 %v594
    %v596 = vperm.slane %v590, %v595
    %v598 = vunpack.c.l.s4 1934713408
    %v599 = vunpack.c.0.s8 %v598
    %v600 = vperm.slane %v592, %v599
    %v601 = vrot.slane %v564, 4
    %v602 = vsel %vm293, %v601, %v552
    %v603 = vrot.slane %v552, 4
    %v604 = vsel %vm293, %v564, %v603
    %v606 = vunpack.c.l.s4 1934713408
    %v607 = vunpack.c.0.s8 %v606
    %v608 = vperm.slane %v602, %v607
    %v610 = vunpack.c.l.s4 1934713408
    %v611 = vunpack.c.0.s8 %v610
    %v612 = vperm.slane %v604, %v611
    %v613 = vrot.slane %v596, 4
    %v614 = vsel %vm293, %v613, %v572
    %v615 = vrot.slane %v572, 4
    %v616 = vsel %vm293, %v596, %v615
    %v617 = vrot.slane %v600, 4
    %v618 = vsel %vm293, %v617, %v576
    %v619 = vrot.slane %v576, 4
    %v620 = vsel %vm293, %v600, %v619
    %v621 = vrot.slane %v608, 4
    %v622 = vsel %vm293, %v621, %v584
    %v623 = vrot.slane %v584, 4
    %v624 = vsel %vm293, %v608, %v623
    %v625 = vrot.slane %v612, 4
    %v626 = vsel %vm293, %v625, %v588
    %v627 = vrot.slane %v588, 4
    %v628 = vsel %vm293, %v612, %v627
    %v629 = vrot.slane %v259, 4
    %v630 = vsel %vm293, %v629, %v247
    %v631 = vrot.slane %v247, 4
    %v632 = vsel %vm293, %v259, %v631
    %v634 = vunpack.c.l.s4 1983009808
    %v635 = vunpack.c.0.s8 %v634
    %v636 = vperm.slane %v630, %v635
    %v638 = vunpack.c.l.s4 1983009808
    %v639 = vunpack.c.0.s8 %v638
    %v640 = vperm.slane %v632, %v639
    %v641 = vrot.slane %v265, 4
    %v642 = vsel %vm293, %v641, %v253
    %v643 = vrot.slane %v253, 4
    %v644 = vsel %vm293, %v265, %v643
    %v646 = vunpack.c.l.s4 1983009808
    %v647 = vunpack.c.0.s8 %v646
    %v648 = vperm.slane %v642, %v647
    %v650 = vunpack.c.l.s4 1983009808
    %v651 = vunpack.c.0.s8 %v650
    %v652 = vperm.slane %v644, %v651
    %v653 = vrot.slane %v283, 4
    %v654 = vsel %vm293, %v653, %v271
    %v655 = vrot.slane %v271, 4
    %v656 = vsel %vm293, %v283, %v655
    %v658 = vunpack.c.l.s4 1983009808
    %v659 = vunpack.c.0.s8 %v658
    %v660 = vperm.slane %v654, %v659
    %v662 = vunpack.c.l.s4 1983009808
    %v663 = vunpack.c.0.s8 %v662
    %v664 = vperm.slane %v656, %v663
    %v665 = vrot.slane %v289, 4
    %v666 = vsel %vm293, %v665, %v277
    %v667 = vrot.slane %v277, 4
    %v668 = vsel %vm293, %v289, %v667
    %v670 = vunpack.c.l.s4 1983009808
    %v671 = vunpack.c.0.s8 %v670
    %v672 = vperm.slane %v666, %v671
    %v674 = vunpack.c.l.s4 1983009808
    %v675 = vunpack.c.0.s8 %v674
    %v676 = vperm.slane %v668, %v675
    %v677 = vrot.slane %v648, 4
    %v678 = vsel %vm293, %v677, %v636
    %v679 = vrot.slane %v636, 4
    %v680 = vsel %vm293, %v648, %v679
    %v682 = vunpack.c.l.s4 1934713408
    %v683 = vunpack.c.0.s8 %v682
    %v684 = vperm.slane %v678, %v683
    %v686 = vunpack.c.l.s4 1934713408
    %v687 = vunpack.c.0.s8 %v686
    %v688 = vperm.slane %v680, %v687
    %v689 = vrot.slane %v652, 4
    %v690 = vsel %vm293, %v689, %v640
    %v691 = vrot.slane %v640, 4
    %v692 = vsel %vm293, %v652, %v691
    %v694 = vunpack.c.l.s4 1934713408
    %v695 = vunpack.c.0.s8 %v694
    %v696 = vperm.slane %v690, %v695
    %v698 = vunpack.c.l.s4 1934713408
    %v699 = vunpack.c.0.s8 %v698
    %v700 = vperm.slane %v692, %v699
    %v701 = vrot.slane %v672, 4
    %v702 = vsel %vm293, %v701, %v660
    %v703 = vrot.slane %v660, 4
    %v704 = vsel %vm293, %v672, %v703
    %v706 = vunpack.c.l.s4 1934713408
    %v707 = vunpack.c.0.s8 %v706
    %v708 = vperm.slane %v702, %v707
    %v710 = vunpack.c.l.s4 1934713408
    %v711 = vunpack.c.0.s8 %v710
    %v712 = vperm.slane %v704, %v711
    %v713 = vrot.slane %v676, 4
    %v714 = vsel %vm293, %v713, %v664
    %v715 = vrot.slane %v664, 4
    %v716 = vsel %vm293, %v676, %v715
    %v718 = vunpack.c.l.s4 1934713408
    %v719 = vunpack.c.0.s8 %v718
    %v720 = vperm.slane %v714, %v719
    %v722 = vunpack.c.l.s4 1934713408
    %v723 = vunpack.c.0.s8 %v722
    %v724 = vperm.slane %v716, %v723
    %v725 = vrot.slane %v708, 4
    %v726 = vsel %vm293, %v725, %v684
    %v727 = vrot.slane %v684, 4
    %v728 = vsel %vm293, %v708, %v727
    %v729 = vrot.slane %v712, 4
    %v730 = vsel %vm293, %v729, %v688
    %v731 = vrot.slane %v688, 4
    %v732 = vsel %vm293, %v712, %v731
    %v733 = vrot.slane %v720, 4
    %v734 = vsel %vm293, %v733, %v696
    %v735 = vrot.slane %v696, 4
    %v736 = vsel %vm293, %v720, %v735
    %v737 = vrot.slane %v724, 4
    %v738 = vsel %vm293, %v737, %v700
    %v739 = vrot.slane %v700, 4
    %v740 = vsel %vm293, %v724, %v739
    %vm741 = vcmask 23552
    %v742 = vsel %vm741, %v390, -inf
    %743 = vmax.xlane.f32.xlu0 %v742
    %v744 = vpop.xlane.xlu0 %743
    %v745 = vsel %vm741, %v502, -inf
    %746 = vmax.xlane.f32.xlu0 %v745
    %v747 = vpop.xlane.xlu0 %746
    %v748 = vsel %vm741, %v392, -inf
    %749 = vmax.xlane.f32.xlu0 %v748
    %v750 = vpop.xlane.xlu0 %749
    %v751 = vsel %vm741, %v504, -inf
    %752 = vmax.xlane.f32.xlu0 %v751
    %v753 = vpop.xlane.xlu0 %752
    %v754 = vsel %vm741, %v394, -inf
    %755 = vmax.xlane.f32.xlu0 %v754
    %v756 = vpop.xlane.xlu0 %755
    %v757 = vsel %vm741, %v506, -inf
    %758 = vmax.xlane.f32.xlu0 %v757
    %v759 = vpop.xlane.xlu0 %758
    %v760 = vsel %vm741, %v396, -inf
    %761 = vmax.xlane.f32.xlu0 %v760
    %v762 = vpop.xlane.xlu0 %761
    %v763 = vsel %vm741, %v508, -inf
    %764 = vmax.xlane.f32.xlu0 %v763
    %v765 = vpop.xlane.xlu0 %764
    %v766 = vsel %vm741, %v398, -inf
    %767 = vmax.xlane.f32.xlu0 %v766
    %v768 = vpop.xlane.xlu0 %767
    %v769 = vsel %vm741, %v510, -inf
    %770 = vmax.xlane.f32.xlu0 %v769
    %v771 = vpop.xlane.xlu0 %770
    %v772 = vsel %vm741, %v400, -inf
    %773 = vmax.xlane.f32.xlu0 %v772
    %v774 = vpop.xlane.xlu0 %773
    %v775 = vsel %vm741, %v512, -inf
    %776 = vmax.xlane.f32.xlu0 %v775
    %v777 = vpop.xlane.xlu0 %776
    %v778 = vsel %vm741, %v402, -inf
    %779 = vmax.xlane.f32.xlu0 %v778
    %v780 = vpop.xlane.xlu0 %779
    %v781 = vsel %vm741, %v514, -inf
    %782 = vmax.xlane.f32.xlu0 %v781
    %v783 = vpop.xlane.xlu0 %782
    %v784 = vsel %vm741, %v404, -inf
    %785 = vmax.xlane.f32.xlu0 %v784
    %v786 = vpop.xlane.xlu0 %785
    %v787 = vsel %vm741, %v516, -inf
    %788 = vmax.xlane.f32.xlu0 %v787
    %v789 = vpop.xlane.xlu0 %788
    %v790 = vsel %vm741, %v614, -inf
    %791 = vmax.xlane.f32.xlu0 %v790
    %v792 = vpop.xlane.xlu0 %791
    %v793 = vsel %vm741, %v726, -inf
    %794 = vmax.xlane.f32.xlu0 %v793
    %v795 = vpop.xlane.xlu0 %794
    %v796 = vsel %vm741, %v616, -inf
    %797 = vmax.xlane.f32.xlu0 %v796
    %v798 = vpop.xlane.xlu0 %797
    %v799 = vsel %vm741, %v728, -inf
    %800 = vmax.xlane.f32.xlu0 %v799
    %v801 = vpop.xlane.xlu0 %800
    %v802 = vsel %vm741, %v618, -inf
    %803 = vmax.xlane.f32.xlu0 %v802
    %v804 = vpop.xlane.xlu0 %803
    %v805 = vsel %vm741, %v730, -inf
    %806 = vmax.xlane.f32.xlu0 %v805
    %v807 = vpop.xlane.xlu0 %806
    %v808 = vsel %vm741, %v620, -inf
    %809 = vmax.xlane.f32.xlu0 %v808
    %v810 = vpop.xlane.xlu0 %809
    %v811 = vsel %vm741, %v732, -inf
    %812 = vmax.xlane.f32.xlu0 %v811
    %v813 = vpop.xlane.xlu0 %812
    %v814 = vsel %vm741, %v622, -inf
    %815 = vmax.xlane.f32.xlu0 %v814
    %v816 = vpop.xlane.xlu0 %815
    %v817 = vsel %vm741, %v734, -inf
    %818 = vmax.xlane.f32.xlu0 %v817
    %v819 = vpop.xlane.xlu0 %818
    %v820 = vsel %vm741, %v624, -inf
    %821 = vmax.xlane.f32.xlu0 %v820
    %v822 = vpop.xlane.xlu0 %821
    %v823 = vsel %vm741, %v736, -inf
    %824 = vmax.xlane.f32.xlu0 %v823
    %v825 = vpop.xlane.xlu0 %824
    %v826 = vsel %vm741, %v626, -inf
    %827 = vmax.xlane.f32.xlu0 %v826
    %v828 = vpop.xlane.xlu0 %827
    %v829 = vsel %vm741, %v738, -inf
    %830 = vmax.xlane.f32.xlu0 %v829
    %v831 = vpop.xlane.xlu0 %830
    %v832 = vsel %vm741, %v628, -inf
    %833 = vmax.xlane.f32.xlu0 %v832
    %v834 = vpop.xlane.xlu0 %833
    %v835 = vsel %vm741, %v740, -inf
    %836 = vmax.xlane.f32.xlu0 %v835
    %v837 = vpop.xlane.xlu0 %836
    %840 = vrot.lane.b32.xlu0 %v196, 82
    %v841 = vpop.permute.xlu0 %840
    %842 = vrot.lane.b32.xlu0 %v197, 82
    %v843 = vpop.permute.xlu0 %842
    %v846 = vsel %vm143, %v841, -inf
    %v847 = vsel %vm143, %v843, -inf
    %850 = vrot.lane.b32.xlu0 %v846, 125
    %v851 = vpop.permute.xlu0 %850
    %852 = vrot.lane.b32.xlu0 %v847, 125
    %v853 = vpop.permute.xlu0 %852
    %856 = vrot.lane.b32.xlu0 %v846, 122
    %v857 = vpop.permute.xlu0 %856
    %858 = vrot.lane.b32.xlu0 %v847, 122
    %v859 = vpop.permute.xlu0 %858
    %862 = vrot.lane.b32.xlu0 %v846, 119
    %v863 = vpop.permute.xlu0 %862
    %864 = vrot.lane.b32.xlu0 %v847, 119
    %v865 = vpop.permute.xlu0 %864
    %868 = vrot.lane.b32.xlu0 %v846, 116
    %v869 = vpop.permute.xlu0 %868
    %870 = vrot.lane.b32.xlu0 %v847, 116
    %v871 = vpop.permute.xlu0 %870
    %874 = vrot.lane.b32.xlu0 %v846, 113
    %v875 = vpop.permute.xlu0 %874
    %876 = vrot.lane.b32.xlu0 %v847, 113
    %v877 = vpop.permute.xlu0 %876
    %880 = vrot.lane.b32.xlu0 %v846, 110
    %v881 = vpop.permute.xlu0 %880
    %882 = vrot.lane.b32.xlu0 %v847, 110
    %v883 = vpop.permute.xlu0 %882
    %886 = vrot.lane.b32.xlu0 %v846, 107
    %v887 = vpop.permute.xlu0 %886
    %888 = vrot.lane.b32.xlu0 %v847, 107
    %v889 = vpop.permute.xlu0 %888
    %892 = vrot.lane.b32.xlu0 %v846, 104
    %v893 = vpop.permute.xlu0 %892
    %894 = vrot.lane.b32.xlu0 %v847, 104
    %v895 = vpop.permute.xlu0 %894
    %898 = vrot.lane.b32.xlu0 %v846, 101
    %v899 = vpop.permute.xlu0 %898
    %900 = vrot.lane.b32.xlu0 %v847, 101
    %v901 = vpop.permute.xlu0 %900
    %904 = vrot.lane.b32.xlu0 %v846, 98
    %v905 = vpop.permute.xlu0 %904
    %906 = vrot.lane.b32.xlu0 %v847, 98
    %v907 = vpop.permute.xlu0 %906
    %910 = vrot.lane.b32.xlu0 %v846, 95
    %v911 = vpop.permute.xlu0 %910
    %912 = vrot.lane.b32.xlu0 %v847, 95
    %v913 = vpop.permute.xlu0 %912
    %916 = vrot.lane.b32.xlu0 %v846, 92
    %v917 = vpop.permute.xlu0 %916
    %918 = vrot.lane.b32.xlu0 %v847, 92
    %v919 = vpop.permute.xlu0 %918
    %922 = vrot.lane.b32.xlu0 %v846, 89
    %v923 = vpop.permute.xlu0 %922
    %924 = vrot.lane.b32.xlu0 %v847, 89
    %v925 = vpop.permute.xlu0 %924
    %928 = vrot.lane.b32.xlu0 %v846, 86
    %v929 = vpop.permute.xlu0 %928
    %930 = vrot.lane.b32.xlu0 %v847, 86
    %v931 = vpop.permute.xlu0 %930
    %934 = vrot.lane.b32.xlu0 %v846, 83
    %v935 = vpop.permute.xlu0 %934
    %936 = vrot.lane.b32.xlu0 %v847, 83
    %v937 = vpop.permute.xlu0 %936
    %v940 = vrot.slane %v857, 4
    %v941 = vsel %vm293, %v940, %v846
    %v942 = vrot.slane %v846, 4
    %v943 = vsel %vm293, %v857, %v942
    %v945 = vunpack.c.l.s4 1983009808
    %v946 = vunpack.c.0.s8 %v945
    %v947 = vperm.slane %v941, %v946
    %v949 = vunpack.c.l.s4 1983009808
    %v950 = vunpack.c.0.s8 %v949
    %v951 = vperm.slane %v943, %v950
    %v952 = vrot.slane %v863, 4
    %v953 = vsel %vm293, %v952, %v851
    %v954 = vrot.slane %v851, 4
    %v955 = vsel %vm293, %v863, %v954
    %v957 = vunpack.c.l.s4 1983009808
    %v958 = vunpack.c.0.s8 %v957
    %v959 = vperm.slane %v953, %v958
    %v961 = vunpack.c.l.s4 1983009808
    %v962 = vunpack.c.0.s8 %v961
    %v963 = vperm.slane %v955, %v962
    %v964 = vrot.slane %v881, 4
    %v965 = vsel %vm293, %v964, %v869
    %v966 = vrot.slane %v869, 4
    %v967 = vsel %vm293, %v881, %v966
    %v969 = vunpack.c.l.s4 1983009808
    %v970 = vunpack.c.0.s8 %v969
    %v971 = vperm.slane %v965, %v970
    %v973 = vunpack.c.l.s4 1983009808
    %v974 = vunpack.c.0.s8 %v973
    %v975 = vperm.slane %v967, %v974
    %v976 = vrot.slane %v887, 4
    %v977 = vsel %vm293, %v976, %v875
    %v978 = vrot.slane %v875, 4
    %v979 = vsel %vm293, %v887, %v978
    %v981 = vunpack.c.l.s4 1983009808
    %v982 = vunpack.c.0.s8 %v981
    %v983 = vperm.slane %v977, %v982
    %v985 = vunpack.c.l.s4 1983009808
    %v986 = vunpack.c.0.s8 %v985
    %v987 = vperm.slane %v979, %v986
    %v988 = vrot.slane %v959, 4
    %v989 = vsel %vm293, %v988, %v947
    %v990 = vrot.slane %v947, 4
    %v991 = vsel %vm293, %v959, %v990
    %v993 = vunpack.c.l.s4 1934713408
    %v994 = vunpack.c.0.s8 %v993
    %v995 = vperm.slane %v989, %v994
    %v997 = vunpack.c.l.s4 1934713408
    %v998 = vunpack.c.0.s8 %v997
    %v999 = vperm.slane %v991, %v998
    %v1000 = vrot.slane %v963, 4
    %v1001 = vsel %vm293, %v1000, %v951
    %v1002 = vrot.slane %v951, 4
    %v1003 = vsel %vm293, %v963, %v1002
    %v1005 = vunpack.c.l.s4 1934713408
    %v1006 = vunpack.c.0.s8 %v1005
    %v1007 = vperm.slane %v1001, %v1006
    %v1009 = vunpack.c.l.s4 1934713408
    %v1010 = vunpack.c.0.s8 %v1009
    %v1011 = vperm.slane %v1003, %v1010
    %v1012 = vrot.slane %v983, 4
    %v1013 = vsel %vm293, %v1012, %v971
    %v1014 = vrot.slane %v971, 4
    %v1015 = vsel %vm293, %v983, %v1014
    %v1017 = vunpack.c.l.s4 1934713408
    %v1018 = vunpack.c.0.s8 %v1017
    %v1019 = vperm.slane %v1013, %v1018
    %v1021 = vunpack.c.l.s4 1934713408
    %v1022 = vunpack.c.0.s8 %v1021
    %v1023 = vperm.slane %v1015, %v1022
    %v1024 = vrot.slane %v987, 4
    %v1025 = vsel %vm293, %v1024, %v975
    %v1026 = vrot.slane %v975, 4
    %v1027 = vsel %vm293, %v987, %v1026
    %v1029 = vunpack.c.l.s4 1934713408
    %v1030 = vunpack.c.0.s8 %v1029
    %v1031 = vperm.slane %v1025, %v1030
    %v1033 = vunpack.c.l.s4 1934713408
    %v1034 = vunpack.c.0.s8 %v1033
    %v1035 = vperm.slane %v1027, %v1034
    %v1036 = vrot.slane %v1019, 4
    %v1037 = vsel %vm293, %v1036, %v995
    %v1038 = vrot.slane %v995, 4
    %v1039 = vsel %vm293, %v1019, %v1038
    %v1040 = vrot.slane %v1023, 4
    %v1041 = vsel %vm293, %v1040, %v999
    %v1042 = vrot.slane %v999, 4
    %v1043 = vsel %vm293, %v1023, %v1042
    %v1044 = vrot.slane %v1031, 4
    %v1045 = vsel %vm293, %v1044, %v1007
    %v1046 = vrot.slane %v1007, 4
    %v1047 = vsel %vm293, %v1031, %v1046
    %v1048 = vrot.slane %v1035, 4
    %v1049 = vsel %vm293, %v1048, %v1011
    %v1050 = vrot.slane %v1011, 4
    %v1051 = vsel %vm293, %v1035, %v1050
    %v1052 = vrot.slane %v905, 4
    %v1053 = vsel %vm293, %v1052, %v893
    %v1054 = vrot.slane %v893, 4
    %v1055 = vsel %vm293, %v905, %v1054
    %v1057 = vunpack.c.l.s4 1983009808
    %v1058 = vunpack.c.0.s8 %v1057
    %v1059 = vperm.slane %v1053, %v1058
    %v1061 = vunpack.c.l.s4 1983009808
    %v1062 = vunpack.c.0.s8 %v1061
    %v1063 = vperm.slane %v1055, %v1062
    %v1064 = vrot.slane %v911, 4
    %v1065 = vsel %vm293, %v1064, %v899
    %v1066 = vrot.slane %v899, 4
    %v1067 = vsel %vm293, %v911, %v1066
    %v1069 = vunpack.c.l.s4 1983009808
    %v1070 = vunpack.c.0.s8 %v1069
    %v1071 = vperm.slane %v1065, %v1070
    %v1073 = vunpack.c.l.s4 1983009808
    %v1074 = vunpack.c.0.s8 %v1073
    %v1075 = vperm.slane %v1067, %v1074
    %v1076 = vrot.slane %v929, 4
    %v1077 = vsel %vm293, %v1076, %v917
    %v1078 = vrot.slane %v917, 4
    %v1079 = vsel %vm293, %v929, %v1078
    %v1081 = vunpack.c.l.s4 1983009808
    %v1082 = vunpack.c.0.s8 %v1081
    %v1083 = vperm.slane %v1077, %v1082
    %v1085 = vunpack.c.l.s4 1983009808
    %v1086 = vunpack.c.0.s8 %v1085
    %v1087 = vperm.slane %v1079, %v1086
    %v1088 = vrot.slane %v935, 4
    %v1089 = vsel %vm293, %v1088, %v923
    %v1090 = vrot.slane %v923, 4
    %v1091 = vsel %vm293, %v935, %v1090
    %v1093 = vunpack.c.l.s4 1983009808
    %v1094 = vunpack.c.0.s8 %v1093
    %v1095 = vperm.slane %v1089, %v1094
    %v1097 = vunpack.c.l.s4 1983009808
    %v1098 = vunpack.c.0.s8 %v1097
    %v1099 = vperm.slane %v1091, %v1098
    %v1100 = vrot.slane %v1071, 4
    %v1101 = vsel %vm293, %v1100, %v1059
    %v1102 = vrot.slane %v1059, 4
    %v1103 = vsel %vm293, %v1071, %v1102
    %v1105 = vunpack.c.l.s4 1934713408
    %v1106 = vunpack.c.0.s8 %v1105
    %v1107 = vperm.slane %v1101, %v1106
    %v1109 = vunpack.c.l.s4 1934713408
    %v1110 = vunpack.c.0.s8 %v1109
    %v1111 = vperm.slane %v1103, %v1110
    %v1112 = vrot.slane %v1075, 4
    %v1113 = vsel %vm293, %v1112, %v1063
    %v1114 = vrot.slane %v1063, 4
    %v1115 = vsel %vm293, %v1075, %v1114
    %v1117 = vunpack.c.l.s4 1934713408
    %v1118 = vunpack.c.0.s8 %v1117
    %v1119 = vperm.slane %v1113, %v1118
    %v1121 = vunpack.c.l.s4 1934713408
    %v1122 = vunpack.c.0.s8 %v1121
    %v1123 = vperm.slane %v1115, %v1122
    %v1124 = vrot.slane %v1095, 4
    %v1125 = vsel %vm293, %v1124, %v1083
    %v1126 = vrot.slane %v1083, 4
    %v1127 = vsel %vm293, %v1095, %v1126
    %v1129 = vunpack.c.l.s4 1934713408
    %v1130 = vunpack.c.0.s8 %v1129
    %v1131 = vperm.slane %v1125, %v1130
    %v1133 = vunpack.c.l.s4 1934713408
    %v1134 = vunpack.c.0.s8 %v1133
    %v1135 = vperm.slane %v1127, %v1134
    %v1136 = vrot.slane %v1099, 4
    %v1137 = vsel %vm293, %v1136, %v1087
    %v1138 = vrot.slane %v1087, 4
    %v1139 = vsel %vm293, %v1099, %v1138
    %v1141 = vunpack.c.l.s4 1934713408
    %v1142 = vunpack.c.0.s8 %v1141
    %v1143 = vperm.slane %v1137, %v1142
    %v1145 = vunpack.c.l.s4 1934713408
    %v1146 = vunpack.c.0.s8 %v1145
    %v1147 = vperm.slane %v1139, %v1146
    %v1148 = vrot.slane %v1131, 4
    %v1149 = vsel %vm293, %v1148, %v1107
    %v1150 = vrot.slane %v1107, 4
    %v1151 = vsel %vm293, %v1131, %v1150
    %v1152 = vrot.slane %v1135, 4
    %v1153 = vsel %vm293, %v1152, %v1111
    %v1154 = vrot.slane %v1111, 4
    %v1155 = vsel %vm293, %v1135, %v1154
    %v1156 = vrot.slane %v1143, 4
    %v1157 = vsel %vm293, %v1156, %v1119
    %v1158 = vrot.slane %v1119, 4
    %v1159 = vsel %vm293, %v1143, %v1158
    %v1160 = vrot.slane %v1147, 4
    %v1161 = vsel %vm293, %v1160, %v1123
    %v1162 = vrot.slane %v1123, 4
    %v1163 = vsel %vm293, %v1147, %v1162
    %v1164 = vrot.slane %v859, 4
    %v1165 = vsel %vm293, %v1164, %v847
    %v1166 = vrot.slane %v847, 4
    %v1167 = vsel %vm293, %v859, %v1166
    %v1169 = vunpack.c.l.s4 1983009808
    %v1170 = vunpack.c.0.s8 %v1169
    %v1171 = vperm.slane %v1165, %v1170
    %v1173 = vunpack.c.l.s4 1983009808
    %v1174 = vunpack.c.0.s8 %v1173
    %v1175 = vperm.slane %v1167, %v1174
    %v1176 = vrot.slane %v865, 4
    %v1177 = vsel %vm293, %v1176, %v853
    %v1178 = vrot.slane %v853, 4
    %v1179 = vsel %vm293, %v865, %v1178
    %v1181 = vunpack.c.l.s4 1983009808
    %v1182 = vunpack.c.0.s8 %v1181
    %v1183 = vperm.slane %v1177, %v1182
    %v1185 = vunpack.c.l.s4 1983009808
    %v1186 = vunpack.c.0.s8 %v1185
    %v1187 = vperm.slane %v1179, %v1186
    %v1188 = vrot.slane %v883, 4
    %v1189 = vsel %vm293, %v1188, %v871
    %v1190 = vrot.slane %v871, 4
    %v1191 = vsel %vm293, %v883, %v1190
    %v1193 = vunpack.c.l.s4 1983009808
    %v1194 = vunpack.c.0.s8 %v1193
    %v1195 = vperm.slane %v1189, %v1194
    %v1197 = vunpack.c.l.s4 1983009808
    %v1198 = vunpack.c.0.s8 %v1197
    %v1199 = vperm.slane %v1191, %v1198
    %v1200 = vrot.slane %v889, 4
    %v1201 = vsel %vm293, %v1200, %v877
    %v1202 = vrot.slane %v877, 4
    %v1203 = vsel %vm293, %v889, %v1202
    %v1205 = vunpack.c.l.s4 1983009808
    %v1206 = vunpack.c.0.s8 %v1205
    %v1207 = vperm.slane %v1201, %v1206
    %v1209 = vunpack.c.l.s4 1983009808
    %v1210 = vunpack.c.0.s8 %v1209
    %v1211 = vperm.slane %v1203, %v1210
    %v1212 = vrot.slane %v1183, 4
    %v1213 = vsel %vm293, %v1212, %v1171
    %v1214 = vrot.slane %v1171, 4
    %v1215 = vsel %vm293, %v1183, %v1214
    %v1217 = vunpack.c.l.s4 1934713408
    %v1218 = vunpack.c.0.s8 %v1217
    %v1219 = vperm.slane %v1213, %v1218
    %v1221 = vunpack.c.l.s4 1934713408
    %v1222 = vunpack.c.0.s8 %v1221
    %v1223 = vperm.slane %v1215, %v1222
    %v1224 = vrot.slane %v1187, 4
    %v1225 = vsel %vm293, %v1224, %v1175
    %v1226 = vrot.slane %v1175, 4
    %v1227 = vsel %vm293, %v1187, %v1226
    %v1229 = vunpack.c.l.s4 1934713408
    %v1230 = vunpack.c.0.s8 %v1229
    %v1231 = vperm.slane %v1225, %v1230
    %v1233 = vunpack.c.l.s4 1934713408
    %v1234 = vunpack.c.0.s8 %v1233
    %v1235 = vperm.slane %v1227, %v1234
    %v1236 = vrot.slane %v1207, 4
    %v1237 = vsel %vm293, %v1236, %v1195
    %v1238 = vrot.slane %v1195, 4
    %v1239 = vsel %vm293, %v1207, %v1238
    %v1241 = vunpack.c.l.s4 1934713408
    %v1242 = vunpack.c.0.s8 %v1241
    %v1243 = vperm.slane %v1237, %v1242
    %v1245 = vunpack.c.l.s4 1934713408
    %v1246 = vunpack.c.0.s8 %v1245
    %v1247 = vperm.slane %v1239, %v1246
    %v1248 = vrot.slane %v1211, 4
    %v1249 = vsel %vm293, %v1248, %v1199
    %v1250 = vrot.slane %v1199, 4
    %v1251 = vsel %vm293, %v1211, %v1250
    %v1253 = vunpack.c.l.s4 1934713408
    %v1254 = vunpack.c.0.s8 %v1253
    %v1255 = vperm.slane %v1249, %v1254
    %v1257 = vunpack.c.l.s4 1934713408
    %v1258 = vunpack.c.0.s8 %v1257
    %v1259 = vperm.slane %v1251, %v1258
    %v1260 = vrot.slane %v1243, 4
    %v1261 = vsel %vm293, %v1260, %v1219
    %v1262 = vrot.slane %v1219, 4
    %v1263 = vsel %vm293, %v1243, %v1262
    %v1264 = vrot.slane %v1247, 4
    %v1265 = vsel %vm293, %v1264, %v1223
    %v1266 = vrot.slane %v1223, 4
    %v1267 = vsel %vm293, %v1247, %v1266
    %v1268 = vrot.slane %v1255, 4
    %v1269 = vsel %vm293, %v1268, %v1231
    %v1270 = vrot.slane %v1231, 4
    %v1271 = vsel %vm293, %v1255, %v1270
    %v1272 = vrot.slane %v1259, 4
    %v1273 = vsel %vm293, %v1272, %v1235
    %v1274 = vrot.slane %v1235, 4
    %v1275 = vsel %vm293, %v1259, %v1274
    %v1276 = vrot.slane %v907, 4
    %v1277 = vsel %vm293, %v1276, %v895
    %v1278 = vrot.slane %v895, 4
    %v1279 = vsel %vm293, %v907, %v1278
    %v1281 = vunpack.c.l.s4 1983009808
    %v1282 = vunpack.c.0.s8 %v1281
    %v1283 = vperm.slane %v1277, %v1282
    %v1285 = vunpack.c.l.s4 1983009808
    %v1286 = vunpack.c.0.s8 %v1285
    %v1287 = vperm.slane %v1279, %v1286
    %v1288 = vrot.slane %v913, 4
    %v1289 = vsel %vm293, %v1288, %v901
    %v1290 = vrot.slane %v901, 4
    %v1291 = vsel %vm293, %v913, %v1290
    %v1293 = vunpack.c.l.s4 1983009808
    %v1294 = vunpack.c.0.s8 %v1293
    %v1295 = vperm.slane %v1289, %v1294
    %v1297 = vunpack.c.l.s4 1983009808
    %v1298 = vunpack.c.0.s8 %v1297
    %v1299 = vperm.slane %v1291, %v1298
    %v1300 = vrot.slane %v931, 4
    %v1301 = vsel %vm293, %v1300, %v919
    %v1302 = vrot.slane %v919, 4
    %v1303 = vsel %vm293, %v931, %v1302
    %v1305 = vunpack.c.l.s4 1983009808
    %v1306 = vunpack.c.0.s8 %v1305
    %v1307 = vperm.slane %v1301, %v1306
    %v1309 = vunpack.c.l.s4 1983009808
    %v1310 = vunpack.c.0.s8 %v1309
    %v1311 = vperm.slane %v1303, %v1310
    %v1312 = vrot.slane %v937, 4
    %v1313 = vsel %vm293, %v1312, %v925
    %v1314 = vrot.slane %v925, 4
    %v1315 = vsel %vm293, %v937, %v1314
    %v1317 = vunpack.c.l.s4 1983009808
    %v1318 = vunpack.c.0.s8 %v1317
    %v1319 = vperm.slane %v1313, %v1318
    %v1321 = vunpack.c.l.s4 1983009808
    %v1322 = vunpack.c.0.s8 %v1321
    %v1323 = vperm.slane %v1315, %v1322
    %v1324 = vrot.slane %v1295, 4
    %v1325 = vsel %vm293, %v1324, %v1283
    %v1326 = vrot.slane %v1283, 4
    %v1327 = vsel %vm293, %v1295, %v1326
    %v1329 = vunpack.c.l.s4 1934713408
    %v1330 = vunpack.c.0.s8 %v1329
    %v1331 = vperm.slane %v1325, %v1330
    %v1333 = vunpack.c.l.s4 1934713408
    %v1334 = vunpack.c.0.s8 %v1333
    %v1335 = vperm.slane %v1327, %v1334
    %v1336 = vrot.slane %v1299, 4
    %v1337 = vsel %vm293, %v1336, %v1287
    %v1338 = vrot.slane %v1287, 4
    %v1339 = vsel %vm293, %v1299, %v1338
    %v1341 = vunpack.c.l.s4 1934713408
    %v1342 = vunpack.c.0.s8 %v1341
    %v1343 = vperm.slane %v1337, %v1342
    %v1345 = vunpack.c.l.s4 1934713408
    %v1346 = vunpack.c.0.s8 %v1345
    %v1347 = vperm.slane %v1339, %v1346
    %v1348 = vrot.slane %v1319, 4
    %v1349 = vsel %vm293, %v1348, %v1307
    %v1350 = vrot.slane %v1307, 4
    %v1351 = vsel %vm293, %v1319, %v1350
    %v1353 = vunpack.c.l.s4 1934713408
    %v1354 = vunpack.c.0.s8 %v1353
    %v1355 = vperm.slane %v1349, %v1354
    %v1357 = vunpack.c.l.s4 1934713408
    %v1358 = vunpack.c.0.s8 %v1357
    %v1359 = vperm.slane %v1351, %v1358
    %v1360 = vrot.slane %v1323, 4
    %v1361 = vsel %vm293, %v1360, %v1311
    %v1362 = vrot.slane %v1311, 4
    %v1363 = vsel %vm293, %v1323, %v1362
    %v1365 = vunpack.c.l.s4 1934713408
    %v1366 = vunpack.c.0.s8 %v1365
    %v1367 = vperm.slane %v1361, %v1366
    %v1369 = vunpack.c.l.s4 1934713408
    %v1370 = vunpack.c.0.s8 %v1369
    %v1371 = vperm.slane %v1363, %v1370
    %v1372 = vrot.slane %v1355, 4
    %v1373 = vsel %vm293, %v1372, %v1331
    %v1374 = vrot.slane %v1331, 4
    %v1375 = vsel %vm293, %v1355, %v1374
    %v1376 = vrot.slane %v1359, 4
    %v1377 = vsel %vm293, %v1376, %v1335
    %v1378 = vrot.slane %v1335, 4
    %v1379 = vsel %vm293, %v1359, %v1378
    %v1380 = vrot.slane %v1367, 4
    %v1381 = vsel %vm293, %v1380, %v1343
    %v1382 = vrot.slane %v1343, 4
    %v1383 = vsel %vm293, %v1367, %v1382
    %v1384 = vrot.slane %v1371, 4
    %v1385 = vsel %vm293, %v1384, %v1347
    %v1386 = vrot.slane %v1347, 4
    %v1387 = vsel %vm293, %v1371, %v1386
    %v1388 = vsel %vm741, %v1037, -inf
    %1389 = vmax.xlane.f32.xlu0 %v1388
    %v1390 = vpop.xlane.xlu0 %1389
    %v1391 = vsel %vm741, %v1149, -inf
    %1392 = vmax.xlane.f32.xlu0 %v1391
    %v1393 = vpop.xlane.xlu0 %1392
    %v1394 = vsel %vm741, %v1039, -inf
    %1395 = vmax.xlane.f32.xlu0 %v1394
    %v1396 = vpop.xlane.xlu0 %1395
    %v1397 = vsel %vm741, %v1151, -inf
    %1398 = vmax.xlane.f32.xlu0 %v1397
    %v1399 = vpop.xlane.xlu0 %1398
    %v1400 = vsel %vm741, %v1041, -inf
    %1401 = vmax.xlane.f32.xlu0 %v1400
    %v1402 = vpop.xlane.xlu0 %1401
    %v1403 = vsel %vm741, %v1153, -inf
    %1404 = vmax.xlane.f32.xlu0 %v1403
    %v1405 = vpop.xlane.xlu0 %1404
    %v1406 = vsel %vm741, %v1043, -inf
    %1407 = vmax.xlane.f32.xlu0 %v1406
    %v1408 = vpop.xlane.xlu0 %1407
    %v1409 = vsel %vm741, %v1155, -inf
    %1410 = vmax.xlane.f32.xlu0 %v1409
    %v1411 = vpop.xlane.xlu0 %1410
    %v1412 = vsel %vm741, %v1045, -inf
    %1413 = vmax.xlane.f32.xlu0 %v1412
    %v1414 = vpop.xlane.xlu0 %1413
    %v1415 = vsel %vm741, %v1157, -inf
    %1416 = vmax.xlane.f32.xlu0 %v1415
    %v1417 = vpop.xlane.xlu0 %1416
    %v1418 = vsel %vm741, %v1047, -inf
    %1419 = vmax.xlane.f32.xlu0 %v1418
    %v1420 = vpop.xlane.xlu0 %1419
    %v1421 = vsel %vm741, %v1159, -inf
    %1422 = vmax.xlane.f32.xlu0 %v1421
    %v1423 = vpop.xlane.xlu0 %1422
    %v1424 = vsel %vm741, %v1049, -inf
    %1425 = vmax.xlane.f32.xlu0 %v1424
    %v1426 = vpop.xlane.xlu0 %1425
    %v1427 = vsel %vm741, %v1161, -inf
    %1428 = vmax.xlane.f32.xlu0 %v1427
    %v1429 = vpop.xlane.xlu0 %1428
    %v1430 = vsel %vm741, %v1051, -inf
    %1431 = vmax.xlane.f32.xlu0 %v1430
    %v1432 = vpop.xlane.xlu0 %1431
    %v1433 = vsel %vm741, %v1163, -inf
    %1434 = vmax.xlane.f32.xlu0 %v1433
    %v1435 = vpop.xlane.xlu0 %1434
    %v1436 = vsel %vm741, %v1261, -inf
    %1437 = vmax.xlane.f32.xlu0 %v1436
    %v1438 = vpop.xlane.xlu0 %1437
    %v1439 = vsel %vm741, %v1373, -inf
    %1440 = vmax.xlane.f32.xlu0 %v1439
    %v1441 = vpop.xlane.xlu0 %1440
    %v1442 = vsel %vm741, %v1263, -inf
    %1443 = vmax.xlane.f32.xlu0 %v1442
    %v1444 = vpop.xlane.xlu0 %1443
    %v1445 = vsel %vm741, %v1375, -inf
    %1446 = vmax.xlane.f32.xlu0 %v1445
    %v1447 = vpop.xlane.xlu0 %1446
    %v1448 = vsel %vm741, %v1265, -inf
    %1449 = vmax.xlane.f32.xlu0 %v1448
    %v1450 = vpop.xlane.xlu0 %1449
    %v1451 = vsel %vm741, %v1377, -inf
    %1452 = vmax.xlane.f32.xlu0 %v1451
    %v1453 = vpop.xlane.xlu0 %1452
    %v1454 = vsel %vm741, %v1267, -inf
    %1455 = vmax.xlane.f32.xlu0 %v1454
    %v1456 = vpop.xlane.xlu0 %1455
    %v1457 = vsel %vm741, %v1379, -inf
    %1458 = vmax.xlane.f32.xlu0 %v1457
    %v1459 = vpop.xlane.xlu0 %1458
    %v1460 = vsel %vm741, %v1269, -inf
    %1461 = vmax.xlane.f32.xlu0 %v1460
    %v1462 = vpop.xlane.xlu0 %1461
    %v1463 = vsel %vm741, %v1381, -inf
    %1464 = vmax.xlane.f32.xlu0 %v1463
    %v1465 = vpop.xlane.xlu0 %1464
    %v1466 = vsel %vm741, %v1271, -inf
    %1467 = vmax.xlane.f32.xlu0 %v1466
    %v1468 = vpop.xlane.xlu0 %1467
    %v1469 = vsel %vm741, %v1383, -inf
    %1470 = vmax.xlane.f32.xlu0 %v1469
    %v1471 = vpop.xlane.xlu0 %1470
    %v1472 = vsel %vm741, %v1273, -inf
    %1473 = vmax.xlane.f32.xlu0 %v1472
    %v1474 = vpop.xlane.xlu0 %1473
    %v1475 = vsel %vm741, %v1385, -inf
    %1476 = vmax.xlane.f32.xlu0 %v1475
    %v1477 = vpop.xlane.xlu0 %1476
    %v1478 = vsel %vm741, %v1275, -inf
    %1479 = vmax.xlane.f32.xlu0 %v1478
    %v1480 = vpop.xlane.xlu0 %1479
    %v1481 = vsel %vm741, %v1387, -inf
    %1482 = vmax.xlane.f32.xlu0 %v1481
    %v1483 = vpop.xlane.xlu0 %1482
    %v1484 = vld [vmem:[%s3] sm:$0xff]
    %v1485 = vld [vmem:[%s3 + $0x8] sm:$0xff]
    %v1486 = vld [vmem:[%s4] sm:$0xff]
    %v1487 = vld [vmem:[%s4 + $0x8] sm:$0xff]
    %1488 = vrot.lane.b32.xlu0 %v83, 125
    %v1489 = vpop.permute.xlu0 %1488
    %1490 = vrot.lane.b32.xlu0 %v84, 125
    %v1491 = vpop.permute.xlu0 %1490
    %1492 = vrot.lane.b32.xlu0 %v85, 125
    %v1493 = vpop.permute.xlu0 %1492
    %1494 = vrot.lane.b32.xlu0 %v86, 125
    %v1495 = vpop.permute.xlu0 %1494
    %1500 = vrot.lane.b32.xlu0 %v96, 125
    %v1501 = vpop.permute.xlu0 %1500
    %1502 = vrot.lane.b32.xlu0 %v98, 125
    %v1503 = vpop.permute.xlu0 %1502
    %1504 = vrot.lane.b32.xlu0 %v100, 125
    %v1505 = vpop.permute.xlu0 %1504
    %1506 = vrot.lane.b32.xlu0 %v102, 125
    %v1507 = vpop.permute.xlu0 %1506
    %1508 = vrot.lane.b32.xlu0 %v108, 125
    %v1509 = vpop.permute.xlu0 %1508
    %1510 = vrot.lane.b32.xlu0 %v110, 125
    %v1511 = vpop.permute.xlu0 %1510
    %1512 = vrot.lane.b32.xlu0 %v112, 125
    %v1513 = vpop.permute.xlu0 %1512
    %1514 = vrot.lane.b32.xlu0 %v114, 125
    %v1515 = vpop.permute.xlu0 %1514
    %1516 = vrot.lane.b32.xlu0 %v1489, 125
    %v1517 = vpop.permute.xlu0 %1516
    %1518 = vrot.lane.b32.xlu0 %v1491, 125
    %v1519 = vpop.permute.xlu0 %1518
    %1520 = vrot.lane.b32.xlu0 %v1493, 125
    %v1521 = vpop.permute.xlu0 %1520
    %1522 = vrot.lane.b32.xlu0 %v1495, 125
    %v1523 = vpop.permute.xlu0 %1522
    %vm1536 = vcmask 367616
    %v1537 = vsel %vm1536, %v83, %v1489
    %v1538 = vsel %vm1536, %v84, %v1491
    %v1539 = vsel %vm1536, %v85, %v1493
    %v1540 = vsel %vm1536, %v86, %v1495
    %v1541 = vsel %vm1536, %v96, %v1501
    %v1542 = vsel %vm1536, %v98, %v1503
    %v1543 = vsel %vm1536, %v100, %v1505
    %v1544 = vsel %vm1536, %v102, %v1507
    %v1545 = vsel %vm1536, %v108, %v1509
    %v1546 = vsel %vm1536, %v110, %v1511
    %v1547 = vsel %vm1536, %v112, %v1513
    %v1548 = vsel %vm1536, %v114, %v1515
    %v1549 = vsel %vm1536, %v1489, %v1517
    %v1550 = vsel %vm1536, %v1491, %v1519
    %v1551 = vsel %vm1536, %v1493, %v1521
    %v1552 = vsel %vm1536, %v1495, %v1523
    %1554 = vset.pattern.permute.xlu0 0
    %1555 = vperm.xlu0 %1554, %v1486
    %v1556 = vpop.permute.xlu0 %1555
    %1559 = vset.pattern.permute.xlu0 0
    %1560 = vperm.xlu0 %1559, %v1487
    %v1561 = vpop.permute.xlu0 %1560
    %1563 = vmatpush.msra.mxu0 %v1552
    %1564 = vmatpush.msra.mxu0 %v1551
    %1565 = vmatpush.msra.mxu0 %v1550
    %1566 = vmatpush.msra.mxu0 %v1549
    %1567 = vmatpush.msra.mxu0 %v1548
    %1568 = vmatpush.msra.mxu0 %v1547
    %1569 = vmatpush.msra.mxu0 %v1546
    %1570 = vmatpush.msra.mxu0 %v1545
    %1571 = vmatpush.msra.mxu0 %v1544
    %1572 = vmatpush.msra.mxu0 %v1543
    %1573 = vmatpush.msra.mxu0 %v1542
    %1574 = vmatpush.msra.mxu0 %v1541
    %1575 = vmatpush.msra.mxu0 %v1540
    %1576 = vmatpush.msra.mxu0 %v1539
    %1577 = vmatpush.msra.mxu0 %v1538
    %1578 = vmatpush.msra.mxu0 %v1537
    %1579 = vmatmul.f32.gmra.mxu0 %v1484
    %v1580 = vpop.f32.mrf.mxu0
    %v1581 = vadd.f32 %v1556, %v1580
    %1582 = vmatmul.f32.gmra.mxu0 %v1485
    %v1583 = vpop.f32.mrf.mxu0
    %v1584 = vadd.f32 %v1561, %v1583
    %1585 = vdwg.mxu0
    %v1586 = vmax.f32 %v1581, 0.0
    %v1587 = vmax.f32 %v1584, 0.0
    %1590 = vrot.lane.b32.xlu0 %v1586, 125
    %v1591 = vpop.permute.xlu0 %1590
    %1592 = vrot.lane.b32.xlu0 %v1587, 125
    %v1593 = vpop.permute.xlu0 %1592
    %1596 = vrot.lane.b32.xlu0 %v1586, 122
    %v1597 = vpop.permute.xlu0 %1596
    %1598 = vrot.lane.b32.xlu0 %v1587, 122
    %v1599 = vpop.permute.xlu0 %1598
    %1602 = vrot.lane.b32.xlu0 %v1586, 119
    %v1603 = vpop.permute.xlu0 %1602
    %1604 = vrot.lane.b32.xlu0 %v1587, 119
    %v1605 = vpop.permute.xlu0 %1604
    %1608 = vrot.lane.b32.xlu0 %v1586, 116
    %v1609 = vpop.permute.xlu0 %1608
    %1610 = vrot.lane.b32.xlu0 %v1587, 116
    %v1611 = vpop.permute.xlu0 %1610
    %1614 = vrot.lane.b32.xlu0 %v1586, 113
    %v1615 = vpop.permute.xlu0 %1614
    %1616 = vrot.lane.b32.xlu0 %v1587, 113
    %v1617 = vpop.permute.xlu0 %1616
    %1620 = vrot.lane.b32.xlu0 %v1586, 110
    %v1621 = vpop.permute.xlu0 %1620
    %1622 = vrot.lane.b32.xlu0 %v1587, 110
    %v1623 = vpop.permute.xlu0 %1622
    %1626 = vrot.lane.b32.xlu0 %v1586, 107
    %v1627 = vpop.permute.xlu0 %1626
    %1628 = vrot.lane.b32.xlu0 %v1587, 107
    %v1629 = vpop.permute.xlu0 %1628
    %1632 = vrot.lane.b32.xlu0 %v1586, 104
    %v1633 = vpop.permute.xlu0 %1632
    %1634 = vrot.lane.b32.xlu0 %v1587, 104
    %v1635 = vpop.permute.xlu0 %1634
    %1638 = vrot.lane.b32.xlu0 %v1586, 101
    %v1639 = vpop.permute.xlu0 %1638
    %1640 = vrot.lane.b32.xlu0 %v1587, 101
    %v1641 = vpop.permute.xlu0 %1640
    %1644 = vrot.lane.b32.xlu0 %v1586, 98
    %v1645 = vpop.permute.xlu0 %1644
    %1646 = vrot.lane.b32.xlu0 %v1587, 98
    %v1647 = vpop.permute.xlu0 %1646
    %1650 = vrot.lane.b32.xlu0 %v1586, 95
    %v1651 = vpop.permute.xlu0 %1650
    %1652 = vrot.lane.b32.xlu0 %v1587, 95
    %v1653 = vpop.permute.xlu0 %1652
    %1656 = vrot.lane.b32.xlu0 %v1586, 92
    %v1657 = vpop.permute.xlu0 %1656
    %1658 = vrot.lane.b32.xlu0 %v1587, 92
    %v1659 = vpop.permute.xlu0 %1658
    %1662 = vrot.lane.b32.xlu0 %v1586, 89
    %v1663 = vpop.permute.xlu0 %1662
    %1664 = vrot.lane.b32.xlu0 %v1587, 89
    %v1665 = vpop.permute.xlu0 %1664
    %1668 = vrot.lane.b32.xlu0 %v1586, 86
    %v1669 = vpop.permute.xlu0 %1668
    %1670 = vrot.lane.b32.xlu0 %v1587, 86
    %v1671 = vpop.permute.xlu0 %1670
    %v1674 = vrot.slane %v1597, 4
    %v1675 = vsel %vm293, %v1674, %v1586
    %v1676 = vrot.slane %v1586, 4
    %v1677 = vsel %vm293, %v1597, %v1676
    %v1679 = vunpack.c.l.s4 1983009808
    %v1680 = vunpack.c.0.s8 %v1679
    %v1681 = vperm.slane %v1675, %v1680
    %v1683 = vunpack.c.l.s4 1983009808
    %v1684 = vunpack.c.0.s8 %v1683
    %v1685 = vperm.slane %v1677, %v1684
    %v1686 = vrot.slane %v1603, 4
    %v1687 = vsel %vm293, %v1686, %v1591
    %v1688 = vrot.slane %v1591, 4
    %v1689 = vsel %vm293, %v1603, %v1688
    %v1691 = vunpack.c.l.s4 1983009808
    %v1692 = vunpack.c.0.s8 %v1691
    %v1693 = vperm.slane %v1687, %v1692
    %v1695 = vunpack.c.l.s4 1983009808
    %v1696 = vunpack.c.0.s8 %v1695
    %v1697 = vperm.slane %v1689, %v1696
    %v1698 = vrot.slane %v1621, 4
    %v1699 = vsel %vm293, %v1698, %v1609
    %v1700 = vrot.slane %v1609, 4
    %v1701 = vsel %vm293, %v1621, %v1700
    %v1703 = vunpack.c.l.s4 1983009808
    %v1704 = vunpack.c.0.s8 %v1703
    %v1705 = vperm.slane %v1699, %v1704
    %v1707 = vunpack.c.l.s4 1983009808
    %v1708 = vunpack.c.0.s8 %v1707
    %v1709 = vperm.slane %v1701, %v1708
    %v1710 = vrot.slane %v1627, 4
    %v1711 = vsel %vm293, %v1710, %v1615
    %v1712 = vrot.slane %v1615, 4
    %v1713 = vsel %vm293, %v1627, %v1712
    %v1715 = vunpack.c.l.s4 1983009808
    %v1716 = vunpack.c.0.s8 %v1715
    %v1717 = vperm.slane %v1711, %v1716
    %v1719 = vunpack.c.l.s4 1983009808
    %v1720 = vunpack.c.0.s8 %v1719
    %v1721 = vperm.slane %v1713, %v1720
    %v1722 = vrot.slane %v1693, 4
    %v1723 = vsel %vm293, %v1722, %v1681
    %v1724 = vrot.slane %v1681, 4
    %v1725 = vsel %vm293, %v1693, %v1724
    %v1727 = vunpack.c.l.s4 1934713408
    %v1728 = vunpack.c.0.s8 %v1727
    %v1729 = vperm.slane %v1723, %v1728
    %v1731 = vunpack.c.l.s4 1934713408
    %v1732 = vunpack.c.0.s8 %v1731
    %v1733 = vperm.slane %v1725, %v1732
    %v1734 = vrot.slane %v1697, 4
    %v1735 = vsel %vm293, %v1734, %v1685
    %v1736 = vrot.slane %v1685, 4
    %v1737 = vsel %vm293, %v1697, %v1736
    %v1739 = vunpack.c.l.s4 1934713408
    %v1740 = vunpack.c.0.s8 %v1739
    %v1741 = vperm.slane %v1735, %v1740
    %v1743 = vunpack.c.l.s4 1934713408
    %v1744 = vunpack.c.0.s8 %v1743
    %v1745 = vperm.slane %v1737, %v1744
    %v1746 = vrot.slane %v1717, 4
    %v1747 = vsel %vm293, %v1746, %v1705
    %v1748 = vrot.slane %v1705, 4
    %v1749 = vsel %vm293, %v1717, %v1748
    %v1751 = vunpack.c.l.s4 1934713408
    %v1752 = vunpack.c.0.s8 %v1751
    %v1753 = vperm.slane %v1747, %v1752
    %v1755 = vunpack.c.l.s4 1934713408
    %v1756 = vunpack.c.0.s8 %v1755
    %v1757 = vperm.slane %v1749, %v1756
    %v1758 = vrot.slane %v1721, 4
    %v1759 = vsel %vm293, %v1758, %v1709
    %v1760 = vrot.slane %v1709, 4
    %v1761 = vsel %vm293, %v1721, %v1760
    %v1763 = vunpack.c.l.s4 1934713408
    %v1764 = vunpack.c.0.s8 %v1763
    %v1765 = vperm.slane %v1759, %v1764
    %v1767 = vunpack.c.l.s4 1934713408
    %v1768 = vunpack.c.0.s8 %v1767
    %v1769 = vperm.slane %v1761, %v1768
    %v1770 = vrot.slane %v1753, 4
    %v1771 = vsel %vm293, %v1770, %v1729
    %v1772 = vrot.slane %v1729, 4
    %v1773 = vsel %vm293, %v1753, %v1772
    %v1774 = vrot.slane %v1757, 4
    %v1775 = vsel %vm293, %v1774, %v1733
    %v1776 = vrot.slane %v1733, 4
    %v1777 = vsel %vm293, %v1757, %v1776
    %v1778 = vrot.slane %v1765, 4
    %v1779 = vsel %vm293, %v1778, %v1741
    %v1780 = vrot.slane %v1741, 4
    %v1781 = vsel %vm293, %v1765, %v1780
    %v1782 = vrot.slane %v1769, 4
    %v1783 = vsel %vm293, %v1782, %v1745
    %v1784 = vrot.slane %v1745, 4
    %v1785 = vsel %vm293, %v1769, %v1784
    %v1786 = vrot.slane %v1645, 4
    %v1787 = vsel %vm293, %v1786, %v1633
    %v1788 = vrot.slane %v1633, 4
    %v1789 = vsel %vm293, %v1645, %v1788
    %v1791 = vunpack.c.l.s4 1983009808
    %v1792 = vunpack.c.0.s8 %v1791
    %v1793 = vperm.slane %v1787, %v1792
    %v1795 = vunpack.c.l.s4 1983009808
    %v1796 = vunpack.c.0.s8 %v1795
    %v1797 = vperm.slane %v1789, %v1796
    %v1798 = vrot.slane %v1651, 4
    %v1799 = vsel %vm293, %v1798, %v1639
    %v1800 = vrot.slane %v1639, 4
    %v1801 = vsel %vm293, %v1651, %v1800
    %v1803 = vunpack.c.l.s4 1983009808
    %v1804 = vunpack.c.0.s8 %v1803
    %v1805 = vperm.slane %v1799, %v1804
    %v1807 = vunpack.c.l.s4 1983009808
    %v1808 = vunpack.c.0.s8 %v1807
    %v1809 = vperm.slane %v1801, %v1808
    %v1810 = vrot.slane %v1669, 4
    %v1811 = vsel %vm293, %v1810, %v1657
    %v1812 = vrot.slane %v1657, 4
    %v1813 = vsel %vm293, %v1669, %v1812
    %v1815 = vunpack.c.l.s4 1983009808
    %v1816 = vunpack.c.0.s8 %v1815
    %v1817 = vperm.slane %v1811, %v1816
    %v1819 = vunpack.c.l.s4 1983009808
    %v1820 = vunpack.c.0.s8 %v1819
    %v1821 = vperm.slane %v1813, %v1820
    %v1822 = vrot.slane %v1663, 4
    %v1823 = vsel %vm293, 0.0, %v1822
    %v1825 = vunpack.c.l.s4 1983009808
    %v1826 = vunpack.c.0.s8 %v1825
    %v1827 = vperm.slane %v1663, %v1826
    %v1829 = vunpack.c.l.s4 1983009808
    %v1830 = vunpack.c.0.s8 %v1829
    %v1831 = vperm.slane %v1823, %v1830
    %v1832 = vrot.slane %v1805, 4
    %v1833 = vsel %vm293, %v1832, %v1793
    %v1834 = vrot.slane %v1793, 4
    %v1835 = vsel %vm293, %v1805, %v1834
    %v1837 = vunpack.c.l.s4 1934713408
    %v1838 = vunpack.c.0.s8 %v1837
    %v1839 = vperm.slane %v1833, %v1838
    %v1841 = vunpack.c.l.s4 1934713408
    %v1842 = vunpack.c.0.s8 %v1841
    %v1843 = vperm.slane %v1835, %v1842
    %v1844 = vrot.slane %v1809, 4
    %v1845 = vsel %vm293, %v1844, %v1797
    %v1846 = vrot.slane %v1797, 4
    %v1847 = vsel %vm293, %v1809, %v1846
    %v1849 = vunpack.c.l.s4 1934713408
    %v1850 = vunpack.c.0.s8 %v1849
    %v1851 = vperm.slane %v1845, %v1850
    %v1853 = vunpack.c.l.s4 1934713408
    %v1854 = vunpack.c.0.s8 %v1853
    %v1855 = vperm.slane %v1847, %v1854
    %v1856 = vrot.slane %v1827, 4
    %v1857 = vsel %vm293, %v1856, %v1817
    %v1858 = vrot.slane %v1817, 4
    %v1859 = vsel %vm293, %v1827, %v1858
    %v1861 = vunpack.c.l.s4 1934713408
    %v1862 = vunpack.c.0.s8 %v1861
    %v1863 = vperm.slane %v1857, %v1862
    %v1865 = vunpack.c.l.s4 1934713408
    %v1866 = vunpack.c.0.s8 %v1865
    %v1867 = vperm.slane %v1859, %v1866
    %v1868 = vrot.slane %v1831, 4
    %v1869 = vsel %vm293, %v1868, %v1821
    %v1870 = vrot.slane %v1821, 4
    %v1871 = vsel %vm293, %v1831, %v1870
    %v1873 = vunpack.c.l.s4 1934713408
    %v1874 = vunpack.c.0.s8 %v1873
    %v1875 = vperm.slane %v1869, %v1874
    %v1877 = vunpack.c.l.s4 1934713408
    %v1878 = vunpack.c.0.s8 %v1877
    %v1879 = vperm.slane %v1871, %v1878
    %v1880 = vrot.slane %v1863, 4
    %v1881 = vsel %vm293, %v1880, %v1839
    %v1882 = vrot.slane %v1839, 4
    %v1883 = vsel %vm293, %v1863, %v1882
    %v1884 = vrot.slane %v1867, 4
    %v1885 = vsel %vm293, %v1884, %v1843
    %v1886 = vrot.slane %v1843, 4
    %v1887 = vsel %vm293, %v1867, %v1886
    %v1888 = vrot.slane %v1875, 4
    %v1889 = vsel %vm293, %v1888, %v1851
    %v1890 = vrot.slane %v1851, 4
    %v1891 = vsel %vm293, %v1875, %v1890
    %v1892 = vrot.slane %v1879, 4
    %v1893 = vsel %vm293, %v1892, %v1855
    %v1894 = vrot.slane %v1855, 4
    %v1895 = vsel %vm293, %v1879, %v1894
    %v1896 = vrot.slane %v1599, 4
    %v1897 = vsel %vm293, %v1896, %v1587
    %v1898 = vrot.slane %v1587, 4
    %v1899 = vsel %vm293, %v1599, %v1898
    %v1901 = vunpack.c.l.s4 1983009808
    %v1902 = vunpack.c.0.s8 %v1901
    %v1903 = vperm.slane %v1897, %v1902
    %v1905 = vunpack.c.l.s4 1983009808
    %v1906 = vunpack.c.0.s8 %v1905
    %v1907 = vperm.slane %v1899, %v1906
    %v1908 = vrot.slane %v1605, 4
    %v1909 = vsel %vm293, %v1908, %v1593
    %v1910 = vrot.slane %v1593, 4
    %v1911 = vsel %vm293, %v1605, %v1910
    %v1913 = vunpack.c.l.s4 1983009808
    %v1914 = vunpack.c.0.s8 %v1913
    %v1915 = vperm.slane %v1909, %v1914
    %v1917 = vunpack.c.l.s4 1983009808
    %v1918 = vunpack.c.0.s8 %v1917
    %v1919 = vperm.slane %v1911, %v1918
    %v1920 = vrot.slane %v1623, 4
    %v1921 = vsel %vm293, %v1920, %v1611
    %v1922 = vrot.slane %v1611, 4
    %v1923 = vsel %vm293, %v1623, %v1922
    %v1925 = vunpack.c.l.s4 1983009808
    %v1926 = vunpack.c.0.s8 %v1925
    %v1927 = vperm.slane %v1921, %v1926
    %v1929 = vunpack.c.l.s4 1983009808
    %v1930 = vunpack.c.0.s8 %v1929
    %v1931 = vperm.slane %v1923, %v1930
    %v1932 = vrot.slane %v1629, 4
    %v1933 = vsel %vm293, %v1932, %v1617
    %v1934 = vrot.slane %v1617, 4
    %v1935 = vsel %vm293, %v1629, %v1934
    %v1937 = vunpack.c.l.s4 1983009808
    %v1938 = vunpack.c.0.s8 %v1937
    %v1939 = vperm.slane %v1933, %v1938
    %v1941 = vunpack.c.l.s4 1983009808
    %v1942 = vunpack.c.0.s8 %v1941
    %v1943 = vperm.slane %v1935, %v1942
    %v1944 = vrot.slane %v1915, 4
    %v1945 = vsel %vm293, %v1944, %v1903
    %v1946 = vrot.slane %v1903, 4
    %v1947 = vsel %vm293, %v1915, %v1946
    %v1949 = vunpack.c.l.s4 1934713408
    %v1950 = vunpack.c.0.s8 %v1949
    %v1951 = vperm.slane %v1945, %v1950
    %v1953 = vunpack.c.l.s4 1934713408
    %v1954 = vunpack.c.0.s8 %v1953
    %v1955 = vperm.slane %v1947, %v1954
    %v1956 = vrot.slane %v1919, 4
    %v1957 = vsel %vm293, %v1956, %v1907
    %v1958 = vrot.slane %v1907, 4
    %v1959 = vsel %vm293, %v1919, %v1958
    %v1961 = vunpack.c.l.s4 1934713408
    %v1962 = vunpack.c.0.s8 %v1961
    %v1963 = vperm.slane %v1957, %v1962
    %v1965 = vunpack.c.l.s4 1934713408
    %v1966 = vunpack.c.0.s8 %v1965
    %v1967 = vperm.slane %v1959, %v1966
    %v1968 = vrot.slane %v1939, 4
    %v1969 = vsel %vm293, %v1968, %v1927
    %v1970 = vrot.slane %v1927, 4
    %v1971 = vsel %vm293, %v1939, %v1970
    %v1973 = vunpack.c.l.s4 1934713408
    %v1974 = vunpack.c.0.s8 %v1973
    %v1975 = vperm.slane %v1969, %v1974
    %v1977 = vunpack.c.l.s4 1934713408
    %v1978 = vunpack.c.0.s8 %v1977
    %v1979 = vperm.slane %v1971, %v1978
    %v1980 = vrot.slane %v1943, 4
    %v1981 = vsel %vm293, %v1980, %v1931
    %v1982 = vrot.slane %v1931, 4
    %v1983 = vsel %vm293, %v1943, %v1982
    %v1985 = vunpack.c.l.s4 1934713408
    %v1986 = vunpack.c.0.s8 %v1985
    %v1987 = vperm.slane %v1981, %v1986
    %v1989 = vunpack.c.l.s4 1934713408
    %v1990 = vunpack.c.0.s8 %v1989
    %v1991 = vperm.slane %v1983, %v1990
    %v1992 = vrot.slane %v1975, 4
    %v1993 = vsel %vm293, %v1992, %v1951
    %v1994 = vrot.slane %v1951, 4
    %v1995 = vsel %vm293, %v1975, %v1994
    %v1996 = vrot.slane %v1979, 4
    %v1997 = vsel %vm293, %v1996, %v1955
    %v1998 = vrot.slane %v1955, 4
    %v1999 = vsel %vm293, %v1979, %v1998
    %v2000 = vrot.slane %v1987, 4
    %v2001 = vsel %vm293, %v2000, %v1963
    %v2002 = vrot.slane %v1963, 4
    %v2003 = vsel %vm293, %v1987, %v2002
    %v2004 = vrot.slane %v1991, 4
    %v2005 = vsel %vm293, %v2004, %v1967
    %v2006 = vrot.slane %v1967, 4
    %v2007 = vsel %vm293, %v1991, %v2006
    %v2008 = vrot.slane %v1647, 4
    %v2009 = vsel %vm293, %v2008, %v1635
    %v2010 = vrot.slane %v1635, 4
    %v2011 = vsel %vm293, %v1647, %v2010
    %v2013 = vunpack.c.l.s4 1983009808
    %v2014 = vunpack.c.0.s8 %v2013
    %v2015 = vperm.slane %v2009, %v2014
    %v2017 = vunpack.c.l.s4 1983009808
    %v2018 = vunpack.c.0.s8 %v2017
    %v2019 = vperm.slane %v2011, %v2018
    %v2020 = vrot.slane %v1653, 4
    %v2021 = vsel %vm293, %v2020, %v1641
    %v2022 = vrot.slane %v1641, 4
    %v2023 = vsel %vm293, %v1653, %v2022
    %v2025 = vunpack.c.l.s4 1983009808
    %v2026 = vunpack.c.0.s8 %v2025
    %v2027 = vperm.slane %v2021, %v2026
    %v2029 = vunpack.c.l.s4 1983009808
    %v2030 = vunpack.c.0.s8 %v2029
    %v2031 = vperm.slane %v2023, %v2030
    %v2032 = vrot.slane %v1671, 4
    %v2033 = vsel %vm293, %v2032, %v1659
    %v2034 = vrot.slane %v1659, 4
    %v2035 = vsel %vm293, %v1671, %v2034
    %v2037 = vunpack.c.l.s4 1983009808
    %v2038 = vunpack.c.0.s8 %v2037
    %v2039 = vperm.slane %v2033, %v2038
    %v2041 = vunpack.c.l.s4 1983009808
    %v2042 = vunpack.c.0.s8 %v2041
    %v2043 = vperm.slane %v2035, %v2042
    %v2044 = vrot.slane %v1665, 4
    %v2045 = vsel %vm293, 0.0, %v2044
    %v2047 = vunpack.c.l.s4 1983009808
    %v2048 = vunpack.c.0.s8 %v2047
    %v2049 = vperm.slane %v1665, %v2048
    %v2051 = vunpack.c.l.s4 1983009808
    %v2052 = vunpack.c.0.s8 %v2051
    %v2053 = vperm.slane %v2045, %v2052
    %v2054 = vrot.slane %v2027, 4
    %v2055 = vsel %vm293, %v2054, %v2015
    %v2056 = vrot.slane %v2015, 4
    %v2057 = vsel %vm293, %v2027, %v2056
    %v2059 = vunpack.c.l.s4 1934713408
    %v2060 = vunpack.c.0.s8 %v2059
    %v2061 = vperm.slane %v2055, %v2060
    %v2063 = vunpack.c.l.s4 1934713408
    %v2064 = vunpack.c.0.s8 %v2063
    %v2065 = vperm.slane %v2057, %v2064
    %v2066 = vrot.slane %v2031, 4
    %v2067 = vsel %vm293, %v2066, %v2019
    %v2068 = vrot.slane %v2019, 4
    %v2069 = vsel %vm293, %v2031, %v2068
    %v2071 = vunpack.c.l.s4 1934713408
    %v2072 = vunpack.c.0.s8 %v2071
    %v2073 = vperm.slane %v2067, %v2072
    %v2075 = vunpack.c.l.s4 1934713408
    %v2076 = vunpack.c.0.s8 %v2075
    %v2077 = vperm.slane %v2069, %v2076
    %v2078 = vrot.slane %v2049, 4
    %v2079 = vsel %vm293, %v2078, %v2039
    %v2080 = vrot.slane %v2039, 4
    %v2081 = vsel %vm293, %v2049, %v2080
    %v2083 = vunpack.c.l.s4 1934713408
    %v2084 = vunpack.c.0.s8 %v2083
    %v2085 = vperm.slane %v2079, %v2084
    %v2087 = vunpack.c.l.s4 1934713408
    %v2088 = vunpack.c.0.s8 %v2087
    %v2089 = vperm.slane %v2081, %v2088
    %v2090 = vrot.slane %v2053, 4
    %v2091 = vsel %vm293, %v2090, %v2043
    %v2092 = vrot.slane %v2043, 4
    %v2093 = vsel %vm293, %v2053, %v2092
    %v2095 = vunpack.c.l.s4 1934713408
    %v2096 = vunpack.c.0.s8 %v2095
    %v2097 = vperm.slane %v2091, %v2096
    %v2099 = vunpack.c.l.s4 1934713408
    %v2100 = vunpack.c.0.s8 %v2099
    %v2101 = vperm.slane %v2093, %v2100
    %v2102 = vrot.slane %v2085, 4
    %v2103 = vsel %vm293, %v2102, %v2061
    %v2104 = vrot.slane %v2061, 4
    %v2105 = vsel %vm293, %v2085, %v2104
    %v2106 = vrot.slane %v2089, 4
    %v2107 = vsel %vm293, %v2106, %v2065
    %v2108 = vrot.slane %v2065, 4
    %v2109 = vsel %vm293, %v2089, %v2108
    %v2110 = vrot.slane %v2097, 4
    %v2111 = vsel %vm293, %v2110, %v2073
    %v2112 = vrot.slane %v2073, 4
    %v2113 = vsel %vm293, %v2097, %v2112
    %v2114 = vrot.slane %v2101, 4
    %v2115 = vsel %vm293, %v2114, %v2077
    %v2116 = vrot.slane %v2077, 4
    %v2117 = vsel %vm293, %v2101, %v2116
    %v2118 = vsel %vm741, %v1771, -inf
    %2119 = vmax.xlane.f32.xlu0 %v2118
    %v2120 = vpop.xlane.xlu0 %2119
    %vm2121 = vcmask 22528
    %v2122 = vsel %vm2121, %v1881, -inf
    %2123 = vmax.xlane.f32.xlu0 %v2122
    %v2124 = vpop.xlane.xlu0 %2123
    %v2125 = vsel %vm741, %v1773, -inf
    %2126 = vmax.xlane.f32.xlu0 %v2125
    %v2127 = vpop.xlane.xlu0 %2126
    %v2128 = vsel %vm2121, %v1883, -inf
    %2129 = vmax.xlane.f32.xlu0 %v2128
    %v2130 = vpop.xlane.xlu0 %2129
    %v2131 = vsel %vm741, %v1775, -inf
    %2132 = vmax.xlane.f32.xlu0 %v2131
    %v2133 = vpop.xlane.xlu0 %2132
    %v2134 = vsel %vm2121, %v1885, -inf
    %2135 = vmax.xlane.f32.xlu0 %v2134
    %v2136 = vpop.xlane.xlu0 %2135
    %v2137 = vsel %vm741, %v1777, -inf
    %2138 = vmax.xlane.f32.xlu0 %v2137
    %v2139 = vpop.xlane.xlu0 %2138
    %v2140 = vsel %vm2121, %v1887, -inf
    %2141 = vmax.xlane.f32.xlu0 %v2140
    %v2142 = vpop.xlane.xlu0 %2141
    %v2143 = vsel %vm741, %v1779, -inf
    %2144 = vmax.xlane.f32.xlu0 %v2143
    %v2145 = vpop.xlane.xlu0 %2144
    %v2146 = vsel %vm2121, %v1889, -inf
    %2147 = vmax.xlane.f32.xlu0 %v2146
    %v2148 = vpop.xlane.xlu0 %2147
    %v2149 = vsel %vm741, %v1781, -inf
    %2150 = vmax.xlane.f32.xlu0 %v2149
    %v2151 = vpop.xlane.xlu0 %2150
    %v2152 = vsel %vm2121, %v1891, -inf
    %2153 = vmax.xlane.f32.xlu0 %v2152
    %v2154 = vpop.xlane.xlu0 %2153
    %v2155 = vsel %vm741, %v1783, -inf
    %2156 = vmax.xlane.f32.xlu0 %v2155
    %v2157 = vpop.xlane.xlu0 %2156
    %v2158 = vsel %vm2121, %v1893, -inf
    %2159 = vmax.xlane.f32.xlu0 %v2158
    %v2160 = vpop.xlane.xlu0 %2159
    %v2161 = vsel %vm741, %v1785, -inf
    %2162 = vmax.xlane.f32.xlu0 %v2161
    %v2163 = vpop.xlane.xlu0 %2162
    %v2164 = vsel %vm2121, %v1895, -inf
    %2165 = vmax.xlane.f32.xlu0 %v2164
    %v2166 = vpop.xlane.xlu0 %2165
    %v2167 = vsel %vm741, %v1993, -inf
    %2168 = vmax.xlane.f32.xlu0 %v2167
    %v2169 = vpop.xlane.xlu0 %2168
    %v2170 = vsel %vm2121, %v2103, -inf
    %2171 = vmax.xlane.f32.xlu0 %v2170
    %v2172 = vpop.xlane.xlu0 %2171
    %v2173 = vsel %vm741, %v1995, -inf
    %2174 = vmax.xlane.f32.xlu0 %v2173
    %v2175 = vpop.xlane.xlu0 %2174
    %v2176 = vsel %vm2121, %v2105, -inf
    %2177 = vmax.xlane.f32.xlu0 %v2176
    %v2178 = vpop.xlane.xlu0 %2177
    %v2179 = vsel %vm741, %v1997, -inf
    %2180 = vmax.xlane.f32.xlu0 %v2179
    %v2181 = vpop.xlane.xlu0 %2180
    %v2182 = vsel %vm2121, %v2107, -inf
    %2183 = vmax.xlane.f32.xlu0 %v2182
    %v2184 = vpop.xlane.xlu0 %2183
    %v2185 = vsel %vm741, %v1999, -inf
    %2186 = vmax.xlane.f32.xlu0 %v2185
    %v2187 = vpop.xlane.xlu0 %2186
    %v2188 = vsel %vm2121, %v2109, -inf
    %2189 = vmax.xlane.f32.xlu0 %v2188
    %v2190 = vpop.xlane.xlu0 %2189
    %v2191 = vsel %vm741, %v2001, -inf
    %2192 = vmax.xlane.f32.xlu0 %v2191
    %v2193 = vpop.xlane.xlu0 %2192
    %v2194 = vsel %vm2121, %v2111, -inf
    %2195 = vmax.xlane.f32.xlu0 %v2194
    %v2196 = vpop.xlane.xlu0 %2195
    %v2197 = vsel %vm741, %v2003, -inf
    %2198 = vmax.xlane.f32.xlu0 %v2197
    %v2199 = vpop.xlane.xlu0 %2198
    %v2200 = vsel %vm2121, %v2113, -inf
    %2201 = vmax.xlane.f32.xlu0 %v2200
    %v2202 = vpop.xlane.xlu0 %2201
    %v2203 = vsel %vm741, %v2005, -inf
    %2204 = vmax.xlane.f32.xlu0 %v2203
    %v2205 = vpop.xlane.xlu0 %2204
    %v2206 = vsel %vm2121, %v2115, -inf
    %2207 = vmax.xlane.f32.xlu0 %v2206
    %v2208 = vpop.xlane.xlu0 %2207
    %v2209 = vsel %vm741, %v2007, -inf
    %2210 = vmax.xlane.f32.xlu0 %v2209
    %v2211 = vpop.xlane.xlu0 %2210
    %v2212 = vsel %vm2121, %v2117, -inf
    %2213 = vmax.xlane.f32.xlu0 %v2212
    %v2214 = vpop.xlane.xlu0 %2213
    %2215 = vrot.lane.b32.xlu0 %v1586, 83
    %v2216 = vpop.permute.xlu0 %2215
    %2217 = vrot.lane.b32.xlu0 %v1587, 83
    %v2218 = vpop.permute.xlu0 %2217
    %2219 = vrot.lane.b32.xlu0 %v1591, 83
    %v2220 = vpop.permute.xlu0 %2219
    %2221 = vrot.lane.b32.xlu0 %v1593, 83
    %v2222 = vpop.permute.xlu0 %2221
    %2223 = vrot.lane.b32.xlu0 %v1597, 83
    %v2224 = vpop.permute.xlu0 %2223
    %2225 = vrot.lane.b32.xlu0 %v1599, 83
    %v2226 = vpop.permute.xlu0 %2225
    %2227 = vrot.lane.b32.xlu0 %v1603, 83
    %v2228 = vpop.permute.xlu0 %2227
    %2229 = vrot.lane.b32.xlu0 %v1605, 83
    %v2230 = vpop.permute.xlu0 %2229
    %2231 = vrot.lane.b32.xlu0 %v1609, 83
    %v2232 = vpop.permute.xlu0 %2231
    %2233 = vrot.lane.b32.xlu0 %v1611, 83
    %v2234 = vpop.permute.xlu0 %2233
    %2235 = vrot.lane.b32.xlu0 %v1615, 83
    %v2236 = vpop.permute.xlu0 %2235
    %2237 = vrot.lane.b32.xlu0 %v1617, 83
    %v2238 = vpop.permute.xlu0 %2237
    %2239 = vrot.lane.b32.xlu0 %v1621, 83
    %v2240 = vpop.permute.xlu0 %2239
    %2241 = vrot.lane.b32.xlu0 %v1623, 83
    %v2242 = vpop.permute.xlu0 %2241
    %2243 = vrot.lane.b32.xlu0 %v1627, 83
    %v2244 = vpop.permute.xlu0 %2243
    %2245 = vrot.lane.b32.xlu0 %v1629, 83
    %v2246 = vpop.permute.xlu0 %2245
    %2247 = vrot.lane.b32.xlu0 %v1633, 83
    %v2248 = vpop.permute.xlu0 %2247
    %2249 = vrot.lane.b32.xlu0 %v1635, 83
    %v2250 = vpop.permute.xlu0 %2249
    %2251 = vrot.lane.b32.xlu0 %v1639, 83
    %v2252 = vpop.permute.xlu0 %2251
    %2253 = vrot.lane.b32.xlu0 %v1641, 83
    %v2254 = vpop.permute.xlu0 %2253
    %2255 = vrot.lane.b32.xlu0 %v1645, 83
    %v2256 = vpop.permute.xlu0 %2255
    %2257 = vrot.lane.b32.xlu0 %v1647, 83
    %v2258 = vpop.permute.xlu0 %2257
    %2259 = vrot.lane.b32.xlu0 %v1651, 83
    %v2260 = vpop.permute.xlu0 %2259
    %2261 = vrot.lane.b32.xlu0 %v1653, 83
    %v2262 = vpop.permute.xlu0 %2261
    %2263 = vrot.lane.b32.xlu0 %v1657, 83
    %v2264 = vpop.permute.xlu0 %2263
    %2265 = vrot.lane.b32.xlu0 %v1659, 83
    %v2266 = vpop.permute.xlu0 %2265
    %2267 = vrot.lane.b32.xlu0 %v1663, 83
    %v2268 = vpop.permute.xlu0 %2267
    %2269 = vrot.lane.b32.xlu0 %v1665, 83
    %v2270 = vpop.permute.xlu0 %2269
    %2271 = vrot.lane.b32.xlu0 %v1669, 83
    %v2272 = vpop.permute.xlu0 %2271
    %2273 = vrot.lane.b32.xlu0 %v1671, 83
    %v2274 = vpop.permute.xlu0 %2273
    %v2305 = vrot.slane %v2224, 4
    %v2306 = vsel %vm293, %v2305, %v2216
    %v2307 = vrot.slane %v2216, 4
    %v2308 = vsel %vm293, %v2224, %v2307
    %v2310 = vunpack.c.l.s4 1983009808
    %v2311 = vunpack.c.0.s8 %v2310
    %v2312 = vperm.slane %v2306, %v2311
    %v2314 = vunpack.c.l.s4 1983009808
    %v2315 = vunpack.c.0.s8 %v2314
    %v2316 = vperm.slane %v2308, %v2315
    %v2317 = vrot.slane %v2228, 4
    %v2318 = vsel %vm293, %v2317, %v2220
    %v2319 = vrot.slane %v2220, 4
    %v2320 = vsel %vm293, %v2228, %v2319
    %v2322 = vunpack.c.l.s4 1983009808
    %v2323 = vunpack.c.0.s8 %v2322
    %v2324 = vperm.slane %v2318, %v2323
    %v2326 = vunpack.c.l.s4 1983009808
    %v2327 = vunpack.c.0.s8 %v2326
    %v2328 = vperm.slane %v2320, %v2327
    %v2329 = vrot.slane %v2240, 4
    %v2330 = vsel %vm293, %v2329, %v2232
    %v2331 = vrot.slane %v2232, 4
    %v2332 = vsel %vm293, %v2240, %v2331
    %v2334 = vunpack.c.l.s4 1983009808
    %v2335 = vunpack.c.0.s8 %v2334
    %v2336 = vperm.slane %v2330, %v2335
    %v2338 = vunpack.c.l.s4 1983009808
    %v2339 = vunpack.c.0.s8 %v2338
    %v2340 = vperm.slane %v2332, %v2339
    %v2341 = vrot.slane %v2244, 4
    %v2342 = vsel %vm293, %v2341, %v2236
    %v2343 = vrot.slane %v2236, 4
    %v2344 = vsel %vm293, %v2244, %v2343
    %v2346 = vunpack.c.l.s4 1983009808
    %v2347 = vunpack.c.0.s8 %v2346
    %v2348 = vperm.slane %v2342, %v2347
    %v2350 = vunpack.c.l.s4 1983009808
    %v2351 = vunpack.c.0.s8 %v2350
    %v2352 = vperm.slane %v2344, %v2351
    %v2353 = vrot.slane %v2324, 4
    %v2354 = vsel %vm293, %v2353, %v2312
    %v2355 = vrot.slane %v2312, 4
    %v2356 = vsel %vm293, %v2324, %v2355
    %v2358 = vunpack.c.l.s4 1934713408
    %v2359 = vunpack.c.0.s8 %v2358
    %v2360 = vperm.slane %v2354, %v2359
    %v2362 = vunpack.c.l.s4 1934713408
    %v2363 = vunpack.c.0.s8 %v2362
    %v2364 = vperm.slane %v2356, %v2363
    %v2365 = vrot.slane %v2328, 4
    %v2366 = vsel %vm293, %v2365, %v2316
    %v2367 = vrot.slane %v2316, 4
    %v2368 = vsel %vm293, %v2328, %v2367
    %v2370 = vunpack.c.l.s4 1934713408
    %v2371 = vunpack.c.0.s8 %v2370
    %v2372 = vperm.slane %v2366, %v2371
    %v2374 = vunpack.c.l.s4 1934713408
    %v2375 = vunpack.c.0.s8 %v2374
    %v2376 = vperm.slane %v2368, %v2375
    %v2377 = vrot.slane %v2348, 4
    %v2378 = vsel %vm293, %v2377, %v2336
    %v2379 = vrot.slane %v2336, 4
    %v2380 = vsel %vm293, %v2348, %v2379
    %v2382 = vunpack.c.l.s4 1934713408
    %v2383 = vunpack.c.0.s8 %v2382
    %v2384 = vperm.slane %v2378, %v2383
    %v2386 = vunpack.c.l.s4 1934713408
    %v2387 = vunpack.c.0.s8 %v2386
    %v2388 = vperm.slane %v2380, %v2387
    %v2389 = vrot.slane %v2352, 4
    %v2390 = vsel %vm293, %v2389, %v2340
    %v2391 = vrot.slane %v2340, 4
    %v2392 = vsel %vm293, %v2352, %v2391
    %v2394 = vunpack.c.l.s4 1934713408
    %v2395 = vunpack.c.0.s8 %v2394
    %v2396 = vperm.slane %v2390, %v2395
    %v2398 = vunpack.c.l.s4 1934713408
    %v2399 = vunpack.c.0.s8 %v2398
    %v2400 = vperm.slane %v2392, %v2399
    %v2401 = vrot.slane %v2384, 4
    %v2402 = vsel %vm293, %v2401, %v2360
    %v2403 = vrot.slane %v2360, 4
    %v2404 = vsel %vm293, %v2384, %v2403
    %v2405 = vrot.slane %v2388, 4
    %v2406 = vsel %vm293, %v2405, %v2364
    %v2407 = vrot.slane %v2364, 4
    %v2408 = vsel %vm293, %v2388, %v2407
    %v2409 = vrot.slane %v2396, 4
    %v2410 = vsel %vm293, %v2409, %v2372
    %v2411 = vrot.slane %v2372, 4
    %v2412 = vsel %vm293, %v2396, %v2411
    %v2413 = vrot.slane %v2400, 4
    %v2414 = vsel %vm293, %v2413, %v2376
    %v2415 = vrot.slane %v2376, 4
    %v2416 = vsel %vm293, %v2400, %v2415
    %v2417 = vrot.slane %v2256, 4
    %v2418 = vsel %vm293, %v2417, %v2248
    %v2419 = vrot.slane %v2248, 4
    %v2420 = vsel %vm293, %v2256, %v2419
    %v2422 = vunpack.c.l.s4 1983009808
    %v2423 = vunpack.c.0.s8 %v2422
    %v2424 = vperm.slane %v2418, %v2423
    %v2426 = vunpack.c.l.s4 1983009808
    %v2427 = vunpack.c.0.s8 %v2426
    %v2428 = vperm.slane %v2420, %v2427
    %v2429 = vrot.slane %v2260, 4
    %v2430 = vsel %vm293, %v2429, %v2252
    %v2431 = vrot.slane %v2252, 4
    %v2432 = vsel %vm293, %v2260, %v2431
    %v2434 = vunpack.c.l.s4 1983009808
    %v2435 = vunpack.c.0.s8 %v2434
    %v2436 = vperm.slane %v2430, %v2435
    %v2438 = vunpack.c.l.s4 1983009808
    %v2439 = vunpack.c.0.s8 %v2438
    %v2440 = vperm.slane %v2432, %v2439
    %v2441 = vrot.slane %v2272, 4
    %v2442 = vsel %vm293, %v2441, %v2264
    %v2443 = vrot.slane %v2264, 4
    %v2444 = vsel %vm293, %v2272, %v2443
    %v2446 = vunpack.c.l.s4 1983009808
    %v2447 = vunpack.c.0.s8 %v2446
    %v2448 = vperm.slane %v2442, %v2447
    %v2450 = vunpack.c.l.s4 1983009808
    %v2451 = vunpack.c.0.s8 %v2450
    %v2452 = vperm.slane %v2444, %v2451
    %v2453 = vrot.slane %v2268, 4
    %v2454 = vsel %vm293, 0.0, %v2453
    %v2456 = vunpack.c.l.s4 1983009808
    %v2457 = vunpack.c.0.s8 %v2456
    %v2458 = vperm.slane %v2268, %v2457
    %v2460 = vunpack.c.l.s4 1983009808
    %v2461 = vunpack.c.0.s8 %v2460
    %v2462 = vperm.slane %v2454, %v2461
    %v2463 = vrot.slane %v2436, 4
    %v2464 = vsel %vm293, %v2463, %v2424
    %v2465 = vrot.slane %v2424, 4
    %v2466 = vsel %vm293, %v2436, %v2465
    %v2468 = vunpack.c.l.s4 1934713408
    %v2469 = vunpack.c.0.s8 %v2468
    %v2470 = vperm.slane %v2464, %v2469
    %v2472 = vunpack.c.l.s4 1934713408
    %v2473 = vunpack.c.0.s8 %v2472
    %v2474 = vperm.slane %v2466, %v2473
    %v2475 = vrot.slane %v2440, 4
    %v2476 = vsel %vm293, %v2475, %v2428
    %v2477 = vrot.slane %v2428, 4
    %v2478 = vsel %vm293, %v2440, %v2477
    %v2480 = vunpack.c.l.s4 1934713408
    %v2481 = vunpack.c.0.s8 %v2480
    %v2482 = vperm.slane %v2476, %v2481
    %v2484 = vunpack.c.l.s4 1934713408
    %v2485 = vunpack.c.0.s8 %v2484
    %v2486 = vperm.slane %v2478, %v2485
    %v2487 = vrot.slane %v2458, 4
    %v2488 = vsel %vm293, %v2487, %v2448
    %v2489 = vrot.slane %v2448, 4
    %v2490 = vsel %vm293, %v2458, %v2489
    %v2492 = vunpack.c.l.s4 1934713408
    %v2493 = vunpack.c.0.s8 %v2492
    %v2494 = vperm.slane %v2488, %v2493
    %v2496 = vunpack.c.l.s4 1934713408
    %v2497 = vunpack.c.0.s8 %v2496
    %v2498 = vperm.slane %v2490, %v2497
    %v2499 = vrot.slane %v2462, 4
    %v2500 = vsel %vm293, %v2499, %v2452
    %v2501 = vrot.slane %v2452, 4
    %v2502 = vsel %vm293, %v2462, %v2501
    %v2504 = vunpack.c.l.s4 1934713408
    %v2505 = vunpack.c.0.s8 %v2504
    %v2506 = vperm.slane %v2500, %v2505
    %v2508 = vunpack.c.l.s4 1934713408
    %v2509 = vunpack.c.0.s8 %v2508
    %v2510 = vperm.slane %v2502, %v2509
    %v2511 = vrot.slane %v2494, 4
    %v2512 = vsel %vm293, %v2511, %v2470
    %v2513 = vrot.slane %v2470, 4
    %v2514 = vsel %vm293, %v2494, %v2513
    %v2515 = vrot.slane %v2498, 4
    %v2516 = vsel %vm293, %v2515, %v2474
    %v2517 = vrot.slane %v2474, 4
    %v2518 = vsel %vm293, %v2498, %v2517
    %v2519 = vrot.slane %v2506, 4
    %v2520 = vsel %vm293, %v2519, %v2482
    %v2521 = vrot.slane %v2482, 4
    %v2522 = vsel %vm293, %v2506, %v2521
    %v2523 = vrot.slane %v2510, 4
    %v2524 = vsel %vm293, %v2523, %v2486
    %v2525 = vrot.slane %v2486, 4
    %v2526 = vsel %vm293, %v2510, %v2525
    %v2527 = vrot.slane %v2226, 4
    %v2528 = vsel %vm293, %v2527, %v2218
    %v2529 = vrot.slane %v2218, 4
    %v2530 = vsel %vm293, %v2226, %v2529
    %v2532 = vunpack.c.l.s4 1983009808
    %v2533 = vunpack.c.0.s8 %v2532
    %v2534 = vperm.slane %v2528, %v2533
    %v2536 = vunpack.c.l.s4 1983009808
    %v2537 = vunpack.c.0.s8 %v2536
    %v2538 = vperm.slane %v2530, %v2537
    %v2539 = vrot.slane %v2230, 4
    %v2540 = vsel %vm293, %v2539, %v2222
    %v2541 = vrot.slane %v2222, 4
    %v2542 = vsel %vm293, %v2230, %v2541
    %v2544 = vunpack.c.l.s4 1983009808
    %v2545 = vunpack.c.0.s8 %v2544
    %v2546 = vperm.slane %v2540, %v2545
    %v2548 = vunpack.c.l.s4 1983009808
    %v2549 = vunpack.c.0.s8 %v2548
    %v2550 = vperm.slane %v2542, %v2549
    %v2551 = vrot.slane %v2242, 4
    %v2552 = vsel %vm293, %v2551, %v2234
    %v2553 = vrot.slane %v2234, 4
    %v2554 = vsel %vm293, %v2242, %v2553
    %v2556 = vunpack.c.l.s4 1983009808
    %v2557 = vunpack.c.0.s8 %v2556
    %v2558 = vperm.slane %v2552, %v2557
    %v2560 = vunpack.c.l.s4 1983009808
    %v2561 = vunpack.c.0.s8 %v2560
    %v2562 = vperm.slane %v2554, %v2561
    %v2563 = vrot.slane %v2246, 4
    %v2564 = vsel %vm293, %v2563, %v2238
    %v2565 = vrot.slane %v2238, 4
    %v2566 = vsel %vm293, %v2246, %v2565
    %v2568 = vunpack.c.l.s4 1983009808
    %v2569 = vunpack.c.0.s8 %v2568
    %v2570 = vperm.slane %v2564, %v2569
    %v2572 = vunpack.c.l.s4 1983009808
    %v2573 = vunpack.c.0.s8 %v2572
    %v2574 = vperm.slane %v2566, %v2573
    %v2575 = vrot.slane %v2546, 4
    %v2576 = vsel %vm293, %v2575, %v2534
    %v2577 = vrot.slane %v2534, 4
    %v2578 = vsel %vm293, %v2546, %v2577
    %v2580 = vunpack.c.l.s4 1934713408
    %v2581 = vunpack.c.0.s8 %v2580
    %v2582 = vperm.slane %v2576, %v2581
    %v2584 = vunpack.c.l.s4 1934713408
    %v2585 = vunpack.c.0.s8 %v2584
    %v2586 = vperm.slane %v2578, %v2585
    %v2587 = vrot.slane %v2550, 4
    %v2588 = vsel %vm293, %v2587, %v2538
    %v2589 = vrot.slane %v2538, 4
    %v2590 = vsel %vm293, %v2550, %v2589
    %v2592 = vunpack.c.l.s4 1934713408
    %v2593 = vunpack.c.0.s8 %v2592
    %v2594 = vperm.slane %v2588, %v2593
    %v2596 = vunpack.c.l.s4 1934713408
    %v2597 = vunpack.c.0.s8 %v2596
    %v2598 = vperm.slane %v2590, %v2597
    %v2599 = vrot.slane %v2570, 4
    %v2600 = vsel %vm293, %v2599, %v2558
    %v2601 = vrot.slane %v2558, 4
    %v2602 = vsel %vm293, %v2570, %v2601
    %v2604 = vunpack.c.l.s4 1934713408
    %v2605 = vunpack.c.0.s8 %v2604
    %v2606 = vperm.slane %v2600, %v2605
    %v2608 = vunpack.c.l.s4 1934713408
    %v2609 = vunpack.c.0.s8 %v2608
    %v2610 = vperm.slane %v2602, %v2609
    %v2611 = vrot.slane %v2574, 4
    %v2612 = vsel %vm293, %v2611, %v2562
    %v2613 = vrot.slane %v2562, 4
    %v2614 = vsel %vm293, %v2574, %v2613
    %v2616 = vunpack.c.l.s4 1934713408
    %v2617 = vunpack.c.0.s8 %v2616
    %v2618 = vperm.slane %v2612, %v2617
    %v2620 = vunpack.c.l.s4 1934713408
    %v2621 = vunpack.c.0.s8 %v2620
    %v2622 = vperm.slane %v2614, %v2621
    %v2623 = vrot.slane %v2606, 4
    %v2624 = vsel %vm293, %v2623, %v2582
    %v2625 = vrot.slane %v2582, 4
    %v2626 = vsel %vm293, %v2606, %v2625
    %v2627 = vrot.slane %v2610, 4
    %v2628 = vsel %vm293, %v2627, %v2586
    %v2629 = vrot.slane %v2586, 4
    %v2630 = vsel %vm293, %v2610, %v2629
    %v2631 = vrot.slane %v2618, 4
    %v2632 = vsel %vm293, %v2631, %v2594
    %v2633 = vrot.slane %v2594, 4
    %v2634 = vsel %vm293, %v2618, %v2633
    %v2635 = vrot.slane %v2622, 4
    %v2636 = vsel %vm293, %v2635, %v2598
    %v2637 = vrot.slane %v2598, 4
    %v2638 = vsel %vm293, %v2622, %v2637
    %v2639 = vrot.slane %v2258, 4
    %v2640 = vsel %vm293, %v2639, %v2250
    %v2641 = vrot.slane %v2250, 4
    %v2642 = vsel %vm293, %v2258, %v2641
    %v2644 = vunpack.c.l.s4 1983009808
    %v2645 = vunpack.c.0.s8 %v2644
    %v2646 = vperm.slane %v2640, %v2645
    %v2648 = vunpack.c.l.s4 1983009808
    %v2649 = vunpack.c.0.s8 %v2648
    %v2650 = vperm.slane %v2642, %v2649
    %v2651 = vrot.slane %v2262, 4
    %v2652 = vsel %vm293, %v2651, %v2254
    %v2653 = vrot.slane %v2254, 4
    %v2654 = vsel %vm293, %v2262, %v2653
    %v2656 = vunpack.c.l.s4 1983009808
    %v2657 = vunpack.c.0.s8 %v2656
    %v2658 = vperm.slane %v2652, %v2657
    %v2660 = vunpack.c.l.s4 1983009808
    %v2661 = vunpack.c.0.s8 %v2660
    %v2662 = vperm.slane %v2654, %v2661
    %v2663 = vrot.slane %v2274, 4
    %v2664 = vsel %vm293, %v2663, %v2266
    %v2665 = vrot.slane %v2266, 4
    %v2666 = vsel %vm293, %v2274, %v2665
    %v2668 = vunpack.c.l.s4 1983009808
    %v2669 = vunpack.c.0.s8 %v2668
    %v2670 = vperm.slane %v2664, %v2669
    %v2672 = vunpack.c.l.s4 1983009808
    %v2673 = vunpack.c.0.s8 %v2672
    %v2674 = vperm.slane %v2666, %v2673
    %v2675 = vrot.slane %v2270, 4
    %v2676 = vsel %vm293, 0.0, %v2675
    %v2678 = vunpack.c.l.s4 1983009808
    %v2679 = vunpack.c.0.s8 %v2678
    %v2680 = vperm.slane %v2270, %v2679
    %v2682 = vunpack.c.l.s4 1983009808
    %v2683 = vunpack.c.0.s8 %v2682
    %v2684 = vperm.slane %v2676, %v2683
    %v2685 = vrot.slane %v2658, 4
    %v2686 = vsel %vm293, %v2685, %v2646
    %v2687 = vrot.slane %v2646, 4
    %v2688 = vsel %vm293, %v2658, %v2687
    %v2690 = vunpack.c.l.s4 1934713408
    %v2691 = vunpack.c.0.s8 %v2690
    %v2692 = vperm.slane %v2686, %v2691
    %v2694 = vunpack.c.l.s4 1934713408
    %v2695 = vunpack.c.0.s8 %v2694
    %v2696 = vperm.slane %v2688, %v2695
    %v2697 = vrot.slane %v2662, 4
    %v2698 = vsel %vm293, %v2697, %v2650
    %v2699 = vrot.slane %v2650, 4
    %v2700 = vsel %vm293, %v2662, %v2699
    %v2702 = vunpack.c.l.s4 1934713408
    %v2703 = vunpack.c.0.s8 %v2702
    %v2704 = vperm.slane %v2698, %v2703
    %v2706 = vunpack.c.l.s4 1934713408
    %v2707 = vunpack.c.0.s8 %v2706
    %v2708 = vperm.slane %v2700, %v2707
    %v2709 = vrot.slane %v2680, 4
    %v2710 = vsel %vm293, %v2709, %v2670
    %v2711 = vrot.slane %v2670, 4
    %v2712 = vsel %vm293, %v2680, %v2711
    %v2714 = vunpack.c.l.s4 1934713408
    %v2715 = vunpack.c.0.s8 %v2714
    %v2716 = vperm.slane %v2710, %v2715
    %v2718 = vunpack.c.l.s4 1934713408
    %v2719 = vunpack.c.0.s8 %v2718
    %v2720 = vperm.slane %v2712, %v2719
    %v2721 = vrot.slane %v2684, 4
    %v2722 = vsel %vm293, %v2721, %v2674
    %v2723 = vrot.slane %v2674, 4
    %v2724 = vsel %vm293, %v2684, %v2723
    %v2726 = vunpack.c.l.s4 1934713408
    %v2727 = vunpack.c.0.s8 %v2726
    %v2728 = vperm.slane %v2722, %v2727
    %v2730 = vunpack.c.l.s4 1934713408
    %v2731 = vunpack.c.0.s8 %v2730
    %v2732 = vperm.slane %v2724, %v2731
    %v2733 = vrot.slane %v2716, 4
    %v2734 = vsel %vm293, %v2733, %v2692
    %v2735 = vrot.slane %v2692, 4
    %v2736 = vsel %vm293, %v2716, %v2735
    %v2737 = vrot.slane %v2720, 4
    %v2738 = vsel %vm293, %v2737, %v2696
    %v2739 = vrot.slane %v2696, 4
    %v2740 = vsel %vm293, %v2720, %v2739
    %v2741 = vrot.slane %v2728, 4
    %v2742 = vsel %vm293, %v2741, %v2704
    %v2743 = vrot.slane %v2704, 4
    %v2744 = vsel %vm293, %v2728, %v2743
    %v2745 = vrot.slane %v2732, 4
    %v2746 = vsel %vm293, %v2745, %v2708
    %v2747 = vrot.slane %v2708, 4
    %v2748 = vsel %vm293, %v2732, %v2747
    %v2749 = vsel %vm741, %v2402, -inf
    %2750 = vmax.xlane.f32.xlu0 %v2749
    %v2751 = vpop.xlane.xlu0 %2750
    %v2752 = vsel %vm2121, %v2512, -inf
    %2753 = vmax.xlane.f32.xlu0 %v2752
    %v2754 = vpop.xlane.xlu0 %2753
    %v2755 = vsel %vm741, %v2404, -inf
    %2756 = vmax.xlane.f32.xlu0 %v2755
    %v2757 = vpop.xlane.xlu0 %2756
    %v2758 = vsel %vm2121, %v2514, -inf
    %2759 = vmax.xlane.f32.xlu0 %v2758
    %v2760 = vpop.xlane.xlu0 %2759
    %v2761 = vsel %vm741, %v2406, -inf
    %2762 = vmax.xlane.f32.xlu0 %v2761
    %v2763 = vpop.xlane.xlu0 %2762
    %v2764 = vsel %vm2121, %v2516, -inf
    %2765 = vmax.xlane.f32.xlu0 %v2764
    %v2766 = vpop.xlane.xlu0 %2765
    %v2767 = vsel %vm741, %v2408, -inf
    %2768 = vmax.xlane.f32.xlu0 %v2767
    %v2769 = vpop.xlane.xlu0 %2768
    %v2770 = vsel %vm2121, %v2518, -inf
    %2771 = vmax.xlane.f32.xlu0 %v2770
    %v2772 = vpop.xlane.xlu0 %2771
    %v2773 = vsel %vm741, %v2410, -inf
    %2774 = vmax.xlane.f32.xlu0 %v2773
    %v2775 = vpop.xlane.xlu0 %2774
    %v2776 = vsel %vm2121, %v2520, -inf
    %2777 = vmax.xlane.f32.xlu0 %v2776
    %v2778 = vpop.xlane.xlu0 %2777
    %v2779 = vsel %vm741, %v2412, -inf
    %2780 = vmax.xlane.f32.xlu0 %v2779
    %v2781 = vpop.xlane.xlu0 %2780
    %v2782 = vsel %vm2121, %v2522, -inf
    %2783 = vmax.xlane.f32.xlu0 %v2782
    %v2784 = vpop.xlane.xlu0 %2783
    %v2785 = vsel %vm741, %v2414, -inf
    %2786 = vmax.xlane.f32.xlu0 %v2785
    %v2787 = vpop.xlane.xlu0 %2786
    %v2788 = vsel %vm2121, %v2524, -inf
    %2789 = vmax.xlane.f32.xlu0 %v2788
    %v2790 = vpop.xlane.xlu0 %2789
    %v2791 = vsel %vm741, %v2416, -inf
    %2792 = vmax.xlane.f32.xlu0 %v2791
    %v2793 = vpop.xlane.xlu0 %2792
    %v2794 = vsel %vm2121, %v2526, -inf
    %2795 = vmax.xlane.f32.xlu0 %v2794
    %v2796 = vpop.xlane.xlu0 %2795
    %v2797 = vsel %vm741, %v2624, -inf
    %2798 = vmax.xlane.f32.xlu0 %v2797
    %v2799 = vpop.xlane.xlu0 %2798
    %v2800 = vsel %vm2121, %v2734, -inf
    %2801 = vmax.xlane.f32.xlu0 %v2800
    %v2802 = vpop.xlane.xlu0 %2801
    %v2803 = vsel %vm741, %v2626, -inf
    %2804 = vmax.xlane.f32.xlu0 %v2803
    %v2805 = vpop.xlane.xlu0 %2804
    %v2806 = vsel %vm2121, %v2736, -inf
    %2807 = vmax.xlane.f32.xlu0 %v2806
    %v2808 = vpop.xlane.xlu0 %2807
    %v2809 = vsel %vm741, %v2628, -inf
    %2810 = vmax.xlane.f32.xlu0 %v2809
    %v2811 = vpop.xlane.xlu0 %2810
    %v2812 = vsel %vm2121, %v2738, -inf
    %2813 = vmax.xlane.f32.xlu0 %v2812
    %v2814 = vpop.xlane.xlu0 %2813
    %v2815 = vsel %vm741, %v2630, -inf
    %2816 = vmax.xlane.f32.xlu0 %v2815
    %v2817 = vpop.xlane.xlu0 %2816
    %v2818 = vsel %vm2121, %v2740, -inf
    %2819 = vmax.xlane.f32.xlu0 %v2818
    %v2820 = vpop.xlane.xlu0 %2819
    %v2821 = vsel %vm741, %v2632, -inf
    %2822 = vmax.xlane.f32.xlu0 %v2821
    %v2823 = vpop.xlane.xlu0 %2822
    %v2824 = vsel %vm2121, %v2742, -inf
    %2825 = vmax.xlane.f32.xlu0 %v2824
    %v2826 = vpop.xlane.xlu0 %2825
    %v2827 = vsel %vm741, %v2634, -inf
    %2828 = vmax.xlane.f32.xlu0 %v2827
    %v2829 = vpop.xlane.xlu0 %2828
    %v2830 = vsel %vm2121, %v2744, -inf
    %2831 = vmax.xlane.f32.xlu0 %v2830
    %v2832 = vpop.xlane.xlu0 %2831
    %v2833 = vsel %vm741, %v2636, -inf
    %2834 = vmax.xlane.f32.xlu0 %v2833
    %v2835 = vpop.xlane.xlu0 %2834
    %v2836 = vsel %vm2121, %v2746, -inf
    %2837 = vmax.xlane.f32.xlu0 %v2836
    %v2838 = vpop.xlane.xlu0 %2837
    %v2839 = vsel %vm741, %v2638, -inf
    %2840 = vmax.xlane.f32.xlu0 %v2839
    %v2841 = vpop.xlane.xlu0 %2840
    %v2842 = vsel %vm2121, %v2748, -inf
    %2843 = vmax.xlane.f32.xlu0 %v2842
    %v2844 = vpop.xlane.xlu0 %2843
    %v2877 = vlaneseq
    %v2878 = vand.u32 %v2877, 127
    %v2879 = vperm.slane %v744, %v2878
    %v2880 = vadd.s32 %v2878, 4294967288
    %v2881 = vperm.slane %v747, %v2880
    %vm2882 = vcmask 130112
    %v2883 = vsel %vm2882, %v2881, %v2879
    %v2884 = vperm.slane %v750, %v2878
    %v2885 = vperm.slane %v753, %v2880
    %v2886 = vsel %vm2882, %v2885, %v2884
    %v2887 = vperm.slane %v756, %v2878
    %v2888 = vperm.slane %v759, %v2880
    %v2889 = vsel %vm2882, %v2888, %v2887
    %v2890 = vperm.slane %v762, %v2878
    %v2891 = vperm.slane %v765, %v2880
    %v2892 = vsel %vm2882, %v2891, %v2890
    %v2893 = vperm.slane %v768, %v2878
    %v2894 = vperm.slane %v771, %v2880
    %v2895 = vsel %vm2882, %v2894, %v2893
    %v2896 = vperm.slane %v774, %v2878
    %v2897 = vperm.slane %v777, %v2880
    %v2898 = vsel %vm2882, %v2897, %v2896
    %v2899 = vperm.slane %v780, %v2878
    %v2900 = vperm.slane %v783, %v2880
    %v2901 = vsel %vm2882, %v2900, %v2899
    %v2902 = vperm.slane %v786, %v2878
    %v2903 = vperm.slane %v789, %v2880
    %v2904 = vsel %vm2882, %v2903, %v2902
    %v2905 = vperm.slane %v792, %v2878
    %v2906 = vperm.slane %v795, %v2880
    %v2907 = vsel %vm2882, %v2906, %v2905
    %v2908 = vperm.slane %v798, %v2878
    %v2909 = vperm.slane %v801, %v2880
    %v2910 = vsel %vm2882, %v2909, %v2908
    %v2911 = vperm.slane %v804, %v2878
    %v2912 = vperm.slane %v807, %v2880
    %v2913 = vsel %vm2882, %v2912, %v2911
    %v2914 = vperm.slane %v810, %v2878
    %v2915 = vperm.slane %v813, %v2880
    %v2916 = vsel %vm2882, %v2915, %v2914
    %v2917 = vperm.slane %v816, %v2878
    %v2918 = vperm.slane %v819, %v2880
    %v2919 = vsel %vm2882, %v2918, %v2917
    %v2920 = vperm.slane %v822, %v2878
    %v2921 = vperm.slane %v825, %v2880
    %v2922 = vsel %vm2882, %v2921, %v2920
    %v2923 = vperm.slane %v828, %v2878
    %v2924 = vperm.slane %v831, %v2880
    %v2925 = vsel %vm2882, %v2924, %v2923
    %v2926 = vperm.slane %v834, %v2878
    %v2927 = vperm.slane %v837, %v2880
    %v2928 = vsel %vm2882, %v2927, %v2926
    %vm2929 = vcmask 1041409
    %v2930 = vsel %vm2929, %v2886, %v2883
    %vm2931 = vcmask 1042434
    %v2932 = vsel %vm2931, %v2889, %v2930
    %vm2933 = vcmask 1043459
    %v2934 = vsel %vm2933, %v2892, %v2932
    %vm2935 = vcmask 1044484
    %v2936 = vsel %vm2935, %v2895, %v2934
    %vm2937 = vcmask 1045509
    %v2938 = vsel %vm2937, %v2898, %v2936
    %vm2939 = vcmask 1046534
    %v2940 = vsel %vm2939, %v2901, %v2938
    %vm2941 = vcmask 1047559
    %v2942 = vsel %vm2941, %v2904, %v2940
    %v2943 = vsel %vm2929, %v2910, %v2907
    %v2944 = vsel %vm2931, %v2913, %v2943
    %v2945 = vsel %vm2933, %v2916, %v2944
    %v2946 = vsel %vm2935, %v2919, %v2945
    %v2947 = vsel %vm2937, %v2922, %v2946
    %v2948 = vsel %vm2939, %v2925, %v2947
    %v2949 = vsel %vm2941, %v2928, %v2948
    %v2984 = vperm.slane %v2120, %v2878
    %v2985 = vperm.slane %v2124, %v2880
    %v2986 = vsel %vm2882, %v2985, %v2984
    %v2987 = vperm.slane %v2127, %v2878
    %v2988 = vperm.slane %v2130, %v2880
    %v2989 = vsel %vm2882, %v2988, %v2987
    %v2990 = vperm.slane %v2133, %v2878
    %v2991 = vperm.slane %v2136, %v2880
    %v2992 = vsel %vm2882, %v2991, %v2990
    %v2993 = vperm.slane %v2139, %v2878
    %v2994 = vperm.slane %v2142, %v2880
    %v2995 = vsel %vm2882, %v2994, %v2993
    %v2996 = vperm.slane %v2145, %v2878
    %v2997 = vperm.slane %v2148, %v2880
    %v2998 = vsel %vm2882, %v2997, %v2996
    %v2999 = vperm.slane %v2151, %v2878
    %v3000 = vperm.slane %v2154, %v2880
    %v3001 = vsel %vm2882, %v3000, %v2999
    %v3002 = vperm.slane %v2157, %v2878
    %v3003 = vperm.slane %v2160, %v2880
    %v3004 = vsel %vm2882, %v3003, %v3002
    %v3005 = vperm.slane %v2163, %v2878
    %v3006 = vperm.slane %v2166, %v2880
    %v3007 = vsel %vm2882, %v3006, %v3005
    %v3008 = vperm.slane %v2169, %v2878
    %v3009 = vperm.slane %v2172, %v2880
    %v3010 = vsel %vm2882, %v3009, %v3008
    %v3011 = vperm.slane %v2175, %v2878
    %v3012 = vperm.slane %v2178, %v2880
    %v3013 = vsel %vm2882, %v3012, %v3011
    %v3014 = vperm.slane %v2181, %v2878
    %v3015 = vperm.slane %v2184, %v2880
    %v3016 = vsel %vm2882, %v3015, %v3014
    %v3017 = vperm.slane %v2187, %v2878
    %v3018 = vperm.slane %v2190, %v2880
    %v3019 = vsel %vm2882, %v3018, %v3017
    %v3020 = vperm.slane %v2193, %v2878
    %v3021 = vperm.slane %v2196, %v2880
    %v3022 = vsel %vm2882, %v3021, %v3020
    %v3023 = vperm.slane %v2199, %v2878
    %v3024 = vperm.slane %v2202, %v2880
    %v3025 = vsel %vm2882, %v3024, %v3023
    %v3026 = vperm.slane %v2205, %v2878
    %v3027 = vperm.slane %v2208, %v2880
    %v3028 = vsel %vm2882, %v3027, %v3026
    %v3029 = vperm.slane %v2211, %v2878
    %v3030 = vperm.slane %v2214, %v2880
    %v3031 = vsel %vm2882, %v3030, %v3029
    %v3032 = vsel %vm2929, %v2989, %v2986
    %v3033 = vsel %vm2931, %v2992, %v3032
    %v3034 = vsel %vm2933, %v2995, %v3033
    %v3035 = vsel %vm2935, %v2998, %v3034
    %v3036 = vsel %vm2937, %v3001, %v3035
    %v3037 = vsel %vm2939, %v3004, %v3036
    %v3038 = vsel %vm2941, %v3007, %v3037
    %v3039 = vsel %vm2929, %v3013, %v3010
    %v3040 = vsel %vm2931, %v3016, %v3039
    %v3041 = vsel %vm2933, %v3019, %v3040
    %v3042 = vsel %vm2935, %v3022, %v3041
    %v3043 = vsel %vm2937, %v3025, %v3042
    %v3044 = vsel %vm2939, %v3028, %v3043
    %v3045 = vsel %vm2941, %v3031, %v3044
    %v3080 = vperm.slane %v1390, %v2878
    %v3081 = vperm.slane %v1393, %v2880
    %v3082 = vsel %vm2882, %v3081, %v3080
    %v3083 = vperm.slane %v1396, %v2878
    %v3084 = vperm.slane %v1399, %v2880
    %v3085 = vsel %vm2882, %v3084, %v3083
    %v3086 = vperm.slane %v1402, %v2878
    %v3087 = vperm.slane %v1405, %v2880
    %v3088 = vsel %vm2882, %v3087, %v3086
    %v3089 = vperm.slane %v1408, %v2878
    %v3090 = vperm.slane %v1411, %v2880
    %v3091 = vsel %vm2882, %v3090, %v3089
    %v3092 = vperm.slane %v1414, %v2878
    %v3093 = vperm.slane %v1417, %v2880
    %v3094 = vsel %vm2882, %v3093, %v3092
    %v3095 = vperm.slane %v1420, %v2878
    %v3096 = vperm.slane %v1423, %v2880
    %v3097 = vsel %vm2882, %v3096, %v3095
    %v3098 = vperm.slane %v1426, %v2878
    %v3099 = vperm.slane %v1429, %v2880
    %v3100 = vsel %vm2882, %v3099, %v3098
    %v3101 = vperm.slane %v1432, %v2878
    %v3102 = vperm.slane %v1435, %v2880
    %v3103 = vsel %vm2882, %v3102, %v3101
    %v3104 = vperm.slane %v1438, %v2878
    %v3105 = vperm.slane %v1441, %v2880
    %v3106 = vsel %vm2882, %v3105, %v3104
    %v3107 = vperm.slane %v1444, %v2878
    %v3108 = vperm.slane %v1447, %v2880
    %v3109 = vsel %vm2882, %v3108, %v3107
    %v3110 = vperm.slane %v1450, %v2878
    %v3111 = vperm.slane %v1453, %v2880
    %v3112 = vsel %vm2882, %v3111, %v3110
    %v3113 = vperm.slane %v1456, %v2878
    %v3114 = vperm.slane %v1459, %v2880
    %v3115 = vsel %vm2882, %v3114, %v3113
    %v3116 = vperm.slane %v1462, %v2878
    %v3117 = vperm.slane %v1465, %v2880
    %v3118 = vsel %vm2882, %v3117, %v3116
    %v3119 = vperm.slane %v1468, %v2878
    %v3120 = vperm.slane %v1471, %v2880
    %v3121 = vsel %vm2882, %v3120, %v3119
    %v3122 = vperm.slane %v1474, %v2878
    %v3123 = vperm.slane %v1477, %v2880
    %v3124 = vsel %vm2882, %v3123, %v3122
    %v3125 = vperm.slane %v1480, %v2878
    %v3126 = vperm.slane %v1483, %v2880
    %v3127 = vsel %vm2882, %v3126, %v3125
    %v3128 = vsel %vm2929, %v3085, %v3082
    %v3129 = vsel %vm2931, %v3088, %v3128
    %v3130 = vsel %vm2933, %v3091, %v3129
    %v3131 = vsel %vm2935, %v3094, %v3130
    %v3132 = vsel %vm2937, %v3097, %v3131
    %v3133 = vsel %vm2939, %v3100, %v3132
    %v3134 = vsel %vm2941, %v3103, %v3133
    %v3135 = vsel %vm2929, %v3109, %v3106
    %v3136 = vsel %vm2931, %v3112, %v3135
    %v3137 = vsel %vm2933, %v3115, %v3136
    %v3138 = vsel %vm2935, %v3118, %v3137
    %v3139 = vsel %vm2937, %v3121, %v3138
    %v3140 = vsel %vm2939, %v3124, %v3139
    %v3141 = vsel %vm2941, %v3127, %v3140
    %v3174 = vperm.slane %v2751, %v2878
    %v3175 = vperm.slane %v2754, %v2880
    %v3176 = vsel %vm2882, %v3175, %v3174
    %v3177 = vperm.slane %v2757, %v2878
    %v3178 = vperm.slane %v2760, %v2880
    %v3179 = vsel %vm2882, %v3178, %v3177
    %v3180 = vperm.slane %v2763, %v2878
    %v3181 = vperm.slane %v2766, %v2880
    %v3182 = vsel %vm2882, %v3181, %v3180
    %v3183 = vperm.slane %v2769, %v2878
    %v3184 = vperm.slane %v2772, %v2880
    %v3185 = vsel %vm2882, %v3184, %v3183
    %v3186 = vperm.slane %v2775, %v2878
    %v3187 = vperm.slane %v2778, %v2880
    %v3188 = vsel %vm2882, %v3187, %v3186
    %v3189 = vperm.slane %v2781, %v2878
    %v3190 = vperm.slane %v2784, %v2880
    %v3191 = vsel %vm2882, %v3190, %v3189
    %v3192 = vperm.slane %v2787, %v2878
    %v3193 = vperm.slane %v2790, %v2880
    %v3194 = vsel %vm2882, %v3193, %v3192
    %v3195 = vperm.slane %v2793, %v2878
    %v3196 = vperm.slane %v2796, %v2880
    %v3197 = vsel %vm2882, %v3196, %v3195
    %v3198 = vperm.slane %v2799, %v2878
    %v3199 = vperm.slane %v2802, %v2880
    %v3200 = vsel %vm2882, %v3199, %v3198
    %v3201 = vperm.slane %v2805, %v2878
    %v3202 = vperm.slane %v2808, %v2880
    %v3203 = vsel %vm2882, %v3202, %v3201
    %v3204 = vperm.slane %v2811, %v2878
    %v3205 = vperm.slane %v2814, %v2880
    %v3206 = vsel %vm2882, %v3205, %v3204
    %v3207 = vperm.slane %v2817, %v2878
    %v3208 = vperm.slane %v2820, %v2880
    %v3209 = vsel %vm2882, %v3208, %v3207
    %v3210 = vperm.slane %v2823, %v2878
    %v3211 = vperm.slane %v2826, %v2880
    %v3212 = vsel %vm2882, %v3211, %v3210
    %v3213 = vperm.slane %v2829, %v2878
    %v3214 = vperm.slane %v2832, %v2880
    %v3215 = vsel %vm2882, %v3214, %v3213
    %v3216 = vperm.slane %v2835, %v2878
    %v3217 = vperm.slane %v2838, %v2880
    %v3218 = vsel %vm2882, %v3217, %v3216
    %v3219 = vperm.slane %v2841, %v2878
    %v3220 = vperm.slane %v2844, %v2880
    %v3221 = vsel %vm2882, %v3220, %v3219
    %v3222 = vsel %vm2929, %v3179, %v3176
    %v3223 = vsel %vm2931, %v3182, %v3222
    %v3224 = vsel %vm2933, %v3185, %v3223
    %v3225 = vsel %vm2935, %v3188, %v3224
    %v3226 = vsel %vm2937, %v3191, %v3225
    %v3227 = vsel %vm2939, %v3194, %v3226
    %v3228 = vsel %vm2941, %v3197, %v3227
    %v3229 = vsel %vm2929, %v3203, %v3200
    %v3230 = vsel %vm2931, %v3206, %v3229
    %v3231 = vsel %vm2933, %v3209, %v3230
    %v3232 = vsel %vm2935, %v3212, %v3231
    %v3233 = vsel %vm2937, %v3215, %v3232
    %v3234 = vsel %vm2939, %v3218, %v3233
    %v3235 = vsel %vm2941, %v3221, %v3234
    %3236 = vrot.lane.b32.xlu0 %v3134, 15
    %v3237 = vpop.permute.xlu0 %3236
    %3238 = vrot.lane.b32.xlu0 %v3141, 15
    %v3239 = vpop.permute.xlu0 %3238
    %3240 = vrot.lane.b32.xlu0 %v3228, 15
    %v3241 = vpop.permute.xlu0 %3240
    %3242 = vrot.lane.b32.xlu0 %v3235, 15
    %v3243 = vpop.permute.xlu0 %3242
    %vm3248 = vcmask 121856
    %v3249 = vsel %vm3248, %v2942, %v3237
    %v3250 = vsel %vm3248, %v2949, %v3239
    %v3251 = vsel %vm3248, %v3038, %v3241
    %v3252 = vsel %vm3248, %v3045, %v3243
    %v3253 = vld [vmem:[%s5] sm:$0xff]
    %v3254 = vld [vmem:[%s5 + $0x8] sm:$0xff]
    %v3255 = vld [vmem:[%s6] sm:$0xff]
    %v3256 = vld [vmem:[%s6 + $0x8] sm:$0xff]
    %3261 = vrot.lane.b32.xlu0 %v3249, 127
    %v3262 = vpop.permute.xlu0 %3261
    %3263 = vrot.lane.b32.xlu0 %v3250, 127
    %v3264 = vpop.permute.xlu0 %3263
    %3265 = vrot.lane.b32.xlu0 %v3251, 127
    %v3266 = vpop.permute.xlu0 %3265
    %3267 = vrot.lane.b32.xlu0 %v3252, 127
    %v3268 = vpop.permute.xlu0 %3267
    %3273 = vrot.lane.b32.xlu0 %v3249, 126
    %v3274 = vpop.permute.xlu0 %3273
    %3275 = vrot.lane.b32.xlu0 %v3250, 126
    %v3276 = vpop.permute.xlu0 %3275
    %3277 = vrot.lane.b32.xlu0 %v3251, 126
    %v3278 = vpop.permute.xlu0 %3277
    %3279 = vrot.lane.b32.xlu0 %v3252, 126
    %v3280 = vpop.permute.xlu0 %3279
    %3285 = vrot.lane.b32.xlu0 %v3262, 126
    %v3286 = vpop.permute.xlu0 %3285
    %3287 = vrot.lane.b32.xlu0 %v3264, 126
    %v3288 = vpop.permute.xlu0 %3287
    %3289 = vrot.lane.b32.xlu0 %v3266, 126
    %v3290 = vpop.permute.xlu0 %3289
    %3291 = vrot.lane.b32.xlu0 %v3268, 126
    %v3292 = vpop.permute.xlu0 %3291
    %3293 = vrot.lane.b32.xlu0 %v3274, 126
    %v3294 = vpop.permute.xlu0 %3293
    %3295 = vrot.lane.b32.xlu0 %v3276, 126
    %v3296 = vpop.permute.xlu0 %3295
    %3297 = vrot.lane.b32.xlu0 %v3278, 126
    %v3298 = vpop.permute.xlu0 %3297
    %3299 = vrot.lane.b32.xlu0 %v3280, 126
    %v3300 = vpop.permute.xlu0 %3299
    %vm3309 = vcmask 105472
    %v3310 = vsel %vm3309, %v3249, %v3274
    %v3311 = vsel %vm3309, %v3250, %v3276
    %v3312 = vsel %vm3309, %v3251, %v3278
    %v3313 = vsel %vm3309, %v3252, %v3280
    %v3314 = vsel %vm3309, %v3262, %v3286
    %v3315 = vsel %vm3309, %v3264, %v3288
    %v3316 = vsel %vm3309, %v3266, %v3290
    %v3317 = vsel %vm3309, %v3268, %v3292
    %v3318 = vsel %vm3309, %v3274, %v3294
    %v3319 = vsel %vm3309, %v3276, %v3296
    %v3320 = vsel %vm3309, %v3278, %v3298
    %v3321 = vsel %vm3309, %v3280, %v3300
    %3323 = vset.pattern.permute.xlu0 0
    %3324 = vperm.xlu0 %3323, %v3255
    %v3325 = vpop.permute.xlu0 %3324
    %3328 = vset.pattern.permute.xlu0 0
    %3329 = vperm.xlu0 %3328, %v3256
    %v3330 = vpop.permute.xlu0 %3329
    %v3333 = vsel %vm166, %v3253, 0
    %v3336 = vsel %vm166, %v3254, 0
    %3338 = vmatpush.msra.mxu0 0.0
    %3339 = vmatpush.msra.mxu0 0.0
    %3340 = vmatpush.msra.mxu0 0.0
    %3341 = vmatpush.msra.mxu0 0.0
    %3342 = vmatpush.msra.mxu0 %v3321
    %3343 = vmatpush.msra.mxu0 %v3320
    %3344 = vmatpush.msra.mxu0 %v3319
    %3345 = vmatpush.msra.mxu0 %v3318
    %3346 = vmatpush.msra.mxu0 %v3317
    %3347 = vmatpush.msra.mxu0 %v3316
    %3348 = vmatpush.msra.mxu0 %v3315
    %3349 = vmatpush.msra.mxu0 %v3314
    %3350 = vmatpush.msra.mxu0 %v3313
    %3351 = vmatpush.msra.mxu0 %v3312
    %3352 = vmatpush.msra.mxu0 %v3311
    %3353 = vmatpush.msra.mxu0 %v3310
    %3354 = vmatmul.f32.gmra.mxu0 %v3333
    %v3355 = vpop.f32.mrf.mxu0
    %v3356 = vadd.f32 %v3325, %v3355
    %3357 = vmatmul.f32.gmra.mxu0 %v3336
    %v3358 = vpop.f32.mrf.mxu0
    %v3359 = vadd.f32 %v3330, %v3358
    %3360 = vdwg.mxu0
    %v3361 = vmax.f32 %v3356, 0.0
    %v3362 = vmax.f32 %v3359, 0.0
    %v3363 = vsel %vm3309, %v3361, -inf
    %v3364 = vsel %vm3309, %v3362, -inf
    %3367 = vrot.lane.b32.xlu0 %v3363, 125
    %v3368 = vpop.permute.xlu0 %3367
    %3369 = vrot.lane.b32.xlu0 %v3364, 125
    %v3370 = vpop.permute.xlu0 %3369
    %3373 = vrot.lane.b32.xlu0 %v3363, 122
    %v3374 = vpop.permute.xlu0 %3373
    %3375 = vrot.lane.b32.xlu0 %v3364, 122
    %v3376 = vpop.permute.xlu0 %3375
    %3379 = vrot.lane.b32.xlu0 %v3363, 119
    %v3380 = vpop.permute.xlu0 %3379
    %3381 = vrot.lane.b32.xlu0 %v3364, 119
    %v3382 = vpop.permute.xlu0 %3381
    %3385 = vrot.lane.b32.xlu0 %v3363, 116
    %v3386 = vpop.permute.xlu0 %3385
    %3387 = vrot.lane.b32.xlu0 %v3364, 116
    %v3388 = vpop.permute.xlu0 %3387
    %v3391 = vrot.slane %v3374, 4
    %v3392 = vsel %vm293, %v3391, %v3363
    %v3393 = vrot.slane %v3363, 4
    %v3394 = vsel %vm293, %v3374, %v3393
    %v3396 = vunpack.c.l.s4 1983009808
    %v3397 = vunpack.c.0.s8 %v3396
    %v3398 = vperm.slane %v3392, %v3397
    %v3400 = vunpack.c.l.s4 1983009808
    %v3401 = vunpack.c.0.s8 %v3400
    %v3402 = vperm.slane %v3394, %v3401
    %v3403 = vrot.slane %v3380, 4
    %v3404 = vsel %vm293, %v3403, %v3368
    %v3405 = vrot.slane %v3368, 4
    %v3406 = vsel %vm293, %v3380, %v3405
    %v3408 = vunpack.c.l.s4 1983009808
    %v3409 = vunpack.c.0.s8 %v3408
    %v3410 = vperm.slane %v3404, %v3409
    %v3412 = vunpack.c.l.s4 1983009808
    %v3413 = vunpack.c.0.s8 %v3412
    %v3414 = vperm.slane %v3406, %v3413
    %v3415 = vrot.slane %v3386, 4
    %v3416 = vsel %vm293, 0.0, %v3415
    %v3418 = vunpack.c.l.s4 1983009808
    %v3419 = vunpack.c.0.s8 %v3418
    %v3420 = vperm.slane %v3386, %v3419
    %v3422 = vunpack.c.l.s4 1983009808
    %v3423 = vunpack.c.0.s8 %v3422
    %v3424 = vperm.slane %v3416, %v3423
    %v3425 = vrot.slane %v3410, 4
    %v3426 = vsel %vm293, %v3425, %v3398
    %v3427 = vrot.slane %v3398, 4
    %v3428 = vsel %vm293, %v3410, %v3427
    %v3430 = vunpack.c.l.s4 1934713408
    %v3431 = vunpack.c.0.s8 %v3430
    %v3432 = vperm.slane %v3426, %v3431
    %v3434 = vunpack.c.l.s4 1934713408
    %v3435 = vunpack.c.0.s8 %v3434
    %v3436 = vperm.slane %v3428, %v3435
    %v3437 = vrot.slane %v3414, 4
    %v3438 = vsel %vm293, %v3437, %v3402
    %v3439 = vrot.slane %v3402, 4
    %v3440 = vsel %vm293, %v3414, %v3439
    %v3442 = vunpack.c.l.s4 1934713408
    %v3443 = vunpack.c.0.s8 %v3442
    %v3444 = vperm.slane %v3438, %v3443
    %v3446 = vunpack.c.l.s4 1934713408
    %v3447 = vunpack.c.0.s8 %v3446
    %v3448 = vperm.slane %v3440, %v3447
    %v3449 = vrot.slane %v3420, 4
    %v3450 = vsel %vm293, 0.0, %v3449
    %v3452 = vunpack.c.l.s4 1934713408
    %v3453 = vunpack.c.0.s8 %v3452
    %v3454 = vperm.slane %v3420, %v3453
    %v3456 = vunpack.c.l.s4 1934713408
    %v3457 = vunpack.c.0.s8 %v3456
    %v3458 = vperm.slane %v3450, %v3457
    %v3459 = vrot.slane %v3424, 4
    %v3460 = vsel %vm293, 0.0, %v3459
    %v3462 = vunpack.c.l.s4 1934713408
    %v3463 = vunpack.c.0.s8 %v3462
    %v3464 = vperm.slane %v3424, %v3463
    %v3466 = vunpack.c.l.s4 1934713408
    %v3467 = vunpack.c.0.s8 %v3466
    %v3468 = vperm.slane %v3460, %v3467
    %v3469 = vrot.slane %v3454, 4
    %v3470 = vsel %vm293, %v3469, %v3432
    %v3471 = vrot.slane %v3432, 4
    %v3472 = vsel %vm293, %v3454, %v3471
    %v3473 = vrot.slane %v3458, 4
    %v3474 = vsel %vm293, %v3473, %v3436
    %v3475 = vrot.slane %v3436, 4
    %v3476 = vsel %vm293, %v3458, %v3475
    %v3477 = vrot.slane %v3464, 4
    %v3478 = vsel %vm293, %v3477, %v3444
    %v3479 = vrot.slane %v3444, 4
    %v3480 = vsel %vm293, %v3464, %v3479
    %v3481 = vrot.slane %v3468, 4
    %v3482 = vsel %vm293, %v3481, %v3448
    %v3483 = vrot.slane %v3448, 4
    %v3484 = vsel %vm293, %v3468, %v3483
    %v3485 = vrot.slane %v3376, 4
    %v3486 = vsel %vm293, %v3485, %v3364
    %v3487 = vrot.slane %v3364, 4
    %v3488 = vsel %vm293, %v3376, %v3487
    %v3490 = vunpack.c.l.s4 1983009808
    %v3491 = vunpack.c.0.s8 %v3490
    %v3492 = vperm.slane %v3486, %v3491
    %v3494 = vunpack.c.l.s4 1983009808
    %v3495 = vunpack.c.0.s8 %v3494
    %v3496 = vperm.slane %v3488, %v3495
    %v3497 = vrot.slane %v3382, 4
    %v3498 = vsel %vm293, %v3497, %v3370
    %v3499 = vrot.slane %v3370, 4
    %v3500 = vsel %vm293, %v3382, %v3499
    %v3502 = vunpack.c.l.s4 1983009808
    %v3503 = vunpack.c.0.s8 %v3502
    %v3504 = vperm.slane %v3498, %v3503
    %v3506 = vunpack.c.l.s4 1983009808
    %v3507 = vunpack.c.0.s8 %v3506
    %v3508 = vperm.slane %v3500, %v3507
    %v3509 = vrot.slane %v3388, 4
    %v3510 = vsel %vm293, 0.0, %v3509
    %v3512 = vunpack.c.l.s4 1983009808
    %v3513 = vunpack.c.0.s8 %v3512
    %v3514 = vperm.slane %v3388, %v3513
    %v3516 = vunpack.c.l.s4 1983009808
    %v3517 = vunpack.c.0.s8 %v3516
    %v3518 = vperm.slane %v3510, %v3517
    %v3519 = vrot.slane %v3504, 4
    %v3520 = vsel %vm293, %v3519, %v3492
    %v3521 = vrot.slane %v3492, 4
    %v3522 = vsel %vm293, %v3504, %v3521
    %v3524 = vunpack.c.l.s4 1934713408
    %v3525 = vunpack.c.0.s8 %v3524
    %v3526 = vperm.slane %v3520, %v3525
    %v3528 = vunpack.c.l.s4 1934713408
    %v3529 = vunpack.c.0.s8 %v3528
    %v3530 = vperm.slane %v3522, %v3529
    %v3531 = vrot.slane %v3508, 4
    %v3532 = vsel %vm293, %v3531, %v3496
    %v3533 = vrot.slane %v3496, 4
    %v3534 = vsel %vm293, %v3508, %v3533
    %v3536 = vunpack.c.l.s4 1934713408
    %v3537 = vunpack.c.0.s8 %v3536
    %v3538 = vperm.slane %v3532, %v3537
    %v3540 = vunpack.c.l.s4 1934713408
    %v3541 = vunpack.c.0.s8 %v3540
    %v3542 = vperm.slane %v3534, %v3541
    %v3543 = vrot.slane %v3514, 4
    %v3544 = vsel %vm293, 0.0, %v3543
    %v3546 = vunpack.c.l.s4 1934713408
    %v3547 = vunpack.c.0.s8 %v3546
    %v3548 = vperm.slane %v3514, %v3547
    %v3550 = vunpack.c.l.s4 1934713408
    %v3551 = vunpack.c.0.s8 %v3550
    %v3552 = vperm.slane %v3544, %v3551
    %v3553 = vrot.slane %v3518, 4
    %v3554 = vsel %vm293, 0.0, %v3553
    %v3556 = vunpack.c.l.s4 1934713408
    %v3557 = vunpack.c.0.s8 %v3556
    %v3558 = vperm.slane %v3518, %v3557
    %v3560 = vunpack.c.l.s4 1934713408
    %v3561 = vunpack.c.0.s8 %v3560
    %v3562 = vperm.slane %v3554, %v3561
    %v3563 = vrot.slane %v3548, 4
    %v3564 = vsel %vm293, %v3563, %v3526
    %v3565 = vrot.slane %v3526, 4
    %v3566 = vsel %vm293, %v3548, %v3565
    %v3567 = vrot.slane %v3552, 4
    %v3568 = vsel %vm293, %v3567, %v3530
    %v3569 = vrot.slane %v3530, 4
    %v3570 = vsel %vm293, %v3552, %v3569
    %v3571 = vrot.slane %v3558, 4
    %v3572 = vsel %vm293, %v3571, %v3538
    %v3573 = vrot.slane %v3538, 4
    %v3574 = vsel %vm293, %v3558, %v3573
    %v3575 = vrot.slane %v3562, 4
    %v3576 = vsel %vm293, %v3575, %v3542
    %v3577 = vrot.slane %v3542, 4
    %v3578 = vsel %vm293, %v3562, %v3577
    %vm3579 = vcmask 20480
    %v3580 = vsel %vm3579, %v3470, -inf
    %3581 = vmax.xlane.f32.xlu0 %v3580
    %v3582 = vpop.xlane.xlu0 %3581
    %v3583 = vsel %vm3579, %v3472, -inf
    %3584 = vmax.xlane.f32.xlu0 %v3583
    %v3585 = vpop.xlane.xlu0 %3584
    %v3586 = vsel %vm3579, %v3474, -inf
    %3587 = vmax.xlane.f32.xlu0 %v3586
    %v3588 = vpop.xlane.xlu0 %3587
    %v3589 = vsel %vm3579, %v3476, -inf
    %3590 = vmax.xlane.f32.xlu0 %v3589
    %v3591 = vpop.xlane.xlu0 %3590
    %v3592 = vsel %vm3579, %v3478, -inf
    %3593 = vmax.xlane.f32.xlu0 %v3592
    %v3594 = vpop.xlane.xlu0 %3593
    %v3595 = vsel %vm3579, %v3480, -inf
    %3596 = vmax.xlane.f32.xlu0 %v3595
    %v3597 = vpop.xlane.xlu0 %3596
    %v3598 = vsel %vm3579, %v3482, -inf
    %3599 = vmax.xlane.f32.xlu0 %v3598
    %v3600 = vpop.xlane.xlu0 %3599
    %v3601 = vsel %vm3579, %v3484, -inf
    %3602 = vmax.xlane.f32.xlu0 %v3601
    %v3603 = vpop.xlane.xlu0 %3602
    %v3604 = vsel %vm3579, %v3564, -inf
    %3605 = vmax.xlane.f32.xlu0 %v3604
    %v3606 = vpop.xlane.xlu0 %3605
    %v3607 = vsel %vm3579, %v3566, -inf
    %3608 = vmax.xlane.f32.xlu0 %v3607
    %v3609 = vpop.xlane.xlu0 %3608
    %v3610 = vsel %vm3579, %v3568, -inf
    %3611 = vmax.xlane.f32.xlu0 %v3610
    %v3612 = vpop.xlane.xlu0 %3611
    %v3613 = vsel %vm3579, %v3570, -inf
    %3614 = vmax.xlane.f32.xlu0 %v3613
    %v3615 = vpop.xlane.xlu0 %3614
    %v3616 = vsel %vm3579, %v3572, -inf
    %3617 = vmax.xlane.f32.xlu0 %v3616
    %v3618 = vpop.xlane.xlu0 %3617
    %v3619 = vsel %vm3579, %v3574, -inf
    %3620 = vmax.xlane.f32.xlu0 %v3619
    %v3621 = vpop.xlane.xlu0 %3620
    %v3622 = vsel %vm3579, %v3576, -inf
    %3623 = vmax.xlane.f32.xlu0 %v3622
    %v3624 = vpop.xlane.xlu0 %3623
    %v3625 = vsel %vm3579, %v3578, -inf
    %3626 = vmax.xlane.f32.xlu0 %v3625
    %v3627 = vpop.xlane.xlu0 %3626
    %3630 = vrot.lane.b32.xlu0 %v3361, 115
    %v3631 = vpop.permute.xlu0 %3630
    %3632 = vrot.lane.b32.xlu0 %v3362, 115
    %v3633 = vpop.permute.xlu0 %3632
    %v3636 = vsel %vm3309, %v3631, -inf
    %v3637 = vsel %vm3309, %v3633, -inf
    %3640 = vrot.lane.b32.xlu0 %v3636, 125
    %v3641 = vpop.permute.xlu0 %3640
    %3642 = vrot.lane.b32.xlu0 %v3637, 125
    %v3643 = vpop.permute.xlu0 %3642
    %3646 = vrot.lane.b32.xlu0 %v3636, 122
    %v3647 = vpop.permute.xlu0 %3646
    %3648 = vrot.lane.b32.xlu0 %v3637, 122
    %v3649 = vpop.permute.xlu0 %3648
    %3652 = vrot.lane.b32.xlu0 %v3636, 119
    %v3653 = vpop.permute.xlu0 %3652
    %3654 = vrot.lane.b32.xlu0 %v3637, 119
    %v3655 = vpop.permute.xlu0 %3654
    %3658 = vrot.lane.b32.xlu0 %v3636, 116
    %v3659 = vpop.permute.xlu0 %3658
    %3660 = vrot.lane.b32.xlu0 %v3637, 116
    %v3661 = vpop.permute.xlu0 %3660
    %v3664 = vrot.slane %v3647, 4
    %v3665 = vsel %vm293, %v3664, %v3636
    %v3666 = vrot.slane %v3636, 4
    %v3667 = vsel %vm293, %v3647, %v3666
    %v3669 = vunpack.c.l.s4 1983009808
    %v3670 = vunpack.c.0.s8 %v3669
    %v3671 = vperm.slane %v3665, %v3670
    %v3673 = vunpack.c.l.s4 1983009808
    %v3674 = vunpack.c.0.s8 %v3673
    %v3675 = vperm.slane %v3667, %v3674
    %v3676 = vrot.slane %v3653, 4
    %v3677 = vsel %vm293, %v3676, %v3641
    %v3678 = vrot.slane %v3641, 4
    %v3679 = vsel %vm293, %v3653, %v3678
    %v3681 = vunpack.c.l.s4 1983009808
    %v3682 = vunpack.c.0.s8 %v3681
    %v3683 = vperm.slane %v3677, %v3682
    %v3685 = vunpack.c.l.s4 1983009808
    %v3686 = vunpack.c.0.s8 %v3685
    %v3687 = vperm.slane %v3679, %v3686
    %v3688 = vrot.slane %v3659, 4
    %v3689 = vsel %vm293, 0.0, %v3688
    %v3691 = vunpack.c.l.s4 1983009808
    %v3692 = vunpack.c.0.s8 %v3691
    %v3693 = vperm.slane %v3659, %v3692
    %v3695 = vunpack.c.l.s4 1983009808
    %v3696 = vunpack.c.0.s8 %v3695
    %v3697 = vperm.slane %v3689, %v3696
    %v3698 = vrot.slane %v3683, 4
    %v3699 = vsel %vm293, %v3698, %v3671
    %v3700 = vrot.slane %v3671, 4
    %v3701 = vsel %vm293, %v3683, %v3700
    %v3703 = vunpack.c.l.s4 1934713408
    %v3704 = vunpack.c.0.s8 %v3703
    %v3705 = vperm.slane %v3699, %v3704
    %v3707 = vunpack.c.l.s4 1934713408
    %v3708 = vunpack.c.0.s8 %v3707
    %v3709 = vperm.slane %v3701, %v3708
    %v3710 = vrot.slane %v3687, 4
    %v3711 = vsel %vm293, %v3710, %v3675
    %v3712 = vrot.slane %v3675, 4
    %v3713 = vsel %vm293, %v3687, %v3712
    %v3715 = vunpack.c.l.s4 1934713408
    %v3716 = vunpack.c.0.s8 %v3715
    %v3717 = vperm.slane %v3711, %v3716
    %v3719 = vunpack.c.l.s4 1934713408
    %v3720 = vunpack.c.0.s8 %v3719
    %v3721 = vperm.slane %v3713, %v3720
    %v3722 = vrot.slane %v3693, 4
    %v3723 = vsel %vm293, 0.0, %v3722
    %v3725 = vunpack.c.l.s4 1934713408
    %v3726 = vunpack.c.0.s8 %v3725
    %v3727 = vperm.slane %v3693, %v3726
    %v3729 = vunpack.c.l.s4 1934713408
    %v3730 = vunpack.c.0.s8 %v3729
    %v3731 = vperm.slane %v3723, %v3730
    %v3732 = vrot.slane %v3697, 4
    %v3733 = vsel %vm293, 0.0, %v3732
    %v3735 = vunpack.c.l.s4 1934713408
    %v3736 = vunpack.c.0.s8 %v3735
    %v3737 = vperm.slane %v3697, %v3736
    %v3739 = vunpack.c.l.s4 1934713408
    %v3740 = vunpack.c.0.s8 %v3739
    %v3741 = vperm.slane %v3733, %v3740
    %v3742 = vrot.slane %v3727, 4
    %v3743 = vsel %vm293, %v3742, %v3705
    %v3744 = vrot.slane %v3705, 4
    %v3745 = vsel %vm293, %v3727, %v3744
    %v3746 = vrot.slane %v3731, 4
    %v3747 = vsel %vm293, %v3746, %v3709
    %v3748 = vrot.slane %v3709, 4
    %v3749 = vsel %vm293, %v3731, %v3748
    %v3750 = vrot.slane %v3737, 4
    %v3751 = vsel %vm293, %v3750, %v3717
    %v3752 = vrot.slane %v3717, 4
    %v3753 = vsel %vm293, %v3737, %v3752
    %v3754 = vrot.slane %v3741, 4
    %v3755 = vsel %vm293, %v3754, %v3721
    %v3756 = vrot.slane %v3721, 4
    %v3757 = vsel %vm293, %v3741, %v3756
    %v3758 = vrot.slane %v3649, 4
    %v3759 = vsel %vm293, %v3758, %v3637
    %v3760 = vrot.slane %v3637, 4
    %v3761 = vsel %vm293, %v3649, %v3760
    %v3763 = vunpack.c.l.s4 1983009808
    %v3764 = vunpack.c.0.s8 %v3763
    %v3765 = vperm.slane %v3759, %v3764
    %v3767 = vunpack.c.l.s4 1983009808
    %v3768 = vunpack.c.0.s8 %v3767
    %v3769 = vperm.slane %v3761, %v3768
    %v3770 = vrot.slane %v3655, 4
    %v3771 = vsel %vm293, %v3770, %v3643
    %v3772 = vrot.slane %v3643, 4
    %v3773 = vsel %vm293, %v3655, %v3772
    %v3775 = vunpack.c.l.s4 1983009808
    %v3776 = vunpack.c.0.s8 %v3775
    %v3777 = vperm.slane %v3771, %v3776
    %v3779 = vunpack.c.l.s4 1983009808
    %v3780 = vunpack.c.0.s8 %v3779
    %v3781 = vperm.slane %v3773, %v3780
    %v3782 = vrot.slane %v3661, 4
    %v3783 = vsel %vm293, 0.0, %v3782
    %v3785 = vunpack.c.l.s4 1983009808
    %v3786 = vunpack.c.0.s8 %v3785
    %v3787 = vperm.slane %v3661, %v3786
    %v3789 = vunpack.c.l.s4 1983009808
    %v3790 = vunpack.c.0.s8 %v3789
    %v3791 = vperm.slane %v3783, %v3790
    %v3792 = vrot.slane %v3777, 4
    %v3793 = vsel %vm293, %v3792, %v3765
    %v3794 = vrot.slane %v3765, 4
    %v3795 = vsel %vm293, %v3777, %v3794
    %v3797 = vunpack.c.l.s4 1934713408
    %v3798 = vunpack.c.0.s8 %v3797
    %v3799 = vperm.slane %v3793, %v3798
    %v3801 = vunpack.c.l.s4 1934713408
    %v3802 = vunpack.c.0.s8 %v3801
    %v3803 = vperm.slane %v3795, %v3802
    %v3804 = vrot.slane %v3781, 4
    %v3805 = vsel %vm293, %v3804, %v3769
    %v3806 = vrot.slane %v3769, 4
    %v3807 = vsel %vm293, %v3781, %v3806
    %v3809 = vunpack.c.l.s4 1934713408
    %v3810 = vunpack.c.0.s8 %v3809
    %v3811 = vperm.slane %v3805, %v3810
    %v3813 = vunpack.c.l.s4 1934713408
    %v3814 = vunpack.c.0.s8 %v3813
    %v3815 = vperm.slane %v3807, %v3814
    %v3816 = vrot.slane %v3787, 4
    %v3817 = vsel %vm293, 0.0, %v3816
    %v3819 = vunpack.c.l.s4 1934713408
    %v3820 = vunpack.c.0.s8 %v3819
    %v3821 = vperm.slane %v3787, %v3820
    %v3823 = vunpack.c.l.s4 1934713408
    %v3824 = vunpack.c.0.s8 %v3823
    %v3825 = vperm.slane %v3817, %v3824
    %v3826 = vrot.slane %v3791, 4
    %v3827 = vsel %vm293, 0.0, %v3826
    %v3829 = vunpack.c.l.s4 1934713408
    %v3830 = vunpack.c.0.s8 %v3829
    %v3831 = vperm.slane %v3791, %v3830
    %v3833 = vunpack.c.l.s4 1934713408
    %v3834 = vunpack.c.0.s8 %v3833
    %v3835 = vperm.slane %v3827, %v3834
    %v3836 = vrot.slane %v3821, 4
    %v3837 = vsel %vm293, %v3836, %v3799
    %v3838 = vrot.slane %v3799, 4
    %v3839 = vsel %vm293, %v3821, %v3838
    %v3840 = vrot.slane %v3825, 4
    %v3841 = vsel %vm293, %v3840, %v3803
    %v3842 = vrot.slane %v3803, 4
    %v3843 = vsel %vm293, %v3825, %v3842
    %v3844 = vrot.slane %v3831, 4
    %v3845 = vsel %vm293, %v3844, %v3811
    %v3846 = vrot.slane %v3811, 4
    %v3847 = vsel %vm293, %v3831, %v3846
    %v3848 = vrot.slane %v3835, 4
    %v3849 = vsel %vm293, %v3848, %v3815
    %v3850 = vrot.slane %v3815, 4
    %v3851 = vsel %vm293, %v3835, %v3850
    %v3852 = vsel %vm3579, %v3743, -inf
    %3853 = vmax.xlane.f32.xlu0 %v3852
    %v3854 = vpop.xlane.xlu0 %3853
    %v3855 = vsel %vm3579, %v3745, -inf
    %3856 = vmax.xlane.f32.xlu0 %v3855
    %v3857 = vpop.xlane.xlu0 %3856
    %v3858 = vsel %vm3579, %v3747, -inf
    %3859 = vmax.xlane.f32.xlu0 %v3858
    %v3860 = vpop.xlane.xlu0 %3859
    %v3861 = vsel %vm3579, %v3749, -inf
    %3862 = vmax.xlane.f32.xlu0 %v3861
    %v3863 = vpop.xlane.xlu0 %3862
    %v3864 = vsel %vm3579, %v3751, -inf
    %3865 = vmax.xlane.f32.xlu0 %v3864
    %v3866 = vpop.xlane.xlu0 %3865
    %v3867 = vsel %vm3579, %v3753, -inf
    %3868 = vmax.xlane.f32.xlu0 %v3867
    %v3869 = vpop.xlane.xlu0 %3868
    %v3870 = vsel %vm3579, %v3755, -inf
    %3871 = vmax.xlane.f32.xlu0 %v3870
    %v3872 = vpop.xlane.xlu0 %3871
    %v3873 = vsel %vm3579, %v3757, -inf
    %3874 = vmax.xlane.f32.xlu0 %v3873
    %v3875 = vpop.xlane.xlu0 %3874
    %v3876 = vsel %vm3579, %v3837, -inf
    %3877 = vmax.xlane.f32.xlu0 %v3876
    %v3878 = vpop.xlane.xlu0 %3877
    %v3879 = vsel %vm3579, %v3839, -inf
    %3880 = vmax.xlane.f32.xlu0 %v3879
    %v3881 = vpop.xlane.xlu0 %3880
    %v3882 = vsel %vm3579, %v3841, -inf
    %3883 = vmax.xlane.f32.xlu0 %v3882
    %v3884 = vpop.xlane.xlu0 %3883
    %v3885 = vsel %vm3579, %v3843, -inf
    %3886 = vmax.xlane.f32.xlu0 %v3885
    %v3887 = vpop.xlane.xlu0 %3886
    %v3888 = vsel %vm3579, %v3845, -inf
    %3889 = vmax.xlane.f32.xlu0 %v3888
    %v3890 = vpop.xlane.xlu0 %3889
    %v3891 = vsel %vm3579, %v3847, -inf
    %3892 = vmax.xlane.f32.xlu0 %v3891
    %v3893 = vpop.xlane.xlu0 %3892
    %v3894 = vsel %vm3579, %v3849, -inf
    %3895 = vmax.xlane.f32.xlu0 %v3894
    %v3896 = vpop.xlane.xlu0 %3895
    %v3897 = vsel %vm3579, %v3851, -inf
    %3898 = vmax.xlane.f32.xlu0 %v3897
    %v3899 = vpop.xlane.xlu0 %3898
    %v3900 = vld [vmem:[%s7] sm:$0xff]
    %v3901 = vld [vmem:[%s7 + $0x8] sm:$0xff]
    %v3902 = vld [vmem:[%s8] sm:$0xff]
    %v3903 = vld [vmem:[%s8 + $0x8] sm:$0xff]
    %3904 = vrot.lane.b32.xlu0 %v3249, 125
    %v3905 = vpop.permute.xlu0 %3904
    %3906 = vrot.lane.b32.xlu0 %v3250, 125
    %v3907 = vpop.permute.xlu0 %3906
    %3908 = vrot.lane.b32.xlu0 %v3251, 125
    %v3909 = vpop.permute.xlu0 %3908
    %3910 = vrot.lane.b32.xlu0 %v3252, 125
    %v3911 = vpop.permute.xlu0 %3910
    %3916 = vrot.lane.b32.xlu0 %v3262, 125
    %v3917 = vpop.permute.xlu0 %3916
    %3918 = vrot.lane.b32.xlu0 %v3264, 125
    %v3919 = vpop.permute.xlu0 %3918
    %3920 = vrot.lane.b32.xlu0 %v3266, 125
    %v3921 = vpop.permute.xlu0 %3920
    %3922 = vrot.lane.b32.xlu0 %v3268, 125
    %v3923 = vpop.permute.xlu0 %3922
    %3924 = vrot.lane.b32.xlu0 %v3274, 125
    %v3925 = vpop.permute.xlu0 %3924
    %3926 = vrot.lane.b32.xlu0 %v3276, 125
    %v3927 = vpop.permute.xlu0 %3926
    %3928 = vrot.lane.b32.xlu0 %v3278, 125
    %v3929 = vpop.permute.xlu0 %3928
    %3930 = vrot.lane.b32.xlu0 %v3280, 125
    %v3931 = vpop.permute.xlu0 %3930
    %3932 = vrot.lane.b32.xlu0 %v3905, 125
    %v3933 = vpop.permute.xlu0 %3932
    %3934 = vrot.lane.b32.xlu0 %v3907, 125
    %v3935 = vpop.permute.xlu0 %3934
    %3936 = vrot.lane.b32.xlu0 %v3909, 125
    %v3937 = vpop.permute.xlu0 %3936
    %3938 = vrot.lane.b32.xlu0 %v3911, 125
    %v3939 = vpop.permute.xlu0 %3938
    %vm3952 = vcmask 97280
    %v3953 = vsel %vm3952, %v3249, %v3905
    %v3954 = vsel %vm3952, %v3250, %v3907
    %v3955 = vsel %vm3952, %v3251, %v3909
    %v3956 = vsel %vm3952, %v3252, %v3911
    %v3957 = vsel %vm3952, %v3262, %v3917
    %v3958 = vsel %vm3952, %v3264, %v3919
    %v3959 = vsel %vm3952, %v3266, %v3921
    %v3960 = vsel %vm3952, %v3268, %v3923
    %v3961 = vsel %vm3952, %v3274, %v3925
    %v3962 = vsel %vm3952, %v3276, %v3927
    %v3963 = vsel %vm3952, %v3278, %v3929
    %v3964 = vsel %vm3952, %v3280, %v3931
    %v3965 = vsel %vm3952, %v3905, %v3933
    %v3966 = vsel %vm3952, %v3907, %v3935
    %v3967 = vsel %vm3952, %v3909, %v3937
    %v3968 = vsel %vm3952, %v3911, %v3939
    %3970 = vset.pattern.permute.xlu0 0
    %3971 = vperm.xlu0 %3970, %v3902
    %v3972 = vpop.permute.xlu0 %3971
    %3975 = vset.pattern.permute.xlu0 0
    %3976 = vperm.xlu0 %3975, %v3903
    %v3977 = vpop.permute.xlu0 %3976
    %3979 = vmatpush.msra.mxu0 %v3968
    %3980 = vmatpush.msra.mxu0 %v3967
    %3981 = vmatpush.msra.mxu0 %v3966
    %3982 = vmatpush.msra.mxu0 %v3965
    %3983 = vmatpush.msra.mxu0 %v3964
    %3984 = vmatpush.msra.mxu0 %v3963
    %3985 = vmatpush.msra.mxu0 %v3962
    %3986 = vmatpush.msra.mxu0 %v3961
    %3987 = vmatpush.msra.mxu0 %v3960
    %3988 = vmatpush.msra.mxu0 %v3959
    %3989 = vmatpush.msra.mxu0 %v3958
    %3990 = vmatpush.msra.mxu0 %v3957
    %3991 = vmatpush.msra.mxu0 %v3956
    %3992 = vmatpush.msra.mxu0 %v3955
    %3993 = vmatpush.msra.mxu0 %v3954
    %3994 = vmatpush.msra.mxu0 %v3953
    %3995 = vmatmul.f32.gmra.mxu0 %v3900
    %v3996 = vpop.f32.mrf.mxu0
    %v3997 = vadd.f32 %v3972, %v3996
    %3998 = vmatmul.f32.gmra.mxu0 %v3901
    %v3999 = vpop.f32.mrf.mxu0
    %v4000 = vadd.f32 %v3977, %v3999
    %4001 = vdwg.mxu0
    %v4002 = vmax.f32 %v3997, 0.0
    %v4003 = vmax.f32 %v4000, 0.0
    %4006 = vrot.lane.b32.xlu0 %v4002, 125
    %v4007 = vpop.permute.xlu0 %4006
    %4008 = vrot.lane.b32.xlu0 %v4003, 125
    %v4009 = vpop.permute.xlu0 %4008
    %4012 = vrot.lane.b32.xlu0 %v4002, 122
    %v4013 = vpop.permute.xlu0 %4012
    %4014 = vrot.lane.b32.xlu0 %v4003, 122
    %v4015 = vpop.permute.xlu0 %4014
    %4018 = vrot.lane.b32.xlu0 %v4002, 119
    %v4019 = vpop.permute.xlu0 %4018
    %4020 = vrot.lane.b32.xlu0 %v4003, 119
    %v4021 = vpop.permute.xlu0 %4020
    %v4024 = vrot.slane %v4013, 4
    %v4025 = vsel %vm293, %v4024, %v4002
    %v4026 = vrot.slane %v4002, 4
    %v4027 = vsel %vm293, %v4013, %v4026
    %v4029 = vunpack.c.l.s4 1983009808
    %v4030 = vunpack.c.0.s8 %v4029
    %v4031 = vperm.slane %v4025, %v4030
    %v4033 = vunpack.c.l.s4 1983009808
    %v4034 = vunpack.c.0.s8 %v4033
    %v4035 = vperm.slane %v4027, %v4034
    %v4036 = vrot.slane %v4019, 4
    %v4037 = vsel %vm293, %v4036, %v4007
    %v4038 = vrot.slane %v4007, 4
    %v4039 = vsel %vm293, %v4019, %v4038
    %v4041 = vunpack.c.l.s4 1983009808
    %v4042 = vunpack.c.0.s8 %v4041
    %v4043 = vperm.slane %v4037, %v4042
    %v4045 = vunpack.c.l.s4 1983009808
    %v4046 = vunpack.c.0.s8 %v4045
    %v4047 = vperm.slane %v4039, %v4046
    %v4048 = vrot.slane %v4043, 4
    %v4049 = vsel %vm293, %v4048, %v4031
    %v4050 = vrot.slane %v4031, 4
    %v4051 = vsel %vm293, %v4043, %v4050
    %v4053 = vunpack.c.l.s4 1934713408
    %v4054 = vunpack.c.0.s8 %v4053
    %v4055 = vperm.slane %v4049, %v4054
    %v4057 = vunpack.c.l.s4 1934713408
    %v4058 = vunpack.c.0.s8 %v4057
    %v4059 = vperm.slane %v4051, %v4058
    %v4060 = vrot.slane %v4047, 4
    %v4061 = vsel %vm293, %v4060, %v4035
    %v4062 = vrot.slane %v4035, 4
    %v4063 = vsel %vm293, %v4047, %v4062
    %v4065 = vunpack.c.l.s4 1934713408
    %v4066 = vunpack.c.0.s8 %v4065
    %v4067 = vperm.slane %v4061, %v4066
    %v4069 = vunpack.c.l.s4 1934713408
    %v4070 = vunpack.c.0.s8 %v4069
    %v4071 = vperm.slane %v4063, %v4070
    %v4072 = vrot.slane %v4055, 4
    %v4073 = vsel %vm293, 0.0, %v4072
    %v4074 = vrot.slane %v4059, 4
    %v4075 = vsel %vm293, 0.0, %v4074
    %v4076 = vrot.slane %v4067, 4
    %v4077 = vsel %vm293, 0.0, %v4076
    %v4078 = vrot.slane %v4071, 4
    %v4079 = vsel %vm293, 0.0, %v4078
    %v4080 = vrot.slane %v4015, 4
    %v4081 = vsel %vm293, %v4080, %v4003
    %v4082 = vrot.slane %v4003, 4
    %v4083 = vsel %vm293, %v4015, %v4082
    %v4085 = vunpack.c.l.s4 1983009808
    %v4086 = vunpack.c.0.s8 %v4085
    %v4087 = vperm.slane %v4081, %v4086
    %v4089 = vunpack.c.l.s4 1983009808
    %v4090 = vunpack.c.0.s8 %v4089
    %v4091 = vperm.slane %v4083, %v4090
    %v4092 = vrot.slane %v4021, 4
    %v4093 = vsel %vm293, %v4092, %v4009
    %v4094 = vrot.slane %v4009, 4
    %v4095 = vsel %vm293, %v4021, %v4094
    %v4097 = vunpack.c.l.s4 1983009808
    %v4098 = vunpack.c.0.s8 %v4097
    %v4099 = vperm.slane %v4093, %v4098
    %v4101 = vunpack.c.l.s4 1983009808
    %v4102 = vunpack.c.0.s8 %v4101
    %v4103 = vperm.slane %v4095, %v4102
    %v4104 = vrot.slane %v4099, 4
    %v4105 = vsel %vm293, %v4104, %v4087
    %v4106 = vrot.slane %v4087, 4
    %v4107 = vsel %vm293, %v4099, %v4106
    %v4109 = vunpack.c.l.s4 1934713408
    %v4110 = vunpack.c.0.s8 %v4109
    %v4111 = vperm.slane %v4105, %v4110
    %v4113 = vunpack.c.l.s4 1934713408
    %v4114 = vunpack.c.0.s8 %v4113
    %v4115 = vperm.slane %v4107, %v4114
    %v4116 = vrot.slane %v4103, 4
    %v4117 = vsel %vm293, %v4116, %v4091
    %v4118 = vrot.slane %v4091, 4
    %v4119 = vsel %vm293, %v4103, %v4118
    %v4121 = vunpack.c.l.s4 1934713408
    %v4122 = vunpack.c.0.s8 %v4121
    %v4123 = vperm.slane %v4117, %v4122
    %v4125 = vunpack.c.l.s4 1934713408
    %v4126 = vunpack.c.0.s8 %v4125
    %v4127 = vperm.slane %v4119, %v4126
    %v4128 = vrot.slane %v4111, 4
    %v4129 = vsel %vm293, 0.0, %v4128
    %v4130 = vrot.slane %v4115, 4
    %v4131 = vsel %vm293, 0.0, %v4130
    %v4132 = vrot.slane %v4123, 4
    %v4133 = vsel %vm293, 0.0, %v4132
    %v4134 = vrot.slane %v4127, 4
    %v4135 = vsel %vm293, 0.0, %v4134
    %vm4136 = vcmask 19456
    %v4137 = vsel %vm4136, %v4055, -inf
    %4138 = vmax.xlane.f32.xlu0 %v4137
    %v4139 = vpop.xlane.xlu0 %4138
    %v4140 = vsel %vm4136, %v4073, -inf
    %4141 = vmax.xlane.f32.xlu0 %v4140
    %v4142 = vpop.xlane.xlu0 %4141
    %v4143 = vsel %vm4136, %v4059, -inf
    %4144 = vmax.xlane.f32.xlu0 %v4143
    %v4145 = vpop.xlane.xlu0 %4144
    %v4146 = vsel %vm4136, %v4075, -inf
    %4147 = vmax.xlane.f32.xlu0 %v4146
    %v4148 = vpop.xlane.xlu0 %4147
    %v4149 = vsel %vm4136, %v4067, -inf
    %4150 = vmax.xlane.f32.xlu0 %v4149
    %v4151 = vpop.xlane.xlu0 %4150
    %v4152 = vsel %vm4136, %v4077, -inf
    %4153 = vmax.xlane.f32.xlu0 %v4152
    %v4154 = vpop.xlane.xlu0 %4153
    %v4155 = vsel %vm4136, %v4071, -inf
    %4156 = vmax.xlane.f32.xlu0 %v4155
    %v4157 = vpop.xlane.xlu0 %4156
    %v4158 = vsel %vm4136, %v4079, -inf
    %4159 = vmax.xlane.f32.xlu0 %v4158
    %v4160 = vpop.xlane.xlu0 %4159
    %v4161 = vsel %vm4136, %v4111, -inf
    %4162 = vmax.xlane.f32.xlu0 %v4161
    %v4163 = vpop.xlane.xlu0 %4162
    %v4164 = vsel %vm4136, %v4129, -inf
    %4165 = vmax.xlane.f32.xlu0 %v4164
    %v4166 = vpop.xlane.xlu0 %4165
    %v4167 = vsel %vm4136, %v4115, -inf
    %4168 = vmax.xlane.f32.xlu0 %v4167
    %v4169 = vpop.xlane.xlu0 %4168
    %v4170 = vsel %vm4136, %v4131, -inf
    %4171 = vmax.xlane.f32.xlu0 %v4170
    %v4172 = vpop.xlane.xlu0 %4171
    %v4173 = vsel %vm4136, %v4123, -inf
    %4174 = vmax.xlane.f32.xlu0 %v4173
    %v4175 = vpop.xlane.xlu0 %4174
    %v4176 = vsel %vm4136, %v4133, -inf
    %4177 = vmax.xlane.f32.xlu0 %v4176
    %v4178 = vpop.xlane.xlu0 %4177
    %v4179 = vsel %vm4136, %v4127, -inf
    %4180 = vmax.xlane.f32.xlu0 %v4179
    %v4181 = vpop.xlane.xlu0 %4180
    %v4182 = vsel %vm4136, %v4135, -inf
    %4183 = vmax.xlane.f32.xlu0 %v4182
    %v4184 = vpop.xlane.xlu0 %4183
    %4185 = vrot.lane.b32.xlu0 %v4002, 116
    %v4186 = vpop.permute.xlu0 %4185
    %4187 = vrot.lane.b32.xlu0 %v4003, 116
    %v4188 = vpop.permute.xlu0 %4187
    %4189 = vrot.lane.b32.xlu0 %v4007, 116
    %v4190 = vpop.permute.xlu0 %4189
    %4191 = vrot.lane.b32.xlu0 %v4009, 116
    %v4192 = vpop.permute.xlu0 %4191
    %4193 = vrot.lane.b32.xlu0 %v4013, 116
    %v4194 = vpop.permute.xlu0 %4193
    %4195 = vrot.lane.b32.xlu0 %v4015, 116
    %v4196 = vpop.permute.xlu0 %4195
    %4197 = vrot.lane.b32.xlu0 %v4019, 116
    %v4198 = vpop.permute.xlu0 %4197
    %4199 = vrot.lane.b32.xlu0 %v4021, 116
    %v4200 = vpop.permute.xlu0 %4199
    %v4209 = vrot.slane %v4194, 4
    %v4210 = vsel %vm293, %v4209, %v4186
    %v4211 = vrot.slane %v4186, 4
    %v4212 = vsel %vm293, %v4194, %v4211
    %v4214 = vunpack.c.l.s4 1983009808
    %v4215 = vunpack.c.0.s8 %v4214
    %v4216 = vperm.slane %v4210, %v4215
    %v4218 = vunpack.c.l.s4 1983009808
    %v4219 = vunpack.c.0.s8 %v4218
    %v4220 = vperm.slane %v4212, %v4219
    %v4221 = vrot.slane %v4198, 4
    %v4222 = vsel %vm293, %v4221, %v4190
    %v4223 = vrot.slane %v4190, 4
    %v4224 = vsel %vm293, %v4198, %v4223
    %v4226 = vunpack.c.l.s4 1983009808
    %v4227 = vunpack.c.0.s8 %v4226
    %v4228 = vperm.slane %v4222, %v4227
    %v4230 = vunpack.c.l.s4 1983009808
    %v4231 = vunpack.c.0.s8 %v4230
    %v4232 = vperm.slane %v4224, %v4231
    %v4233 = vrot.slane %v4228, 4
    %v4234 = vsel %vm293, %v4233, %v4216
    %v4235 = vrot.slane %v4216, 4
    %v4236 = vsel %vm293, %v4228, %v4235
    %v4238 = vunpack.c.l.s4 1934713408
    %v4239 = vunpack.c.0.s8 %v4238
    %v4240 = vperm.slane %v4234, %v4239
    %v4242 = vunpack.c.l.s4 1934713408
    %v4243 = vunpack.c.0.s8 %v4242
    %v4244 = vperm.slane %v4236, %v4243
    %v4245 = vrot.slane %v4232, 4
    %v4246 = vsel %vm293, %v4245, %v4220
    %v4247 = vrot.slane %v4220, 4
    %v4248 = vsel %vm293, %v4232, %v4247
    %v4250 = vunpack.c.l.s4 1934713408
    %v4251 = vunpack.c.0.s8 %v4250
    %v4252 = vperm.slane %v4246, %v4251
    %v4254 = vunpack.c.l.s4 1934713408
    %v4255 = vunpack.c.0.s8 %v4254
    %v4256 = vperm.slane %v4248, %v4255
    %v4257 = vrot.slane %v4240, 4
    %v4258 = vsel %vm293, 0.0, %v4257
    %v4259 = vrot.slane %v4244, 4
    %v4260 = vsel %vm293, 0.0, %v4259
    %v4261 = vrot.slane %v4252, 4
    %v4262 = vsel %vm293, 0.0, %v4261
    %v4263 = vrot.slane %v4256, 4
    %v4264 = vsel %vm293, 0.0, %v4263
    %v4265 = vrot.slane %v4196, 4
    %v4266 = vsel %vm293, %v4265, %v4188
    %v4267 = vrot.slane %v4188, 4
    %v4268 = vsel %vm293, %v4196, %v4267
    %v4270 = vunpack.c.l.s4 1983009808
    %v4271 = vunpack.c.0.s8 %v4270
    %v4272 = vperm.slane %v4266, %v4271
    %v4274 = vunpack.c.l.s4 1983009808
    %v4275 = vunpack.c.0.s8 %v4274
    %v4276 = vperm.slane %v4268, %v4275
    %v4277 = vrot.slane %v4200, 4
    %v4278 = vsel %vm293, %v4277, %v4192
    %v4279 = vrot.slane %v4192, 4
    %v4280 = vsel %vm293, %v4200, %v4279
    %v4282 = vunpack.c.l.s4 1983009808
    %v4283 = vunpack.c.0.s8 %v4282
    %v4284 = vperm.slane %v4278, %v4283
    %v4286 = vunpack.c.l.s4 1983009808
    %v4287 = vunpack.c.0.s8 %v4286
    %v4288 = vperm.slane %v4280, %v4287
    %v4289 = vrot.slane %v4284, 4
    %v4290 = vsel %vm293, %v4289, %v4272
    %v4291 = vrot.slane %v4272, 4
    %v4292 = vsel %vm293, %v4284, %v4291
    %v4294 = vunpack.c.l.s4 1934713408
    %v4295 = vunpack.c.0.s8 %v4294
    %v4296 = vperm.slane %v4290, %v4295
    %v4298 = vunpack.c.l.s4 1934713408
    %v4299 = vunpack.c.0.s8 %v4298
    %v4300 = vperm.slane %v4292, %v4299
    %v4301 = vrot.slane %v4288, 4
    %v4302 = vsel %vm293, %v4301, %v4276
    %v4303 = vrot.slane %v4276, 4
    %v4304 = vsel %vm293, %v4288, %v4303
    %v4306 = vunpack.c.l.s4 1934713408
    %v4307 = vunpack.c.0.s8 %v4306
    %v4308 = vperm.slane %v4302, %v4307
    %v4310 = vunpack.c.l.s4 1934713408
    %v4311 = vunpack.c.0.s8 %v4310
    %v4312 = vperm.slane %v4304, %v4311
    %v4313 = vrot.slane %v4296, 4
    %v4314 = vsel %vm293, 0.0, %v4313
    %v4315 = vrot.slane %v4300, 4
    %v4316 = vsel %vm293, 0.0, %v4315
    %v4317 = vrot.slane %v4308, 4
    %v4318 = vsel %vm293, 0.0, %v4317
    %v4319 = vrot.slane %v4312, 4
    %v4320 = vsel %vm293, 0.0, %v4319
    %v4321 = vsel %vm4136, %v4240, -inf
    %4322 = vmax.xlane.f32.xlu0 %v4321
    %v4323 = vpop.xlane.xlu0 %4322
    %v4324 = vsel %vm4136, %v4258, -inf
    %4325 = vmax.xlane.f32.xlu0 %v4324
    %v4326 = vpop.xlane.xlu0 %4325
    %v4327 = vsel %vm4136, %v4244, -inf
    %4328 = vmax.xlane.f32.xlu0 %v4327
    %v4329 = vpop.xlane.xlu0 %4328
    %v4330 = vsel %vm4136, %v4260, -inf
    %4331 = vmax.xlane.f32.xlu0 %v4330
    %v4332 = vpop.xlane.xlu0 %4331
    %v4333 = vsel %vm4136, %v4252, -inf
    %4334 = vmax.xlane.f32.xlu0 %v4333
    %v4335 = vpop.xlane.xlu0 %4334
    %v4336 = vsel %vm4136, %v4262, -inf
    %4337 = vmax.xlane.f32.xlu0 %v4336
    %v4338 = vpop.xlane.xlu0 %4337
    %v4339 = vsel %vm4136, %v4256, -inf
    %4340 = vmax.xlane.f32.xlu0 %v4339
    %v4341 = vpop.xlane.xlu0 %4340
    %v4342 = vsel %vm4136, %v4264, -inf
    %4343 = vmax.xlane.f32.xlu0 %v4342
    %v4344 = vpop.xlane.xlu0 %4343
    %v4345 = vsel %vm4136, %v4296, -inf
    %4346 = vmax.xlane.f32.xlu0 %v4345
    %v4347 = vpop.xlane.xlu0 %4346
    %v4348 = vsel %vm4136, %v4314, -inf
    %4349 = vmax.xlane.f32.xlu0 %v4348
    %v4350 = vpop.xlane.xlu0 %4349
    %v4351 = vsel %vm4136, %v4300, -inf
    %4352 = vmax.xlane.f32.xlu0 %v4351
    %v4353 = vpop.xlane.xlu0 %4352
    %v4354 = vsel %vm4136, %v4316, -inf
    %4355 = vmax.xlane.f32.xlu0 %v4354
    %v4356 = vpop.xlane.xlu0 %4355
    %v4357 = vsel %vm4136, %v4308, -inf
    %4358 = vmax.xlane.f32.xlu0 %v4357
    %v4359 = vpop.xlane.xlu0 %4358
    %v4360 = vsel %vm4136, %v4318, -inf
    %4361 = vmax.xlane.f32.xlu0 %v4360
    %v4362 = vpop.xlane.xlu0 %4361
    %v4363 = vsel %vm4136, %v4312, -inf
    %4364 = vmax.xlane.f32.xlu0 %v4363
    %v4365 = vpop.xlane.xlu0 %4364
    %v4366 = vsel %vm4136, %v4320, -inf
    %4367 = vmax.xlane.f32.xlu0 %v4366
    %v4368 = vpop.xlane.xlu0 %4367
    %v4385 = vperm.slane %v3582, %v2878
    %v4386 = vperm.slane %v3585, %v2878
    %v4387 = vperm.slane %v3588, %v2878
    %v4388 = vperm.slane %v3591, %v2878
    %v4389 = vperm.slane %v3594, %v2878
    %v4390 = vperm.slane %v3597, %v2878
    %v4391 = vperm.slane %v3600, %v2878
    %v4392 = vperm.slane %v3603, %v2878
    %v4393 = vperm.slane %v3606, %v2878
    %v4394 = vperm.slane %v3609, %v2878
    %v4395 = vperm.slane %v3612, %v2878
    %v4396 = vperm.slane %v3615, %v2878
    %v4397 = vperm.slane %v3618, %v2878
    %v4398 = vperm.slane %v3621, %v2878
    %v4399 = vperm.slane %v3624, %v2878
    %v4400 = vperm.slane %v3627, %v2878
    %v4401 = vsel %vm2929, %v4386, %v4385
    %v4402 = vsel %vm2931, %v4387, %v4401
    %v4403 = vsel %vm2933, %v4388, %v4402
    %v4404 = vsel %vm2935, %v4389, %v4403
    %v4405 = vsel %vm2937, %v4390, %v4404
    %v4406 = vsel %vm2939, %v4391, %v4405
    %v4407 = vsel %vm2941, %v4392, %v4406
    %v4408 = vsel %vm2929, %v4394, %v4393
    %v4409 = vsel %vm2931, %v4395, %v4408
    %v4410 = vsel %vm2933, %v4396, %v4409
    %v4411 = vsel %vm2935, %v4397, %v4410
    %v4412 = vsel %vm2937, %v4398, %v4411
    %v4413 = vsel %vm2939, %v4399, %v4412
    %v4414 = vsel %vm2941, %v4400, %v4413
    %v4433 = vperm.slane %v4139, %v2878
    %v4434 = vperm.slane %v4142, %v2878
    %v4435 = vperm.slane %v4145, %v2878
    %v4436 = vperm.slane %v4148, %v2878
    %v4437 = vperm.slane %v4151, %v2878
    %v4438 = vperm.slane %v4154, %v2878
    %v4439 = vperm.slane %v4157, %v2878
    %v4440 = vperm.slane %v4160, %v2878
    %v4441 = vperm.slane %v4163, %v2878
    %v4442 = vperm.slane %v4166, %v2878
    %v4443 = vperm.slane %v4169, %v2878
    %v4444 = vperm.slane %v4172, %v2878
    %v4445 = vperm.slane %v4175, %v2878
    %v4446 = vperm.slane %v4178, %v2878
    %v4447 = vperm.slane %v4181, %v2878
    %v4448 = vperm.slane %v4184, %v2878
    %v4449 = vsel %vm2929, %v4434, %v4433
    %v4450 = vsel %vm2931, %v4435, %v4449
    %v4451 = vsel %vm2933, %v4436, %v4450
    %v4452 = vsel %vm2935, %v4437, %v4451
    %v4453 = vsel %vm2937, %v4438, %v4452
    %v4454 = vsel %vm2939, %v4439, %v4453
    %v4455 = vsel %vm2941, %v4440, %v4454
    %v4456 = vsel %vm2929, %v4442, %v4441
    %v4457 = vsel %vm2931, %v4443, %v4456
    %v4458 = vsel %vm2933, %v4444, %v4457
    %v4459 = vsel %vm2935, %v4445, %v4458
    %v4460 = vsel %vm2937, %v4446, %v4459
    %v4461 = vsel %vm2939, %v4447, %v4460
    %v4462 = vsel %vm2941, %v4448, %v4461
    %v4481 = vperm.slane %v3854, %v2878
    %v4482 = vperm.slane %v3857, %v2878
    %v4483 = vperm.slane %v3860, %v2878
    %v4484 = vperm.slane %v3863, %v2878
    %v4485 = vperm.slane %v3866, %v2878
    %v4486 = vperm.slane %v3869, %v2878
    %v4487 = vperm.slane %v3872, %v2878
    %v4488 = vperm.slane %v3875, %v2878
    %v4489 = vperm.slane %v3878, %v2878
    %v4490 = vperm.slane %v3881, %v2878
    %v4491 = vperm.slane %v3884, %v2878
    %v4492 = vperm.slane %v3887, %v2878
    %v4493 = vperm.slane %v3890, %v2878
    %v4494 = vperm.slane %v3893, %v2878
    %v4495 = vperm.slane %v3896, %v2878
    %v4496 = vperm.slane %v3899, %v2878
    %v4497 = vsel %vm2929, %v4482, %v4481
    %v4498 = vsel %vm2931, %v4483, %v4497
    %v4499 = vsel %vm2933, %v4484, %v4498
    %v4500 = vsel %vm2935, %v4485, %v4499
    %v4501 = vsel %vm2937, %v4486, %v4500
    %v4502 = vsel %vm2939, %v4487, %v4501
    %v4503 = vsel %vm2941, %v4488, %v4502
    %v4504 = vsel %vm2929, %v4490, %v4489
    %v4505 = vsel %vm2931, %v4491, %v4504
    %v4506 = vsel %vm2933, %v4492, %v4505
    %v4507 = vsel %vm2935, %v4493, %v4506
    %v4508 = vsel %vm2937, %v4494, %v4507
    %v4509 = vsel %vm2939, %v4495, %v4508
    %v4510 = vsel %vm2941, %v4496, %v4509
    %v4527 = vperm.slane %v4323, %v2878
    %v4528 = vperm.slane %v4326, %v2878
    %v4529 = vperm.slane %v4329, %v2878
    %v4530 = vperm.slane %v4332, %v2878
    %v4531 = vperm.slane %v4335, %v2878
    %v4532 = vperm.slane %v4338, %v2878
    %v4533 = vperm.slane %v4341, %v2878
    %v4534 = vperm.slane %v4344, %v2878
    %v4535 = vperm.slane %v4347, %v2878
    %v4536 = vperm.slane %v4350, %v2878
    %v4537 = vperm.slane %v4353, %v2878
    %v4538 = vperm.slane %v4356, %v2878
    %v4539 = vperm.slane %v4359, %v2878
    %v4540 = vperm.slane %v4362, %v2878
    %v4541 = vperm.slane %v4365, %v2878
    %v4542 = vperm.slane %v4368, %v2878
    %v4543 = vsel %vm2929, %v4528, %v4527
    %v4544 = vsel %vm2931, %v4529, %v4543
    %v4545 = vsel %vm2933, %v4530, %v4544
    %v4546 = vsel %vm2935, %v4531, %v4545
    %v4547 = vsel %vm2937, %v4532, %v4546
    %v4548 = vsel %vm2939, %v4533, %v4547
    %v4549 = vsel %vm2941, %v4534, %v4548
    %v4550 = vsel %vm2929, %v4536, %v4535
    %v4551 = vsel %vm2931, %v4537, %v4550
    %v4552 = vsel %vm2933, %v4538, %v4551
    %v4553 = vsel %vm2935, %v4539, %v4552
    %v4554 = vsel %vm2937, %v4540, %v4553
    %v4555 = vsel %vm2939, %v4541, %v4554
    %v4556 = vsel %vm2941, %v4542, %v4555
    %4557 = vrot.lane.b32.xlu0 %v4503, 4
    %v4558 = vpop.permute.xlu0 %4557
    %4559 = vrot.lane.b32.xlu0 %v4510, 4
    %v4560 = vpop.permute.xlu0 %4559
    %4561 = vrot.lane.b32.xlu0 %v4549, 4
    %v4562 = vpop.permute.xlu0 %4561
    %4563 = vrot.lane.b32.xlu0 %v4556, 4
    %v4564 = vpop.permute.xlu0 %4563
    %vm4569 = vcmask 31744
    %v4570 = vsel %vm4569, %v4407, %v4558
    %v4571 = vsel %vm4569, %v4414, %v4560
    %v4572 = vsel %vm4569, %v4455, %v4562
    %v4573 = vsel %vm4569, %v4462, %v4564
    %v4574 = vld [vmem:[#allocation2] sm:$0xff]
    %v4575 = vld [vmem:[#allocation2 + $0x8] sm:$0xff]
    %v4576 = vld [vmem:[%s10] sm:$0xff]
    %v4577 = vld [vmem:[%s10 + $0x8] sm:$0xff]
    %4582 = vrot.lane.b32.xlu0 %v4570, 127
    %v4583 = vpop.permute.xlu0 %4582
    %4584 = vrot.lane.b32.xlu0 %v4571, 127
    %v4585 = vpop.permute.xlu0 %4584
    %4586 = vrot.lane.b32.xlu0 %v4572, 127
    %v4587 = vpop.permute.xlu0 %4586
    %4588 = vrot.lane.b32.xlu0 %v4573, 127
    %v4589 = vpop.permute.xlu0 %4588
    %4594 = vrot.lane.b32.xlu0 %v4570, 126
    %v4595 = vpop.permute.xlu0 %4594
    %4596 = vrot.lane.b32.xlu0 %v4571, 126
    %v4597 = vpop.permute.xlu0 %4596
    %4598 = vrot.lane.b32.xlu0 %v4572, 126
    %v4599 = vpop.permute.xlu0 %4598
    %4600 = vrot.lane.b32.xlu0 %v4573, 126
    %v4601 = vpop.permute.xlu0 %4600
    %4606 = vrot.lane.b32.xlu0 %v4583, 126
    %v4607 = vpop.permute.xlu0 %4606
    %4608 = vrot.lane.b32.xlu0 %v4585, 126
    %v4609 = vpop.permute.xlu0 %4608
    %4610 = vrot.lane.b32.xlu0 %v4587, 126
    %v4611 = vpop.permute.xlu0 %4610
    %4612 = vrot.lane.b32.xlu0 %v4589, 126
    %v4613 = vpop.permute.xlu0 %4612
    %4614 = vrot.lane.b32.xlu0 %v4595, 126
    %v4615 = vpop.permute.xlu0 %4614
    %4616 = vrot.lane.b32.xlu0 %v4597, 126
    %v4617 = vpop.permute.xlu0 %4616
    %4618 = vrot.lane.b32.xlu0 %v4599, 126
    %v4619 = vpop.permute.xlu0 %4618
    %4620 = vrot.lane.b32.xlu0 %v4601, 126
    %v4621 = vpop.permute.xlu0 %4620
    %vm4630 = vcmask 15360
    %v4631 = vsel %vm4630, %v4570, %v4595
    %v4632 = vsel %vm4630, %v4571, %v4597
    %v4633 = vsel %vm4630, %v4572, %v4599
    %v4634 = vsel %vm4630, %v4573, %v4601
    %v4635 = vsel %vm4630, %v4583, %v4607
    %v4636 = vsel %vm4630, %v4585, %v4609
    %v4637 = vsel %vm4630, %v4587, %v4611
    %v4638 = vsel %vm4630, %v4589, %v4613
    %v4639 = vsel %vm4630, %v4595, %v4615
    %v4640 = vsel %vm4630, %v4597, %v4617
    %v4641 = vsel %vm4630, %v4599, %v4619
    %v4642 = vsel %vm4630, %v4601, %v4621
    %4644 = vset.pattern.permute.xlu0 0
    %4645 = vperm.xlu0 %4644, %v4576
    %v4646 = vpop.permute.xlu0 %4645
    %4649 = vset.pattern.permute.xlu0 0
    %4650 = vperm.xlu0 %4649, %v4577
    %v4651 = vpop.permute.xlu0 %4650
    %v4654 = vsel %vm166, %v4574, 0
    %v4657 = vsel %vm166, %v4575, 0
    %4659 = vmatpush.msra.mxu0 0.0
    %4660 = vmatpush.msra.mxu0 0.0
    %4661 = vmatpush.msra.mxu0 0.0
    %4662 = vmatpush.msra.mxu0 0.0
    %4663 = vmatpush.msra.mxu0 %v4642
    %4664 = vmatpush.msra.mxu0 %v4641
    %4665 = vmatpush.msra.mxu0 %v4640
    %4666 = vmatpush.msra.mxu0 %v4639
    %4667 = vmatpush.msra.mxu0 %v4638
    %4668 = vmatpush.msra.mxu0 %v4637
    %4669 = vmatpush.msra.mxu0 %v4636
    %4670 = vmatpush.msra.mxu0 %v4635
    %4671 = vmatpush.msra.mxu0 %v4634
    %4672 = vmatpush.msra.mxu0 %v4633
    %4673 = vmatpush.msra.mxu0 %v4632
    %4674 = vmatpush.msra.mxu0 %v4631
    %4675 = vmatmul.f32.gmra.mxu0 %v4654
    %v4676 = vpop.f32.mrf.mxu0
    %v4677 = vadd.f32 %v4646, %v4676
    %4678 = vmatmul.f32.gmra.mxu0 %v4657
    %v4679 = vpop.f32.mrf.mxu0
    %v4680 = vadd.f32 %v4651, %v4679
    %4681 = vdwg.mxu0
    %v4682 = vmax.f32 %v4677, 0.0
    %v4683 = vmax.f32 %v4680, 0.0
    %v4684 = vsel %vm4630, %v4682, -inf
    %v4685 = vsel %vm4630, %v4683, -inf
    %v4688 = vrot.slane %v4684, 1
    %v4689 = vrot.slane %v4684, 2
    %v4690 = vrot.slane %v4684, 3
    %v4691 = vrot.slane %v4684, 4
    %v4692 = vrot.slane %v4684, 5
    %v4693 = vrot.slane %v4684, 6
    %v4694 = vrot.slane %v4684, 7
    %v4695 = vrot.slane %v4685, 1
    %v4696 = vrot.slane %v4685, 2
    %v4697 = vrot.slane %v4685, 3
    %v4698 = vrot.slane %v4685, 4
    %v4699 = vrot.slane %v4685, 5
    %v4700 = vrot.slane %v4685, 6
    %v4701 = vrot.slane %v4685, 7
    %vm4716 = vcmask 16384
    %v4717 = vsel %vm4716, %v4684, -inf
    %4718 = vmax.xlane.f32.xlu0 %v4717
    %v4719 = vpop.xlane.xlu0 %4718
    %v4720 = vsel %vm4716, %v4688, -inf
    %4721 = vmax.xlane.f32.xlu0 %v4720
    %v4722 = vpop.xlane.xlu0 %4721
    %v4723 = vsel %vm4716, %v4689, -inf
    %4724 = vmax.xlane.f32.xlu0 %v4723
    %v4725 = vpop.xlane.xlu0 %4724
    %v4726 = vsel %vm4716, %v4690, -inf
    %4727 = vmax.xlane.f32.xlu0 %v4726
    %v4728 = vpop.xlane.xlu0 %4727
    %v4729 = vsel %vm4716, %v4691, -inf
    %4730 = vmax.xlane.f32.xlu0 %v4729
    %v4731 = vpop.xlane.xlu0 %4730
    %v4732 = vsel %vm4716, %v4692, -inf
    %4733 = vmax.xlane.f32.xlu0 %v4732
    %v4734 = vpop.xlane.xlu0 %4733
    %v4735 = vsel %vm4716, %v4693, -inf
    %4736 = vmax.xlane.f32.xlu0 %v4735
    %v4737 = vpop.xlane.xlu0 %4736
    %v4738 = vsel %vm4716, %v4694, -inf
    %4739 = vmax.xlane.f32.xlu0 %v4738
    %v4740 = vpop.xlane.xlu0 %4739
    %v4741 = vsel %vm4716, %v4685, -inf
    %4742 = vmax.xlane.f32.xlu0 %v4741
    %v4743 = vpop.xlane.xlu0 %4742
    %v4744 = vsel %vm4716, %v4695, -inf
    %4745 = vmax.xlane.f32.xlu0 %v4744
    %v4746 = vpop.xlane.xlu0 %4745
    %v4747 = vsel %vm4716, %v4696, -inf
    %4748 = vmax.xlane.f32.xlu0 %v4747
    %v4749 = vpop.xlane.xlu0 %4748
    %v4750 = vsel %vm4716, %v4697, -inf
    %4751 = vmax.xlane.f32.xlu0 %v4750
    %v4752 = vpop.xlane.xlu0 %4751
    %v4753 = vsel %vm4716, %v4698, -inf
    %4754 = vmax.xlane.f32.xlu0 %v4753
    %v4755 = vpop.xlane.xlu0 %4754
    %v4756 = vsel %vm4716, %v4699, -inf
    %4757 = vmax.xlane.f32.xlu0 %v4756
    %v4758 = vpop.xlane.xlu0 %4757
    %v4759 = vsel %vm4716, %v4700, -inf
    %4760 = vmax.xlane.f32.xlu0 %v4759
    %v4761 = vpop.xlane.xlu0 %4760
    %v4762 = vsel %vm4716, %v4701, -inf
    %4763 = vmax.xlane.f32.xlu0 %v4762
    %v4764 = vpop.xlane.xlu0 %4763
    %4767 = vrot.lane.b32.xlu0 %v4682, 126
    %v4768 = vpop.permute.xlu0 %4767
    %4769 = vrot.lane.b32.xlu0 %v4683, 126
    %v4770 = vpop.permute.xlu0 %4769
    %v4773 = vsel %vm4630, %v4768, -inf
    %v4774 = vsel %vm4630, %v4770, -inf
    %v4777 = vrot.slane %v4773, 1
    %v4778 = vrot.slane %v4773, 2
    %v4779 = vrot.slane %v4773, 3
    %v4780 = vrot.slane %v4773, 4
    %v4781 = vrot.slane %v4773, 5
    %v4782 = vrot.slane %v4773, 6
    %v4783 = vrot.slane %v4773, 7
    %v4784 = vrot.slane %v4774, 1
    %v4785 = vrot.slane %v4774, 2
    %v4786 = vrot.slane %v4774, 3
    %v4787 = vrot.slane %v4774, 4
    %v4788 = vrot.slane %v4774, 5
    %v4789 = vrot.slane %v4774, 6
    %v4790 = vrot.slane %v4774, 7
    %v4805 = vsel %vm4716, %v4773, -inf
    %4806 = vmax.xlane.f32.xlu0 %v4805
    %v4807 = vpop.xlane.xlu0 %4806
    %v4808 = vsel %vm4716, %v4777, -inf
    %4809 = vmax.xlane.f32.xlu0 %v4808
    %v4810 = vpop.xlane.xlu0 %4809
    %v4811 = vsel %vm4716, %v4778, -inf
    %4812 = vmax.xlane.f32.xlu0 %v4811
    %v4813 = vpop.xlane.xlu0 %4812
    %v4814 = vsel %vm4716, %v4779, -inf
    %4815 = vmax.xlane.f32.xlu0 %v4814
    %v4816 = vpop.xlane.xlu0 %4815
    %v4817 = vsel %vm4716, %v4780, -inf
    %4818 = vmax.xlane.f32.xlu0 %v4817
    %v4819 = vpop.xlane.xlu0 %4818
    %v4820 = vsel %vm4716, %v4781, -inf
    %4821 = vmax.xlane.f32.xlu0 %v4820
    %v4822 = vpop.xlane.xlu0 %4821
    %v4823 = vsel %vm4716, %v4782, -inf
    %4824 = vmax.xlane.f32.xlu0 %v4823
    %v4825 = vpop.xlane.xlu0 %4824
    %v4826 = vsel %vm4716, %v4783, -inf
    %4827 = vmax.xlane.f32.xlu0 %v4826
    %v4828 = vpop.xlane.xlu0 %4827
    %v4829 = vsel %vm4716, %v4774, -inf
    %4830 = vmax.xlane.f32.xlu0 %v4829
    %v4831 = vpop.xlane.xlu0 %4830
    %v4832 = vsel %vm4716, %v4784, -inf
    %4833 = vmax.xlane.f32.xlu0 %v4832
    %v4834 = vpop.xlane.xlu0 %4833
    %v4835 = vsel %vm4716, %v4785, -inf
    %4836 = vmax.xlane.f32.xlu0 %v4835
    %v4837 = vpop.xlane.xlu0 %4836
    %v4838 = vsel %vm4716, %v4786, -inf
    %4839 = vmax.xlane.f32.xlu0 %v4838
    %v4840 = vpop.xlane.xlu0 %4839
    %v4841 = vsel %vm4716, %v4787, -inf
    %4842 = vmax.xlane.f32.xlu0 %v4841
    %v4843 = vpop.xlane.xlu0 %4842
    %v4844 = vsel %vm4716, %v4788, -inf
    %4845 = vmax.xlane.f32.xlu0 %v4844
    %v4846 = vpop.xlane.xlu0 %4845
    %v4847 = vsel %vm4716, %v4789, -inf
    %4848 = vmax.xlane.f32.xlu0 %v4847
    %v4849 = vpop.xlane.xlu0 %4848
    %v4850 = vsel %vm4716, %v4790, -inf
    %4851 = vmax.xlane.f32.xlu0 %v4850
    %v4852 = vpop.xlane.xlu0 %4851
    %v4853 = vld [vmem:[#allocation5] sm:$0xff]
    %v4854 = vld [vmem:[#allocation5 + $0x8] sm:$0xff]
    %v4855 = vld [vmem:[%s12] sm:$0xff]
    %v4856 = vld [vmem:[%s12 + $0x8] sm:$0xff]
    %4857 = vrot.lane.b32.xlu0 %v4570, 125
    %v4858 = vpop.permute.xlu0 %4857
    %4859 = vrot.lane.b32.xlu0 %v4571, 125
    %v4860 = vpop.permute.xlu0 %4859
    %4861 = vrot.lane.b32.xlu0 %v4572, 125
    %v4862 = vpop.permute.xlu0 %4861
    %4863 = vrot.lane.b32.xlu0 %v4573, 125
    %v4864 = vpop.permute.xlu0 %4863
    %4869 = vrot.lane.b32.xlu0 %v4583, 125
    %v4870 = vpop.permute.xlu0 %4869
    %4871 = vrot.lane.b32.xlu0 %v4585, 125
    %v4872 = vpop.permute.xlu0 %4871
    %4873 = vrot.lane.b32.xlu0 %v4587, 125
    %v4874 = vpop.permute.xlu0 %4873
    %4875 = vrot.lane.b32.xlu0 %v4589, 125
    %v4876 = vpop.permute.xlu0 %4875
    %4877 = vrot.lane.b32.xlu0 %v4595, 125
    %v4878 = vpop.permute.xlu0 %4877
    %4879 = vrot.lane.b32.xlu0 %v4597, 125
    %v4880 = vpop.permute.xlu0 %4879
    %4881 = vrot.lane.b32.xlu0 %v4599, 125
    %v4882 = vpop.permute.xlu0 %4881
    %4883 = vrot.lane.b32.xlu0 %v4601, 125
    %v4884 = vpop.permute.xlu0 %4883
    %4885 = vrot.lane.b32.xlu0 %v4858, 125
    %v4886 = vpop.permute.xlu0 %4885
    %4887 = vrot.lane.b32.xlu0 %v4860, 125
    %v4888 = vpop.permute.xlu0 %4887
    %4889 = vrot.lane.b32.xlu0 %v4862, 125
    %v4890 = vpop.permute.xlu0 %4889
    %4891 = vrot.lane.b32.xlu0 %v4864, 125
    %v4892 = vpop.permute.xlu0 %4891
    %vm4905 = vcmask 7168
    %v4906 = vsel %vm4905, %v4570, %v4858
    %v4907 = vsel %vm4905, %v4571, %v4860
    %v4908 = vsel %vm4905, %v4572, %v4862
    %v4909 = vsel %vm4905, %v4573, %v4864
    %v4910 = vsel %vm4905, %v4583, %v4870
    %v4911 = vsel %vm4905, %v4585, %v4872
    %v4912 = vsel %vm4905, %v4587, %v4874
    %v4913 = vsel %vm4905, %v4589, %v4876
    %v4914 = vsel %vm4905, %v4595, %v4878
    %v4915 = vsel %vm4905, %v4597, %v4880
    %v4916 = vsel %vm4905, %v4599, %v4882
    %v4917 = vsel %vm4905, %v4601, %v4884
    %v4918 = vsel %vm4905, %v4858, %v4886
    %v4919 = vsel %vm4905, %v4860, %v4888
    %v4920 = vsel %vm4905, %v4862, %v4890
    %v4921 = vsel %vm4905, %v4864, %v4892
    %4923 = vset.pattern.permute.xlu0 0
    %4924 = vperm.xlu0 %4923, %v4855
    %v4925 = vpop.permute.xlu0 %4924
    %4928 = vset.pattern.permute.xlu0 0
    %4929 = vperm.xlu0 %4928, %v4856
    %v4930 = vpop.permute.xlu0 %4929
    %4932 = vmatpush.msra.mxu0 %v4921
    %4933 = vmatpush.msra.mxu0 %v4920
    %4934 = vmatpush.msra.mxu0 %v4919
    %4935 = vmatpush.msra.mxu0 %v4918
    %4936 = vmatpush.msra.mxu0 %v4917
    %4937 = vmatpush.msra.mxu0 %v4916
    %4938 = vmatpush.msra.mxu0 %v4915
    %4939 = vmatpush.msra.mxu0 %v4914
    %4940 = vmatpush.msra.mxu0 %v4913
    %4941 = vmatpush.msra.mxu0 %v4912
    %4942 = vmatpush.msra.mxu0 %v4911
    %4943 = vmatpush.msra.mxu0 %v4910
    %4944 = vmatpush.msra.mxu0 %v4909
    %4945 = vmatpush.msra.mxu0 %v4908
    %4946 = vmatpush.msra.mxu0 %v4907
    %4947 = vmatpush.msra.mxu0 %v4906
    %4948 = vmatmul.f32.gmra.mxu0 %v4853
    %v4949 = vpop.f32.mrf.mxu0
    %v4950 = vadd.f32 %v4925, %v4949
    %4951 = vmatmul.f32.gmra.mxu0 %v4854
    %v4952 = vpop.f32.mrf.mxu0
    %v4953 = vadd.f32 %v4930, %v4952
    %4954 = vdwg.mxu0
    %v4955 = vmax.f32 %v4950, 0.0
    %v4956 = vmax.f32 %v4953, 0.0
    %v4957 = vsel %vm4905, %v4955, -inf
    %v4958 = vsel %vm4905, %v4956, -inf
    %v4961 = vrot.slane %v4957, 1
    %v4962 = vrot.slane %v4957, 2
    %v4963 = vrot.slane %v4957, 3
    %v4964 = vrot.slane %v4957, 4
    %v4965 = vrot.slane %v4957, 5
    %v4966 = vrot.slane %v4957, 6
    %v4967 = vrot.slane %v4957, 7
    %v4968 = vrot.slane %v4958, 1
    %v4969 = vrot.slane %v4958, 2
    %v4970 = vrot.slane %v4958, 3
    %v4971 = vrot.slane %v4958, 4
    %v4972 = vrot.slane %v4958, 5
    %v4973 = vrot.slane %v4958, 6
    %v4974 = vrot.slane %v4958, 7
    %v4989 = vsel %vm4716, %v4957, -inf
    %4990 = vmax.xlane.f32.xlu0 %v4989
    %v4991 = vpop.xlane.xlu0 %4990
    %v4992 = vsel %vm4716, %v4961, -inf
    %4993 = vmax.xlane.f32.xlu0 %v4992
    %v4994 = vpop.xlane.xlu0 %4993
    %v4995 = vsel %vm4716, %v4962, -inf
    %4996 = vmax.xlane.f32.xlu0 %v4995
    %v4997 = vpop.xlane.xlu0 %4996
    %v4998 = vsel %vm4716, %v4963, -inf
    %4999 = vmax.xlane.f32.xlu0 %v4998
    %v5000 = vpop.xlane.xlu0 %4999
    %v5001 = vsel %vm4716, %v4964, -inf
    %5002 = vmax.xlane.f32.xlu0 %v5001
    %v5003 = vpop.xlane.xlu0 %5002
    %v5004 = vsel %vm4716, %v4965, -inf
    %5005 = vmax.xlane.f32.xlu0 %v5004
    %v5006 = vpop.xlane.xlu0 %5005
    %v5007 = vsel %vm4716, %v4966, -inf
    %5008 = vmax.xlane.f32.xlu0 %v5007
    %v5009 = vpop.xlane.xlu0 %5008
    %v5010 = vsel %vm4716, %v4967, -inf
    %5011 = vmax.xlane.f32.xlu0 %v5010
    %v5012 = vpop.xlane.xlu0 %5011
    %v5013 = vsel %vm4716, %v4958, -inf
    %5014 = vmax.xlane.f32.xlu0 %v5013
    %v5015 = vpop.xlane.xlu0 %5014
    %v5016 = vsel %vm4716, %v4968, -inf
    %5017 = vmax.xlane.f32.xlu0 %v5016
    %v5018 = vpop.xlane.xlu0 %5017
    %v5019 = vsel %vm4716, %v4969, -inf
    %5020 = vmax.xlane.f32.xlu0 %v5019
    %v5021 = vpop.xlane.xlu0 %5020
    %v5022 = vsel %vm4716, %v4970, -inf
    %5023 = vmax.xlane.f32.xlu0 %v5022
    %v5024 = vpop.xlane.xlu0 %5023
    %v5025 = vsel %vm4716, %v4971, -inf
    %5026 = vmax.xlane.f32.xlu0 %v5025
    %v5027 = vpop.xlane.xlu0 %5026
    %v5028 = vsel %vm4716, %v4972, -inf
    %5029 = vmax.xlane.f32.xlu0 %v5028
    %v5030 = vpop.xlane.xlu0 %5029
    %v5031 = vsel %vm4716, %v4973, -inf
    %5032 = vmax.xlane.f32.xlu0 %v5031
    %v5033 = vpop.xlane.xlu0 %5032
    %v5034 = vsel %vm4716, %v4974, -inf
    %5035 = vmax.xlane.f32.xlu0 %v5034
    %v5036 = vpop.xlane.xlu0 %5035
    %5039 = vrot.lane.b32.xlu0 %v4955, 127
    %v5040 = vpop.permute.xlu0 %5039
    %5041 = vrot.lane.b32.xlu0 %v4956, 127
    %v5042 = vpop.permute.xlu0 %5041
    %v5045 = vsel %vm4905, %v5040, -inf
    %v5046 = vsel %vm4905, %v5042, -inf
    %v5049 = vrot.slane %v5045, 1
    %v5050 = vrot.slane %v5045, 2
    %v5051 = vrot.slane %v5045, 3
    %v5052 = vrot.slane %v5045, 4
    %v5053 = vrot.slane %v5045, 5
    %v5054 = vrot.slane %v5045, 6
    %v5055 = vrot.slane %v5045, 7
    %v5056 = vrot.slane %v5046, 1
    %v5057 = vrot.slane %v5046, 2
    %v5058 = vrot.slane %v5046, 3
    %v5059 = vrot.slane %v5046, 4
    %v5060 = vrot.slane %v5046, 5
    %v5061 = vrot.slane %v5046, 6
    %v5062 = vrot.slane %v5046, 7
    %v5077 = vsel %vm4716, %v5045, -inf
    %5078 = vmax.xlane.f32.xlu0 %v5077
    %v5079 = vpop.xlane.xlu0 %5078
    %v5080 = vsel %vm4716, %v5049, -inf
    %5081 = vmax.xlane.f32.xlu0 %v5080
    %v5082 = vpop.xlane.xlu0 %5081
    %v5083 = vsel %vm4716, %v5050, -inf
    %5084 = vmax.xlane.f32.xlu0 %v5083
    %v5085 = vpop.xlane.xlu0 %5084
    %v5086 = vsel %vm4716, %v5051, -inf
    %5087 = vmax.xlane.f32.xlu0 %v5086
    %v5088 = vpop.xlane.xlu0 %5087
    %v5089 = vsel %vm4716, %v5052, -inf
    %5090 = vmax.xlane.f32.xlu0 %v5089
    %v5091 = vpop.xlane.xlu0 %5090
    %v5092 = vsel %vm4716, %v5053, -inf
    %5093 = vmax.xlane.f32.xlu0 %v5092
    %v5094 = vpop.xlane.xlu0 %5093
    %v5095 = vsel %vm4716, %v5054, -inf
    %5096 = vmax.xlane.f32.xlu0 %v5095
    %v5097 = vpop.xlane.xlu0 %5096
    %v5098 = vsel %vm4716, %v5055, -inf
    %5099 = vmax.xlane.f32.xlu0 %v5098
    %v5100 = vpop.xlane.xlu0 %5099
    %v5101 = vsel %vm4716, %v5046, -inf
    %5102 = vmax.xlane.f32.xlu0 %v5101
    %v5103 = vpop.xlane.xlu0 %5102
    %v5104 = vsel %vm4716, %v5056, -inf
    %5105 = vmax.xlane.f32.xlu0 %v5104
    %v5106 = vpop.xlane.xlu0 %5105
    %v5107 = vsel %vm4716, %v5057, -inf
    %5108 = vmax.xlane.f32.xlu0 %v5107
    %v5109 = vpop.xlane.xlu0 %5108
    %v5110 = vsel %vm4716, %v5058, -inf
    %5111 = vmax.xlane.f32.xlu0 %v5110
    %v5112 = vpop.xlane.xlu0 %5111
    %v5113 = vsel %vm4716, %v5059, -inf
    %5114 = vmax.xlane.f32.xlu0 %v5113
    %v5115 = vpop.xlane.xlu0 %5114
    %v5116 = vsel %vm4716, %v5060, -inf
    %5117 = vmax.xlane.f32.xlu0 %v5116
    %v5118 = vpop.xlane.xlu0 %5117
    %v5119 = vsel %vm4716, %v5061, -inf
    %5120 = vmax.xlane.f32.xlu0 %v5119
    %v5121 = vpop.xlane.xlu0 %5120
    %v5122 = vsel %vm4716, %v5062, -inf
    %5123 = vmax.xlane.f32.xlu0 %v5122
    %v5124 = vpop.xlane.xlu0 %5123
    %v5141 = vrot.slane %v4722, 7
    %v5142 = vsel %vm2929, %v5141, %v4719
    %v5143 = vrot.slane %v4725, 6
    %v5144 = vsel %vm2931, %v5143, %v5142
    %v5145 = vrot.slane %v4728, 5
    %v5146 = vsel %vm2933, %v5145, %v5144
    %v5147 = vrot.slane %v4731, 4
    %v5148 = vsel %vm2935, %v5147, %v5146
    %v5149 = vrot.slane %v4734, 3
    %v5150 = vsel %vm2937, %v5149, %v5148
    %v5151 = vrot.slane %v4737, 2
    %v5152 = vsel %vm2939, %v5151, %v5150
    %v5153 = vrot.slane %v4740, 1
    %v5154 = vsel %vm2941, %v5153, %v5152
    %v5155 = vrot.slane %v4746, 7
    %v5156 = vsel %vm2929, %v5155, %v4743
    %v5157 = vrot.slane %v4749, 6
    %v5158 = vsel %vm2931, %v5157, %v5156
    %v5159 = vrot.slane %v4752, 5
    %v5160 = vsel %vm2933, %v5159, %v5158
    %v5161 = vrot.slane %v4755, 4
    %v5162 = vsel %vm2935, %v5161, %v5160
    %v5163 = vrot.slane %v4758, 3
    %v5164 = vsel %vm2937, %v5163, %v5162
    %v5165 = vrot.slane %v4761, 2
    %v5166 = vsel %vm2939, %v5165, %v5164
    %v5167 = vrot.slane %v4764, 1
    %v5168 = vsel %vm2941, %v5167, %v5166
    %v5187 = vrot.slane %v4994, 7
    %v5188 = vsel %vm2929, %v5187, %v4991
    %v5189 = vrot.slane %v4997, 6
    %v5190 = vsel %vm2931, %v5189, %v5188
    %v5191 = vrot.slane %v5000, 5
    %v5192 = vsel %vm2933, %v5191, %v5190
    %v5193 = vrot.slane %v5003, 4
    %v5194 = vsel %vm2935, %v5193, %v5192
    %v5195 = vrot.slane %v5006, 3
    %v5196 = vsel %vm2937, %v5195, %v5194
    %v5197 = vrot.slane %v5009, 2
    %v5198 = vsel %vm2939, %v5197, %v5196
    %v5199 = vrot.slane %v5012, 1
    %v5200 = vsel %vm2941, %v5199, %v5198
    %v5201 = vrot.slane %v5018, 7
    %v5202 = vsel %vm2929, %v5201, %v5015
    %v5203 = vrot.slane %v5021, 6
    %v5204 = vsel %vm2931, %v5203, %v5202
    %v5205 = vrot.slane %v5024, 5
    %v5206 = vsel %vm2933, %v5205, %v5204
    %v5207 = vrot.slane %v5027, 4
    %v5208 = vsel %vm2935, %v5207, %v5206
    %v5209 = vrot.slane %v5030, 3
    %v5210 = vsel %vm2937, %v5209, %v5208
    %v5211 = vrot.slane %v5033, 2
    %v5212 = vsel %vm2939, %v5211, %v5210
    %v5213 = vrot.slane %v5036, 1
    %v5214 = vsel %vm2941, %v5213, %v5212
    %v5233 = vrot.slane %v4810, 7
    %v5234 = vsel %vm2929, %v5233, %v4807
    %v5235 = vrot.slane %v4813, 6
    %v5236 = vsel %vm2931, %v5235, %v5234
    %v5237 = vrot.slane %v4816, 5
    %v5238 = vsel %vm2933, %v5237, %v5236
    %v5239 = vrot.slane %v4819, 4
    %v5240 = vsel %vm2935, %v5239, %v5238
    %v5241 = vrot.slane %v4822, 3
    %v5242 = vsel %vm2937, %v5241, %v5240
    %v5243 = vrot.slane %v4825, 2
    %v5244 = vsel %vm2939, %v5243, %v5242
    %v5245 = vrot.slane %v4828, 1
    %v5246 = vsel %vm2941, %v5245, %v5244
    %v5247 = vrot.slane %v4834, 7
    %v5248 = vsel %vm2929, %v5247, %v4831
    %v5249 = vrot.slane %v4837, 6
    %v5250 = vsel %vm2931, %v5249, %v5248
    %v5251 = vrot.slane %v4840, 5
    %v5252 = vsel %vm2933, %v5251, %v5250
    %v5253 = vrot.slane %v4843, 4
    %v5254 = vsel %vm2935, %v5253, %v5252
    %v5255 = vrot.slane %v4846, 3
    %v5256 = vsel %vm2937, %v5255, %v5254
    %v5257 = vrot.slane %v4849, 2
    %v5258 = vsel %vm2939, %v5257, %v5256
    %v5259 = vrot.slane %v4852, 1
    %v5260 = vsel %vm2941, %v5259, %v5258
    %v5277 = vrot.slane %v5082, 7
    %v5278 = vsel %vm2929, %v5277, %v5079
    %v5279 = vrot.slane %v5085, 6
    %v5280 = vsel %vm2931, %v5279, %v5278
    %v5281 = vrot.slane %v5088, 5
    %v5282 = vsel %vm2933, %v5281, %v5280
    %v5283 = vrot.slane %v5091, 4
    %v5284 = vsel %vm2935, %v5283, %v5282
    %v5285 = vrot.slane %v5094, 3
    %v5286 = vsel %vm2937, %v5285, %v5284
    %v5287 = vrot.slane %v5097, 2
    %v5288 = vsel %vm2939, %v5287, %v5286
    %v5289 = vrot.slane %v5100, 1
    %v5290 = vsel %vm2941, %v5289, %v5288
    %v5291 = vrot.slane %v5106, 7
    %v5292 = vsel %vm2929, %v5291, %v5103
    %v5293 = vrot.slane %v5109, 6
    %v5294 = vsel %vm2931, %v5293, %v5292
    %v5295 = vrot.slane %v5112, 5
    %v5296 = vsel %vm2933, %v5295, %v5294
    %v5297 = vrot.slane %v5115, 4
    %v5298 = vsel %vm2935, %v5297, %v5296
    %v5299 = vrot.slane %v5118, 3
    %v5300 = vsel %vm2937, %v5299, %v5298
    %v5301 = vrot.slane %v5121, 2
    %v5302 = vsel %vm2939, %v5301, %v5300
    %v5303 = vrot.slane %v5124, 1
    %v5304 = vsel %vm2941, %v5303, %v5302
    %5305 = vrot.lane.b32.xlu0 %v5246, 1
    %v5306 = vpop.permute.xlu0 %5305
    %5307 = vrot.lane.b32.xlu0 %v5260, 1
    %v5308 = vpop.permute.xlu0 %5307
    %5309 = vrot.lane.b32.xlu0 %v5290, 1
    %v5310 = vpop.permute.xlu0 %5309
    %5311 = vrot.lane.b32.xlu0 %v5304, 1
    %v5312 = vpop.permute.xlu0 %5311
    %v5317 = vsel %vm4905, %v5154, %v5306
    %v5318 = vsel %vm4905, %v5168, %v5308
    %v5319 = vsel %vm4905, %v5200, %v5310
    %v5320 = vsel %vm4905, %v5214, %v5312
    %v5321 = vld [vmem:[%s13] sm:$0x3]
    %v5322 = vld [vmem:[%s14] sm:$0x3]
    %5324 = vset.pattern.permute.xlu0 0
    %5325 = vperm.xlu0 %5324, %v5322
    %v5326 = vpop.permute.xlu0 %5325
    %vm5328 = vcmask 261120
    %v5330 = vsel %vm5328, %v5321, 0
    %5332 = vmatpush.msra.mxu0 0.0
    %5333 = vmatpush.msra.mxu0 0.0
    %5334 = vmatpush.msra.mxu0 0.0
    %5335 = vmatpush.msra.mxu0 0.0
    %5336 = vmatpush.msra.mxu0 0.0
    %5337 = vmatpush.msra.mxu0 0.0
    %5338 = vmatpush.msra.mxu0 0.0
    %5339 = vmatpush.msra.mxu0 0.0
    %5340 = vmatpush.msra.mxu0 0.0
    %5341 = vmatpush.msra.mxu0 0.0
    %5342 = vmatpush.msra.mxu0 0.0
    %5343 = vmatpush.msra.mxu0 0.0
    %5344 = vmatpush.msra.mxu0 %v5320
    %5345 = vmatpush.msra.mxu0 %v5319
    %5346 = vmatpush.msra.mxu0 %v5318
    %5347 = vmatpush.msra.mxu0 %v5317
    %5348 = vmatmul.f32.gmra.mxu0 %v5330
    %v5349 = vpop.f32.mrf.mxu0
    %v5350 = vadd.f32 %v5326, %v5349
    %5351 = vdwg.mxu0
    %vm5352 = vcmask 9216
    %5353 = vst.msk [vmem:[#allocation7] sm:$0x3] %vm5352, %v5350
    // Predicated region
    $region70: #{tpu_custom_call.1} parent=1 // pred_check
      _
    $region71: #{tpu_custom_call.1} parent=1 // pred_check_branch
      %5355 = sbr.rel (0) target = $region73
    $region72: #{tpu_custom_call.1} parent=1 // pred_region
      %5357 = vsyncadd [#allocation4], 0
      %s5359 = sshll.u32 [#allocation7], 4
      %s5360 = int_to_ptr.vmem [resolvable:$true] %s5359
      %s5361 = sshll.u32 %s15, 4
      %s5362 = int_to_ptr.hbm [resolvable:$true] %s5361
      %5364 = dma.vmem_to_hbm [thread:$0]  %s5360, 32, %s5362, [#allocation4]
    $region73: #{tpu_custom_call.1} parent=1 // pred_fallthru
      _
    // Predicated region
    $region74: #{tpu_custom_call.1} parent=1 // pred_check
      _
    $region75: #{tpu_custom_call.1} parent=1 // pred_check_branch
      %5366 = sbr.rel (0) target = $region77
    $region76: #{tpu_custom_call.1} parent=1 // pred_region
      %5368 = dma.done [#allocation4], 32
    $region77: #{tpu_custom_call.1} parent=1 // pred_fallthru
      _
    %5369 = vsyncpa [#allocation3], 1
    %5370 = vsyncpa [#allocation6], 1
    %5371 = vsyncpa [#allocation4], 1

</llo_original>
